<compile_context>
chip_gen: v7x
topology: tpu7x:2x2x1
jax: 0.10.0
libtpu: 0.0.40
codegen_flags: <defaults>
</compile_context>

<pallas_src>
import math

import jax
import jax.numpy as jnp
from jax.experimental import pallas as pl
from jax.experimental.pallas import tpu as pltpu  # noqa: F401  (TPU backend assumed)


# ----------------------------- model hyper-params ---------------------------
SRC_VOCAB = 50
EMBED = 32
NUM_LAYERS = 2
HEADS = 4
HEAD_DIM = EMBED // HEADS
FWD_EXP = 4
MAX_LEN = 16
SEQ = 8
BATCH = 2
LN_EPS = 1e-5
# masked_fill(-1e20) followed by /sqrt(E) in the reference == additive bias of
# -1e20/sqrt(E) in the (already scaled) logit space used by the kernel.
MASK_BIAS = -1e20 / math.sqrt(EMBED)


# ------------------------------- Pallas kernel ------------------------------
def encoder_kernel(
    tok_ref,      # (N*L, 1) int32 token ids
    mask_ref,     # (N, 1, L) int32 key-padding mask (1 = keep, 0 = mask)
    wemb_ref,     # (VOCAB, E) f32 word embedding table
    pemb_ref,     # (MAX_LEN, E) f32 position embedding table
    wqkv_ref,     # (NUM_LAYERS, E, 3E) block-diag per-head, pre-transposed, scale in Q
    wo_ref,       # (NUM_LAYERS, E, E)  fc_out weight, pre-transposed
    bo_ref,       # (NUM_LAYERS, 1, E)
    g1_ref, be1_ref,   # (NUM_LAYERS, 1, E) LayerNorm1 gamma/beta
    w1_ref,       # (NUM_LAYERS, E, 4E)
    bf1_ref,      # (NUM_LAYERS, 1, 4E)
    w2_ref,       # (NUM_LAYERS, 4E, E)
    bf2_ref,      # (NUM_LAYERS, 1, E)
    g2_ref, be2_ref,   # (NUM_LAYERS, 1, E) LayerNorm2 gamma/beta
    o_ref,        # (N, L, E)
):
    N, _, L = mask_ref.shape
    NL = N * L
    V, E = wemb_ref.shape
    H, D = HEADS, HEAD_DIM
    inv_e = jnp.float32(1.0 / E)

    # ---- embedding gather as a one-hot matmul (MXU is idle; kills the XLA gather op) ----
    tok = tok_ref[...]                                            # (NL, 1) int32
    vocab_ids = jax.lax.broadcasted_iota(jnp.int32, (NL, V), 1)   # (NL, V)
    onehot = (vocab_ids == tok).astype(jnp.float32)               # exact 0/1
    word = jnp.dot(onehot, wemb_ref[...], preferred_element_type=jnp.float32)   # (NL, E)
    pos = pemb_ref[0:L, :]                                        # static slice (L, E)
    x = (word.reshape(N, L, E) + pos[None, :, :]).reshape(NL, E)  # dropout = identity

    # ---- key-padding mask -> additive bias (scaled-logit space), hoisted + pre-broadcast ----
    bias = jnp.where(mask_ref[...] == 0, jnp.float32(MASK_BIAS), jnp.float32(0.0))  # (N,1,L)
    bias_b = jnp.broadcast_to(bias, (N, L, L))   # single broadcast, shared by all heads/layers

    for layer in range(NUM_LAYERS):              # unrolled: both layers fused in one program
        # ---- fused Q|K|V projection: one MXU push per layer ----
        qkv = jnp.dot(x, wqkv_ref[layer], preferred_element_type=jnp.float32)   # (NL, 3E)
        q3 = qkv[:, 0:E].reshape(N, L, E)
        k3 = qkv[:, E:2 * E].reshape(N, L, E)
        v3 = qkv[:, 2 * E:3 * E].reshape(N, L, E)

        head_outs = []
        for h in range(H):   # heads unrolled; independent chains interleave in the scheduler
            qh = q3[:, :, h * D:(h + 1) * D]     # (N, L, D)
            kh = k3[:, :, h * D:(h + 1) * D]
            vh = v3[:, :, h * D:(h + 1) * D]
            s = jnp.einsum("nqd,nkd->nqk", qh, kh,
                           preferred_element_type=jnp.float32) + bias_b         # (N, L, L)
            m = jnp.max(s, axis=-1, keepdims=True)
            e = jnp.exp(s - m)
            den = jnp.sum(e, axis=-1, keepdims=True)
            # Deferred normalization: the rcp + Newton step runs concurrently with the PV
            # matmul (hidden under the MXU op), so keeping the Newton refinement is free.
            inv = pl.reciprocal(den, approx=True)
            inv = inv * (2.0 - den * inv)
            pv = jnp.einsum("nqk,nkd->nqd", e, vh,
                            preferred_element_type=jnp.float32)                 # (N, L, D)
            head_outs.append(pv * inv)
        concat = jnp.concatenate(head_outs, axis=-1).reshape(NL, E)             # (NL, E)

        attn_out = jnp.dot(concat, wo_ref[layer],
                           preferred_element_type=jnp.float32) + bo_ref[layer]

        # ---- residual + LayerNorm 1 (independent sum / sum-of-squares reductions) ----
        y = attn_out + x
        s1 = jnp.sum(y, axis=-1, keepdims=True)
        s2 = jnp.sum(y * y, axis=-1, keepdims=True)
        mu = s1 * inv_e
        var = s2 * inv_e - mu * mu
        xn = (y - mu) * jax.lax.rsqrt(var + LN_EPS) * g1_ref[layer] + be1_ref[layer]

        # ---- feed forward ----
        h1 = jnp.dot(xn, w1_ref[layer], preferred_element_type=jnp.float32) + bf1_ref[layer]
        h1 = jnp.maximum(h1, 0.0)
        h2 = jnp.dot(h1, w2_ref[layer], preferred_element_type=jnp.float32) + bf2_ref[layer]

        # ---- residual + LayerNorm 2 ----
        z = h2 + xn
        t1 = jnp.sum(z, axis=-1, keepdims=True)
        t2 = jnp.sum(z * z, axis=-1, keepdims=True)
        mu2 = t1 * inv_e
        var2 = t2 * inv_e - mu2 * mu2
        x = (z - mu2) * jax.lax.rsqrt(var2 + LN_EPS) * g2_ref[layer] + be2_ref[layer]

    # TODO(synk): fully batched (N,H,L,L) attention (one softmax for all heads) was evaluated
    # but requires an (N,L,H,D)->(N,H,L,D) relayout whose cost/lowering risk outweighs the
    # win at L=8, D=8; the independent per-head chains already overlap in the scheduler.
    o_ref[...] = x.reshape(N, L, E)


# ------------------------------- parameter init ------------------------------
def init_params(key):
    params = {"word_emb": None, "pos_emb": None, "layers": []}
    key, k1, k2 = jax.random.split(key, 3)
    params["word_emb"] = jax.random.normal(k1, (SRC_VOCAB, EMBED), jnp.float32) * 0.1
    params["pos_emb"] = jax.random.normal(k2, (MAX_LEN, EMBED), jnp.float32) * 0.1

    for _ in range(NUM_LAYERS):
        keys = jax.random.split(key, 9)
        key = keys[0]
        layer = {
            "wq": jax.random.normal(keys[1], (HEAD_DIM, HEAD_DIM), jnp.float32) * 0.2,
            "wk": jax.random.normal(keys[2], (HEAD_DIM, HEAD_DIM), jnp.float32) * 0.2,
            "wv": jax.random.normal(keys[3], (HEAD_DIM, HEAD_DIM), jnp.float32) * 0.2,
            "wo": jax.random.normal(keys[4], (EMBED, EMBED), jnp.float32) * 0.1,
            "bo": jnp.zeros((1, EMBED), jnp.float32),
            "g1": jnp.ones((1, EMBED), jnp.float32),
            "be1": jnp.zeros((1, EMBED), jnp.float32),
            "w1": jax.random.normal(keys[5], (FWD_EXP * EMBED, EMBED), jnp.float32) * 0.1,
            "bf1": jax.random.normal(keys[6], (1, FWD_EXP * EMBED), jnp.float32) * 0.01,
            "w2": jax.random.normal(keys[7], (EMBED, FWD_EXP * EMBED), jnp.float32) * 0.1,
            "bf2": jax.random.normal(keys[8], (1, EMBED), jnp.float32) * 0.01,
            "g2": jnp.ones((1, EMBED), jnp.float32),
            "be2": jnp.zeros((1, EMBED), jnp.float32),
        }
        params["layers"].append(layer)
    return params


def prepare_params(params):
    """Wrapper-side (free) weight massaging: pre-transpose everything so the kernel only
    computes x @ W, build block-diagonal per-head projections, fuse Q|K|V into one (E, 3E)
    matrix with 1/sqrt(E) folded into the Q block, and stack layers on a leading axis."""
    inv_sqrt_e = jnp.float32(1.0 / math.sqrt(EMBED))
    eye = jnp.eye(HEADS, dtype=jnp.float32)

    def prep(p):
        wq = jnp.kron(eye, p["wq"].T) * inv_sqrt_e    # (E, E): per-head x_h @ Wq.T, scaled
        wk = jnp.kron(eye, p["wk"].T)                 # (E, E)
        wv = jnp.kron(eye, p["wv"].T)                 # (E, E)
        return {
            "wqkv": jnp.concatenate([wq, wk, wv], axis=1),   # (E, 3E)
            "wo": p["wo"].T,                                 # (E, E)
            "bo": p["bo"],
            "g1": p["g1"], "be1": p["be1"],
            "w1": p["w1"].T,                                 # (E, 4E)
            "bf1": p["bf1"],
            "w2": p["w2"].T,                                 # (4E, E)
            "bf2": p["bf2"],
            "g2": p["g2"], "be2": p["be2"],
        }

    per_layer = [prep(p) for p in params["layers"]]
    stacked = {k: jnp.stack([lp[k] for lp in per_layer], axis=0) for k in per_layer[0]}
    return {"word_emb": params["word_emb"], "pos_emb": params["pos_emb"], "layers": stacked}


# ------------------------------- encoder forward -----------------------------
@jax.jit
def encoder_forward(tokens, mask, prepped):
    """tokens: (N, L) int32, mask: (N, 1, L) int32 -> (N, L, E) f32."""
    N, L = tokens.shape
    tok = tokens.reshape(N * L, 1).astype(jnp.int32)   # metadata-only reshape; gather is in-kernel
    s = prepped["layers"]
    return pl.pallas_call(
        encoder_kernel,
        out_shape=jax.ShapeDtypeStruct((N, L, EMBED), jnp.float32),
    )(tok, mask.astype(jnp.int32),
      prepped["word_emb"], prepped["pos_emb"],
      s["wqkv"], s["wo"], s["bo"],
      s["g1"], s["be1"], s["w1"], s["bf1"], s["w2"], s["bf2"],
      s["g2"], s["be2"])


# ------------------------------- pure-JAX reference --------------------------
def encoder_reference(tokens, mask, params):
    N, L = tokens.shape
    word = jnp.take(params["word_emb"], tokens, axis=0)
    pos = jnp.take(params["pos_emb"], jnp.arange(L), axis=0)[None]
    out = word + pos
    for p in params["layers"]:
        x = out                                                        # (N, L, E)
        xh = x.reshape(N, L, HEADS, HEAD_DIM)
        q = jnp.einsum("nlhd,ed->nlhe", xh, p["wq"])
        k = jnp.einsum("nlhd,ed->nlhe", xh, p["wk"])
        v = jnp.einsum("nlhd,ed->nlhe", xh, p["wv"])
        energy = jnp.einsum("nqhd,nkhd->nhqk", q, k)
        energy = jnp.where(mask[:, None, :, :] == 0, -1e20, energy)
        att = jax.nn.softmax(energy / math.sqrt(EMBED), axis=3)
        o = jnp.einsum("nhql,nlhd->nqhd", att, v).reshape(N, L, EMBED)
        o = o @ p["wo"].T + p["bo"]
        y = o + x
        mu = y.mean(-1, keepdims=True)
        var = ((y - mu) ** 2).mean(-1, keepdims=True)
        xn = (y - mu) / jnp.sqrt(var + LN_EPS) * p["g1"] + p["be1"]
        h1 = jnp.maximum(xn @ p["w1"].T + p["bf1"], 0.0)
        h2 = h1 @ p["w2"].T + p["bf2"]
        z = h2 + xn
        mu2 = z.mean(-1, keepdims=True)
        var2 = ((z - mu2) ** 2).mean(-1, keepdims=True)
        out = (z - mu2) / jnp.sqrt(var2 + LN_EPS) * p["g2"] + p["be2"]
    return out


# ------------------------------------ main ------------------------------------
if __name__ == "__main__":
    key = jax.random.PRNGKey(0)
    params = init_params(key)
    prepped = prepare_params(params)

    key_tok = jax.random.fold_in(key, 123)
    tokens = jax.random.randint(key_tok, (BATCH, SEQ), 0, SRC_VOCAB, dtype=jnp.int32)

    # Key-padding mask: batch 0 all valid; batch 1 has last two keys masked out.
    mask = jnp.ones((BATCH, 1, SEQ), jnp.int32)
    mask = mask.at[1, 0, SEQ - 2:].set(0)

    out = jax.block_until_ready(encoder_forward(tokens, mask, prepped))

    ref = encoder_reference(tokens, mask, params)
    assert out.shape == (BATCH, SEQ, EMBED)
    assert jnp.allclose(out, ref, rtol=2e-3, atol=2e-3), (
        f"max abs err {jnp.max(jnp.abs(out - ref))}"
    )

    print("KERNEL_OK")
</pallas_src>

<mosaic_0001>
module attributes {stable_mosaic.version = 11 : i64} {
  func.func @encoder_kernel(%arg0: memref<16x1xi32, #tpu.memory_space<vmem>>, %arg1: memref<2x1x8xi32, #tpu.memory_space<vmem>>, %arg2: memref<50x32xf32, #tpu.memory_space<vmem>>, %arg3: memref<16x32xf32, #tpu.memory_space<vmem>>, %arg4: memref<2x32x96xf32, #tpu.memory_space<vmem>>, %arg5: memref<2x32x32xf32, #tpu.memory_space<vmem>>, %arg6: memref<2x1x32xf32, #tpu.memory_space<vmem>>, %arg7: memref<2x1x32xf32, #tpu.memory_space<vmem>>, %arg8: memref<2x1x32xf32, #tpu.memory_space<vmem>>, %arg9: memref<2x32x128xf32, #tpu.memory_space<vmem>>, %arg10: memref<2x1x128xf32, #tpu.memory_space<vmem>>, %arg11: memref<2x128x32xf32, #tpu.memory_space<vmem>>, %arg12: memref<2x1x32xf32, #tpu.memory_space<vmem>>, %arg13: memref<2x1x32xf32, #tpu.memory_space<vmem>>, %arg14: memref<2x1x32xf32, #tpu.memory_space<vmem>>, %arg15: memref<2x8x32xf32, #tpu.memory_space<vmem>>) attributes {dimension_semantics = [], scalar_prefetch = 0 : i64, scratch_operands = 0 : i64, tpu.core_type = #tpu.core_type<tc>} {
    %c0 = arith.constant 0 : index
    %c0_0 = arith.constant 0 : index
    %0 = vector.load %arg0[%c0, %c0_0] : memref<16x1xi32, #tpu.memory_space<vmem>>, vector<16x1xi32>
    %1 = tpu.iota {dimensions = array<i32: 1>} : vector<16x50xi32>
    %2 = vector.broadcast %0 : vector<16x1xi32> to vector<16x50xi32>
    %3 = arith.cmpi eq, %1, %2 : vector<16x50xi32>
    %4 = arith.extui %3 : vector<16x50xi1> to vector<16x50xi32>
    %5 = arith.sitofp %4 : vector<16x50xi32> to vector<16x50xf32>
    %c0_1 = arith.constant 0 : index
    %c0_2 = arith.constant 0 : index
    %6 = vector.load %arg2[%c0_1, %c0_2] : memref<50x32xf32, #tpu.memory_space<vmem>>, vector<50x32xf32>
    %cst = arith.constant dense<0.000000e+00> : vector<16x32xf32>
    %7 = tpu.matmul %5, %6, %cst {dimension_numbers = #tpu.dot_dimension_numbers<[1], [0], [0], [1], [0, 0, 1, 1], [], []>} : vector<16x50xf32>, vector<50x32xf32>, vector<16x32xf32> -> vector<16x32xf32>
    %c0_3 = arith.constant 0 : index
    %c0_4 = arith.constant 0 : index
    %8 = vector.load %arg3[%c0_3, %c0_4] : memref<16x32xf32, #tpu.memory_space<vmem>>, vector<8x32xf32>
    %9 = vector.shape_cast %7 : vector<16x32xf32> to vector<2x8x32xf32>
    %10 = vector.shape_cast %8 : vector<8x32xf32> to vector<1x8x32xf32>
    %11 = vector.broadcast %10 : vector<1x8x32xf32> to vector<2x8x32xf32>
    %12 = arith.addf %9, %11 : vector<2x8x32xf32>
    %13 = vector.shape_cast %12 : vector<2x8x32xf32> to vector<16x32xf32>
    %c0_5 = arith.constant 0 : index
    %c0_6 = arith.constant 0 : index
    %c0_7 = arith.constant 0 : index
    %14 = vector.load %arg1[%c0_5, %c0_6, %c0_7] : memref<2x1x8xi32, #tpu.memory_space<vmem>>, vector<2x1x8xi32>
    %c0_i32 = arith.constant 0 : i32
    %15 = vector.broadcast %c0_i32 : i32 to vector<2x1x8xi32>
    %16 = arith.cmpi eq, %14, %15 : vector<2x1x8xi32>
    %cst_8 = arith.constant -1.76776698E+19 : f32
    %cst_9 = arith.constant 0.000000e+00 : f32
    %17 = vector.broadcast %cst_8 : f32 to vector<2x1x8xf32>
    %18 = vector.broadcast %cst_9 : f32 to vector<2x1x8xf32>
    %19 = arith.select %16, %17, %18 : vector<2x1x8xi1>, vector<2x1x8xf32>
    %20 = vector.shape_cast %19 : vector<2x1x8xf32> to vector<2x1x8xf32>
    %21 = vector.broadcast %20 : vector<2x1x8xf32> to vector<2x8x8xf32>
    %c0_10 = arith.constant 0 : index
    %c0_11 = arith.constant 0 : index
    %c0_12 = arith.constant 0 : index
    %22 = vector.load %arg4[%c0_10, %c0_11, %c0_12] : memref<2x32x96xf32, #tpu.memory_space<vmem>>, vector<1x32x96xf32>
    %23 = vector.shape_cast %22 : vector<1x32x96xf32> to vector<32x96xf32>
    %cst_13 = arith.constant dense<0.000000e+00> : vector<16x96xf32>
    %24 = tpu.matmul %13, %23, %cst_13 {dimension_numbers = #tpu.dot_dimension_numbers<[1], [0], [0], [1], [0, 0, 1, 1], [], []>} : vector<16x32xf32>, vector<32x96xf32>, vector<16x96xf32> -> vector<16x96xf32>
    %25 = vector.extract_strided_slice %24 {offsets = [0, 0], sizes = [16, 32], strides = [1, 1]} : vector<16x96xf32> to vector<16x32xf32>
    %26 = vector.shape_cast %25 : vector<16x32xf32> to vector<2x8x32xf32>
    %27 = vector.extract_strided_slice %24 {offsets = [0, 32], sizes = [16, 32], strides = [1, 1]} : vector<16x96xf32> to vector<16x32xf32>
    %28 = vector.shape_cast %27 : vector<16x32xf32> to vector<2x8x32xf32>
    %29 = vector.extract_strided_slice %24 {offsets = [0, 64], sizes = [16, 32], strides = [1, 1]} : vector<16x96xf32> to vector<16x32xf32>
    %30 = vector.shape_cast %29 : vector<16x32xf32> to vector<2x8x32xf32>
    %31 = vector.extract_strided_slice %26 {offsets = [0, 0, 0], sizes = [2, 8, 8], strides = [1, 1, 1]} : vector<2x8x32xf32> to vector<2x8x8xf32>
    %32 = vector.extract_strided_slice %28 {offsets = [0, 0, 0], sizes = [2, 8, 8], strides = [1, 1, 1]} : vector<2x8x32xf32> to vector<2x8x8xf32>
    %33 = vector.extract_strided_slice %30 {offsets = [0, 0, 0], sizes = [2, 8, 8], strides = [1, 1, 1]} : vector<2x8x32xf32> to vector<2x8x8xf32>
    "tpu.trace_start"() <{level = 10 : i32, message = "nqd,nkd->nqk"}> : () -> ()
    %cst_14 = arith.constant dense<0.000000e+00> : vector<2x8x8xf32>
    %34 = tpu.matmul %31, %32, %cst_14 {dimension_numbers = #tpu.dot_dimension_numbers<[2], [2], [1], [1], [0, 0, 0, 1, 1, 1], [0], [0]>} : vector<2x8x8xf32>, vector<2x8x8xf32>, vector<2x8x8xf32> -> vector<2x8x8xf32>
    "tpu.trace_stop"() : () -> ()
    %35 = arith.addf %34, %21 : vector<2x8x8xf32>
    %cst_15 = arith.constant dense<0xFF800000> : vector<2x8xf32>
    %36 = vector.multi_reduction <maximumf>, %35, %cst_15 [2] : vector<2x8x8xf32> to vector<2x8xf32>
    %37 = vector.shape_cast %36 : vector<2x8xf32> to vector<2x8x1xf32>
    %38 = vector.broadcast %37 : vector<2x8x1xf32> to vector<2x8x8xf32>
    %39 = arith.subf %35, %38 : vector<2x8x8xf32>
    %40 = math.exp %39 : vector<2x8x8xf32>
    %cst_16 = arith.constant dense<0.000000e+00> : vector<2x8xf32>
    %41 = vector.multi_reduction <add>, %40, %cst_16 [2] : vector<2x8x8xf32> to vector<2x8xf32>
    %42 = vector.shape_cast %41 : vector<2x8xf32> to vector<2x8x1xf32>
    %43 = tpu.reciprocal %42 {approx = true} : vector<2x8x1xf32> -> vector<2x8x1xf32>
    %44 = arith.mulf %42, %43 : vector<2x8x1xf32>
    %cst_17 = arith.constant 2.000000e+00 : f32
    %45 = vector.broadcast %cst_17 : f32 to vector<2x8x1xf32>
    %46 = arith.subf %45, %44 : vector<2x8x1xf32>
    %47 = arith.mulf %43, %46 : vector<2x8x1xf32>
    "tpu.trace_start"() <{level = 10 : i32, message = "nqk,nkd->nqd"}> : () -> ()
    %cst_18 = arith.constant dense<0.000000e+00> : vector<2x8x8xf32>
    %48 = tpu.matmul %40, %33, %cst_18 {dimension_numbers = #tpu.dot_dimension_numbers<[2], [1], [1], [2], [0, 0, 0, 1, 1, 2], [0], [0]>} : vector<2x8x8xf32>, vector<2x8x8xf32>, vector<2x8x8xf32> -> vector<2x8x8xf32>
    "tpu.trace_stop"() : () -> ()
    %49 = vector.broadcast %47 : vector<2x8x1xf32> to vector<2x8x8xf32>
    %50 = arith.mulf %48, %49 : vector<2x8x8xf32>
    %51 = vector.extract_strided_slice %26 {offsets = [0, 0, 8], sizes = [2, 8, 8], strides = [1, 1, 1]} : vector<2x8x32xf32> to vector<2x8x8xf32>
    %52 = vector.extract_strided_slice %28 {offsets = [0, 0, 8], sizes = [2, 8, 8], strides = [1, 1, 1]} : vector<2x8x32xf32> to vector<2x8x8xf32>
    %53 = vector.extract_strided_slice %30 {offsets = [0, 0, 8], sizes = [2, 8, 8], strides = [1, 1, 1]} : vector<2x8x32xf32> to vector<2x8x8xf32>
    "tpu.trace_start"() <{level = 10 : i32, message = "nqd,nkd->nqk"}> : () -> ()
    %cst_19 = arith.constant dense<0.000000e+00> : vector<2x8x8xf32>
    %54 = tpu.matmul %51, %52, %cst_19 {dimension_numbers = #tpu.dot_dimension_numbers<[2], [2], [1], [1], [0, 0, 0, 1, 1, 1], [0], [0]>} : vector<2x8x8xf32>, vector<2x8x8xf32>, vector<2x8x8xf32> -> vector<2x8x8xf32>
    "tpu.trace_stop"() : () -> ()
    %55 = arith.addf %54, %21 : vector<2x8x8xf32>
    %cst_20 = arith.constant dense<0xFF800000> : vector<2x8xf32>
    %56 = vector.multi_reduction <maximumf>, %55, %cst_20 [2] : vector<2x8x8xf32> to vector<2x8xf32>
    %57 = vector.shape_cast %56 : vector<2x8xf32> to vector<2x8x1xf32>
    %58 = vector.broadcast %57 : vector<2x8x1xf32> to vector<2x8x8xf32>
    %59 = arith.subf %55, %58 : vector<2x8x8xf32>
    %60 = math.exp %59 : vector<2x8x8xf32>
    %cst_21 = arith.constant dense<0.000000e+00> : vector<2x8xf32>
    %61 = vector.multi_reduction <add>, %60, %cst_21 [2] : vector<2x8x8xf32> to vector<2x8xf32>
    %62 = vector.shape_cast %61 : vector<2x8xf32> to vector<2x8x1xf32>
    %63 = tpu.reciprocal %62 {approx = true} : vector<2x8x1xf32> -> vector<2x8x1xf32>
    %64 = arith.mulf %62, %63 : vector<2x8x1xf32>
    %cst_22 = arith.constant 2.000000e+00 : f32
    %65 = vector.broadcast %cst_22 : f32 to vector<2x8x1xf32>
    %66 = arith.subf %65, %64 : vector<2x8x1xf32>
    %67 = arith.mulf %63, %66 : vector<2x8x1xf32>
    "tpu.trace_start"() <{level = 10 : i32, message = "nqk,nkd->nqd"}> : () -> ()
    %cst_23 = arith.constant dense<0.000000e+00> : vector<2x8x8xf32>
    %68 = tpu.matmul %60, %53, %cst_23 {dimension_numbers = #tpu.dot_dimension_numbers<[2], [1], [1], [2], [0, 0, 0, 1, 1, 2], [0], [0]>} : vector<2x8x8xf32>, vector<2x8x8xf32>, vector<2x8x8xf32> -> vector<2x8x8xf32>
    "tpu.trace_stop"() : () -> ()
    %69 = vector.broadcast %67 : vector<2x8x1xf32> to vector<2x8x8xf32>
    %70 = arith.mulf %68, %69 : vector<2x8x8xf32>
    %71 = vector.extract_strided_slice %26 {offsets = [0, 0, 16], sizes = [2, 8, 8], strides = [1, 1, 1]} : vector<2x8x32xf32> to vector<2x8x8xf32>
    %72 = vector.extract_strided_slice %28 {offsets = [0, 0, 16], sizes = [2, 8, 8], strides = [1, 1, 1]} : vector<2x8x32xf32> to vector<2x8x8xf32>
    %73 = vector.extract_strided_slice %30 {offsets = [0, 0, 16], sizes = [2, 8, 8], strides = [1, 1, 1]} : vector<2x8x32xf32> to vector<2x8x8xf32>
    "tpu.trace_start"() <{level = 10 : i32, message = "nqd,nkd->nqk"}> : () -> ()
    %cst_24 = arith.constant dense<0.000000e+00> : vector<2x8x8xf32>
    %74 = tpu.matmul %71, %72, %cst_24 {dimension_numbers = #tpu.dot_dimension_numbers<[2], [2], [1], [1], [0, 0, 0, 1, 1, 1], [0], [0]>} : vector<2x8x8xf32>, vector<2x8x8xf32>, vector<2x8x8xf32> -> vector<2x8x8xf32>
    "tpu.trace_stop"() : () -> ()
    %75 = arith.addf %74, %21 : vector<2x8x8xf32>
    %cst_25 = arith.constant dense<0xFF800000> : vector<2x8xf32>
    %76 = vector.multi_reduction <maximumf>, %75, %cst_25 [2] : vector<2x8x8xf32> to vector<2x8xf32>
    %77 = vector.shape_cast %76 : vector<2x8xf32> to vector<2x8x1xf32>
    %78 = vector.broadcast %77 : vector<2x8x1xf32> to vector<2x8x8xf32>
    %79 = arith.subf %75, %78 : vector<2x8x8xf32>
    %80 = math.exp %79 : vector<2x8x8xf32>
    %cst_26 = arith.constant dense<0.000000e+00> : vector<2x8xf32>
    %81 = vector.multi_reduction <add>, %80, %cst_26 [2] : vector<2x8x8xf32> to vector<2x8xf32>
    %82 = vector.shape_cast %81 : vector<2x8xf32> to vector<2x8x1xf32>
    %83 = tpu.reciprocal %82 {approx = true} : vector<2x8x1xf32> -> vector<2x8x1xf32>
    %84 = arith.mulf %82, %83 : vector<2x8x1xf32>
    %cst_27 = arith.constant 2.000000e+00 : f32
    %85 = vector.broadcast %cst_27 : f32 to vector<2x8x1xf32>
    %86 = arith.subf %85, %84 : vector<2x8x1xf32>
    %87 = arith.mulf %83, %86 : vector<2x8x1xf32>
    "tpu.trace_start"() <{level = 10 : i32, message = "nqk,nkd->nqd"}> : () -> ()
    %cst_28 = arith.constant dense<0.000000e+00> : vector<2x8x8xf32>
    %88 = tpu.matmul %80, %73, %cst_28 {dimension_numbers = #tpu.dot_dimension_numbers<[2], [1], [1], [2], [0, 0, 0, 1, 1, 2], [0], [0]>} : vector<2x8x8xf32>, vector<2x8x8xf32>, vector<2x8x8xf32> -> vector<2x8x8xf32>
    "tpu.trace_stop"() : () -> ()
    %89 = vector.broadcast %87 : vector<2x8x1xf32> to vector<2x8x8xf32>
    %90 = arith.mulf %88, %89 : vector<2x8x8xf32>
    %91 = vector.extract_strided_slice %26 {offsets = [0, 0, 24], sizes = [2, 8, 8], strides = [1, 1, 1]} : vector<2x8x32xf32> to vector<2x8x8xf32>
    %92 = vector.extract_strided_slice %28 {offsets = [0, 0, 24], sizes = [2, 8, 8], strides = [1, 1, 1]} : vector<2x8x32xf32> to vector<2x8x8xf32>
    %93 = vector.extract_strided_slice %30 {offsets = [0, 0, 24], sizes = [2, 8, 8], strides = [1, 1, 1]} : vector<2x8x32xf32> to vector<2x8x8xf32>
    "tpu.trace_start"() <{level = 10 : i32, message = "nqd,nkd->nqk"}> : () -> ()
    %cst_29 = arith.constant dense<0.000000e+00> : vector<2x8x8xf32>
    %94 = tpu.matmul %91, %92, %cst_29 {dimension_numbers = #tpu.dot_dimension_numbers<[2], [2], [1], [1], [0, 0, 0, 1, 1, 1], [0], [0]>} : vector<2x8x8xf32>, vector<2x8x8xf32>, vector<2x8x8xf32> -> vector<2x8x8xf32>
    "tpu.trace_stop"() : () -> ()
    %95 = arith.addf %94, %21 : vector<2x8x8xf32>
    %cst_30 = arith.constant dense<0xFF800000> : vector<2x8xf32>
    %96 = vector.multi_reduction <maximumf>, %95, %cst_30 [2] : vector<2x8x8xf32> to vector<2x8xf32>
    %97 = vector.shape_cast %96 : vector<2x8xf32> to vector<2x8x1xf32>
    %98 = vector.broadcast %97 : vector<2x8x1xf32> to vector<2x8x8xf32>
    %99 = arith.subf %95, %98 : vector<2x8x8xf32>
    %100 = math.exp %99 : vector<2x8x8xf32>
    %cst_31 = arith.constant dense<0.000000e+00> : vector<2x8xf32>
    %101 = vector.multi_reduction <add>, %100, %cst_31 [2] : vector<2x8x8xf32> to vector<2x8xf32>
    %102 = vector.shape_cast %101 : vector<2x8xf32> to vector<2x8x1xf32>
    %103 = tpu.reciprocal %102 {approx = true} : vector<2x8x1xf32> -> vector<2x8x1xf32>
    %104 = arith.mulf %102, %103 : vector<2x8x1xf32>
    %cst_32 = arith.constant 2.000000e+00 : f32
    %105 = vector.broadcast %cst_32 : f32 to vector<2x8x1xf32>
    %106 = arith.subf %105, %104 : vector<2x8x1xf32>
    %107 = arith.mulf %103, %106 : vector<2x8x1xf32>
    "tpu.trace_start"() <{level = 10 : i32, message = "nqk,nkd->nqd"}> : () -> ()
    %cst_33 = arith.constant dense<0.000000e+00> : vector<2x8x8xf32>
    %108 = tpu.matmul %100, %93, %cst_33 {dimension_numbers = #tpu.dot_dimension_numbers<[2], [1], [1], [2], [0, 0, 0, 1, 1, 2], [0], [0]>} : vector<2x8x8xf32>, vector<2x8x8xf32>, vector<2x8x8xf32> -> vector<2x8x8xf32>
    "tpu.trace_stop"() : () -> ()
    %109 = vector.broadcast %107 : vector<2x8x1xf32> to vector<2x8x8xf32>
    %110 = arith.mulf %108, %109 : vector<2x8x8xf32>
    %111 = tpu.concatenate %50, %70, %90, %110 in 2 : vector<2x8x8xf32>, vector<2x8x8xf32>, vector<2x8x8xf32>, vector<2x8x8xf32> -> vector<2x8x32xf32>
    %112 = vector.shape_cast %111 : vector<2x8x32xf32> to vector<16x32xf32>
    %c0_34 = arith.constant 0 : index
    %c0_35 = arith.constant 0 : index
    %c0_36 = arith.constant 0 : index
    %113 = vector.load %arg5[%c0_34, %c0_35, %c0_36] : memref<2x32x32xf32, #tpu.memory_space<vmem>>, vector<1x32x32xf32>
    %114 = vector.shape_cast %113 : vector<1x32x32xf32> to vector<32x32xf32>
    %cst_37 = arith.constant dense<0.000000e+00> : vector<16x32xf32>
    %115 = tpu.matmul %112, %114, %cst_37 {dimension_numbers = #tpu.dot_dimension_numbers<[1], [0], [0], [1], [0, 0, 1, 1], [], []>} : vector<16x32xf32>, vector<32x32xf32>, vector<16x32xf32> -> vector<16x32xf32>
    %c0_38 = arith.constant 0 : index
    %c0_39 = arith.constant 0 : index
    %c0_40 = arith.constant 0 : index
    %116 = vector.load %arg6[%c0_38, %c0_39, %c0_40] : memref<2x1x32xf32, #tpu.memory_space<vmem>>, vector<1x1x32xf32>
    %117 = vector.shape_cast %116 : vector<1x1x32xf32> to vector<1x32xf32>
    %118 = vector.broadcast %117 : vector<1x32xf32> to vector<16x32xf32>
    %119 = arith.addf %115, %118 : vector<16x32xf32>
    %120 = arith.addf %119, %13 : vector<16x32xf32>
    %cst_41 = arith.constant dense<0.000000e+00> : vector<16xf32>
    %121 = vector.multi_reduction <add>, %120, %cst_41 [1] : vector<16x32xf32> to vector<16xf32>
    %122 = vector.shape_cast %121 : vector<16xf32> to vector<16x1xf32>
    %123 = arith.mulf %120, %120 : vector<16x32xf32>
    %cst_42 = arith.constant dense<0.000000e+00> : vector<16xf32>
    %124 = vector.multi_reduction <add>, %123, %cst_42 [1] : vector<16x32xf32> to vector<16xf32>
    %125 = vector.shape_cast %124 : vector<16xf32> to vector<16x1xf32>
    %cst_43 = arith.constant 3.125000e-02 : f32
    %126 = vector.broadcast %cst_43 : f32 to vector<16x1xf32>
    %127 = arith.mulf %122, %126 : vector<16x1xf32>
    %cst_44 = arith.constant 3.125000e-02 : f32
    %128 = vector.broadcast %cst_44 : f32 to vector<16x1xf32>
    %129 = arith.mulf %125, %128 : vector<16x1xf32>
    %130 = arith.mulf %127, %127 : vector<16x1xf32>
    %131 = arith.subf %129, %130 : vector<16x1xf32>
    %132 = vector.broadcast %127 : vector<16x1xf32> to vector<16x32xf32>
    %133 = arith.subf %120, %132 : vector<16x32xf32>
    %cst_45 = arith.constant 9.99999974E-6 : f32
    %134 = vector.broadcast %cst_45 : f32 to vector<16x1xf32>
    %135 = arith.addf %131, %134 : vector<16x1xf32>
    %136 = math.rsqrt %135 : vector<16x1xf32>
    %137 = vector.broadcast %136 : vector<16x1xf32> to vector<16x32xf32>
    %138 = arith.mulf %133, %137 : vector<16x32xf32>
    %c0_46 = arith.constant 0 : index
    %c0_47 = arith.constant 0 : index
    %c0_48 = arith.constant 0 : index
    %139 = vector.load %arg7[%c0_46, %c0_47, %c0_48] : memref<2x1x32xf32, #tpu.memory_space<vmem>>, vector<1x1x32xf32>
    %140 = vector.shape_cast %139 : vector<1x1x32xf32> to vector<1x32xf32>
    %141 = vector.broadcast %140 : vector<1x32xf32> to vector<16x32xf32>
    %142 = arith.mulf %138, %141 : vector<16x32xf32>
    %c0_49 = arith.constant 0 : index
    %c0_50 = arith.constant 0 : index
    %c0_51 = arith.constant 0 : index
    %143 = vector.load %arg8[%c0_49, %c0_50, %c0_51] : memref<2x1x32xf32, #tpu.memory_space<vmem>>, vector<1x1x32xf32>
    %144 = vector.shape_cast %143 : vector<1x1x32xf32> to vector<1x32xf32>
    %145 = vector.broadcast %144 : vector<1x32xf32> to vector<16x32xf32>
    %146 = arith.addf %142, %145 : vector<16x32xf32>
    %c0_52 = arith.constant 0 : index
    %c0_53 = arith.constant 0 : index
    %c0_54 = arith.constant 0 : index
    %147 = vector.load %arg9[%c0_52, %c0_53, %c0_54] : memref<2x32x128xf32, #tpu.memory_space<vmem>>, vector<1x32x128xf32>
    %148 = vector.shape_cast %147 : vector<1x32x128xf32> to vector<32x128xf32>
    %cst_55 = arith.constant dense<0.000000e+00> : vector<16x128xf32>
    %149 = tpu.matmul %146, %148, %cst_55 {dimension_numbers = #tpu.dot_dimension_numbers<[1], [0], [0], [1], [0, 0, 1, 1], [], []>} : vector<16x32xf32>, vector<32x128xf32>, vector<16x128xf32> -> vector<16x128xf32>
    %c0_56 = arith.constant 0 : index
    %c0_57 = arith.constant 0 : index
    %c0_58 = arith.constant 0 : index
    %150 = vector.load %arg10[%c0_56, %c0_57, %c0_58] : memref<2x1x128xf32, #tpu.memory_space<vmem>>, vector<1x1x128xf32>
    %151 = vector.shape_cast %150 : vector<1x1x128xf32> to vector<1x128xf32>
    %152 = vector.broadcast %151 : vector<1x128xf32> to vector<16x128xf32>
    %153 = arith.addf %149, %152 : vector<16x128xf32>
    %cst_59 = arith.constant 0.000000e+00 : f32
    %154 = vector.broadcast %cst_59 : f32 to vector<16x128xf32>
    %155 = arith.maximumf %153, %154 : vector<16x128xf32>
    %c0_60 = arith.constant 0 : index
    %c0_61 = arith.constant 0 : index
    %c0_62 = arith.constant 0 : index
    %156 = vector.load %arg11[%c0_60, %c0_61, %c0_62] : memref<2x128x32xf32, #tpu.memory_space<vmem>>, vector<1x128x32xf32>
    %157 = vector.shape_cast %156 : vector<1x128x32xf32> to vector<128x32xf32>
    %cst_63 = arith.constant dense<0.000000e+00> : vector<16x32xf32>
    %158 = tpu.matmul %155, %157, %cst_63 {dimension_numbers = #tpu.dot_dimension_numbers<[1], [0], [0], [1], [0, 0, 1, 1], [], []>} : vector<16x128xf32>, vector<128x32xf32>, vector<16x32xf32> -> vector<16x32xf32>
    %c0_64 = arith.constant 0 : index
    %c0_65 = arith.constant 0 : index
    %c0_66 = arith.constant 0 : index
    %159 = vector.load %arg12[%c0_64, %c0_65, %c0_66] : memref<2x1x32xf32, #tpu.memory_space<vmem>>, vector<1x1x32xf32>
    %160 = vector.shape_cast %159 : vector<1x1x32xf32> to vector<1x32xf32>
    %161 = vector.broadcast %160 : vector<1x32xf32> to vector<16x32xf32>
    %162 = arith.addf %158, %161 : vector<16x32xf32>
    %163 = arith.addf %162, %146 : vector<16x32xf32>
    %cst_67 = arith.constant dense<0.000000e+00> : vector<16xf32>
    %164 = vector.multi_reduction <add>, %163, %cst_67 [1] : vector<16x32xf32> to vector<16xf32>
    %165 = vector.shape_cast %164 : vector<16xf32> to vector<16x1xf32>
    %166 = arith.mulf %163, %163 : vector<16x32xf32>
    %cst_68 = arith.constant dense<0.000000e+00> : vector<16xf32>
    %167 = vector.multi_reduction <add>, %166, %cst_68 [1] : vector<16x32xf32> to vector<16xf32>
    %168 = vector.shape_cast %167 : vector<16xf32> to vector<16x1xf32>
    %cst_69 = arith.constant 3.125000e-02 : f32
    %169 = vector.broadcast %cst_69 : f32 to vector<16x1xf32>
    %170 = arith.mulf %165, %169 : vector<16x1xf32>
    %cst_70 = arith.constant 3.125000e-02 : f32
    %171 = vector.broadcast %cst_70 : f32 to vector<16x1xf32>
    %172 = arith.mulf %168, %171 : vector<16x1xf32>
    %173 = arith.mulf %170, %170 : vector<16x1xf32>
    %174 = arith.subf %172, %173 : vector<16x1xf32>
    %175 = vector.broadcast %170 : vector<16x1xf32> to vector<16x32xf32>
    %176 = arith.subf %163, %175 : vector<16x32xf32>
    %cst_71 = arith.constant 9.99999974E-6 : f32
    %177 = vector.broadcast %cst_71 : f32 to vector<16x1xf32>
    %178 = arith.addf %174, %177 : vector<16x1xf32>
    %179 = math.rsqrt %178 : vector<16x1xf32>
    %180 = vector.broadcast %179 : vector<16x1xf32> to vector<16x32xf32>
    %181 = arith.mulf %176, %180 : vector<16x32xf32>
    %c0_72 = arith.constant 0 : index
    %c0_73 = arith.constant 0 : index
    %c0_74 = arith.constant 0 : index
    %182 = vector.load %arg13[%c0_72, %c0_73, %c0_74] : memref<2x1x32xf32, #tpu.memory_space<vmem>>, vector<1x1x32xf32>
    %183 = vector.shape_cast %182 : vector<1x1x32xf32> to vector<1x32xf32>
    %184 = vector.broadcast %183 : vector<1x32xf32> to vector<16x32xf32>
    %185 = arith.mulf %181, %184 : vector<16x32xf32>
    %c0_75 = arith.constant 0 : index
    %c0_76 = arith.constant 0 : index
    %c0_77 = arith.constant 0 : index
    %186 = vector.load %arg14[%c0_75, %c0_76, %c0_77] : memref<2x1x32xf32, #tpu.memory_space<vmem>>, vector<1x1x32xf32>
    %187 = vector.shape_cast %186 : vector<1x1x32xf32> to vector<1x32xf32>
    %188 = vector.broadcast %187 : vector<1x32xf32> to vector<16x32xf32>
    %189 = arith.addf %185, %188 : vector<16x32xf32>
    %c1 = arith.constant 1 : index
    %c0_78 = arith.constant 0 : index
    %c0_79 = arith.constant 0 : index
    %190 = vector.load %arg4[%c1, %c0_78, %c0_79] : memref<2x32x96xf32, #tpu.memory_space<vmem>>, vector<1x32x96xf32>
    %191 = vector.shape_cast %190 : vector<1x32x96xf32> to vector<32x96xf32>
    %cst_80 = arith.constant dense<0.000000e+00> : vector<16x96xf32>
    %192 = tpu.matmul %189, %191, %cst_80 {dimension_numbers = #tpu.dot_dimension_numbers<[1], [0], [0], [1], [0, 0, 1, 1], [], []>} : vector<16x32xf32>, vector<32x96xf32>, vector<16x96xf32> -> vector<16x96xf32>
    %193 = vector.extract_strided_slice %192 {offsets = [0, 0], sizes = [16, 32], strides = [1, 1]} : vector<16x96xf32> to vector<16x32xf32>
    %194 = vector.shape_cast %193 : vector<16x32xf32> to vector<2x8x32xf32>
    %195 = vector.extract_strided_slice %192 {offsets = [0, 32], sizes = [16, 32], strides = [1, 1]} : vector<16x96xf32> to vector<16x32xf32>
    %196 = vector.shape_cast %195 : vector<16x32xf32> to vector<2x8x32xf32>
    %197 = vector.extract_strided_slice %192 {offsets = [0, 64], sizes = [16, 32], strides = [1, 1]} : vector<16x96xf32> to vector<16x32xf32>
    %198 = vector.shape_cast %197 : vector<16x32xf32> to vector<2x8x32xf32>
    %199 = vector.extract_strided_slice %194 {offsets = [0, 0, 0], sizes = [2, 8, 8], strides = [1, 1, 1]} : vector<2x8x32xf32> to vector<2x8x8xf32>
    %200 = vector.extract_strided_slice %196 {offsets = [0, 0, 0], sizes = [2, 8, 8], strides = [1, 1, 1]} : vector<2x8x32xf32> to vector<2x8x8xf32>
    %201 = vector.extract_strided_slice %198 {offsets = [0, 0, 0], sizes = [2, 8, 8], strides = [1, 1, 1]} : vector<2x8x32xf32> to vector<2x8x8xf32>
    "tpu.trace_start"() <{level = 10 : i32, message = "nqd,nkd->nqk"}> : () -> ()
    %cst_81 = arith.constant dense<0.000000e+00> : vector<2x8x8xf32>
    %202 = tpu.matmul %199, %200, %cst_81 {dimension_numbers = #tpu.dot_dimension_numbers<[2], [2], [1], [1], [0, 0, 0, 1, 1, 1], [0], [0]>} : vector<2x8x8xf32>, vector<2x8x8xf32>, vector<2x8x8xf32> -> vector<2x8x8xf32>
    "tpu.trace_stop"() : () -> ()
    %203 = arith.addf %202, %21 : vector<2x8x8xf32>
    %cst_82 = arith.constant dense<0xFF800000> : vector<2x8xf32>
    %204 = vector.multi_reduction <maximumf>, %203, %cst_82 [2] : vector<2x8x8xf32> to vector<2x8xf32>
    %205 = vector.shape_cast %204 : vector<2x8xf32> to vector<2x8x1xf32>
    %206 = vector.broadcast %205 : vector<2x8x1xf32> to vector<2x8x8xf32>
    %207 = arith.subf %203, %206 : vector<2x8x8xf32>
    %208 = math.exp %207 : vector<2x8x8xf32>
    %cst_83 = arith.constant dense<0.000000e+00> : vector<2x8xf32>
    %209 = vector.multi_reduction <add>, %208, %cst_83 [2] : vector<2x8x8xf32> to vector<2x8xf32>
    %210 = vector.shape_cast %209 : vector<2x8xf32> to vector<2x8x1xf32>
    %211 = tpu.reciprocal %210 {approx = true} : vector<2x8x1xf32> -> vector<2x8x1xf32>
    %212 = arith.mulf %210, %211 : vector<2x8x1xf32>
    %cst_84 = arith.constant 2.000000e+00 : f32
    %213 = vector.broadcast %cst_84 : f32 to vector<2x8x1xf32>
    %214 = arith.subf %213, %212 : vector<2x8x1xf32>
    %215 = arith.mulf %211, %214 : vector<2x8x1xf32>
    "tpu.trace_start"() <{level = 10 : i32, message = "nqk,nkd->nqd"}> : () -> ()
    %cst_85 = arith.constant dense<0.000000e+00> : vector<2x8x8xf32>
    %216 = tpu.matmul %208, %201, %cst_85 {dimension_numbers = #tpu.dot_dimension_numbers<[2], [1], [1], [2], [0, 0, 0, 1, 1, 2], [0], [0]>} : vector<2x8x8xf32>, vector<2x8x8xf32>, vector<2x8x8xf32> -> vector<2x8x8xf32>
    "tpu.trace_stop"() : () -> ()
    %217 = vector.broadcast %215 : vector<2x8x1xf32> to vector<2x8x8xf32>
    %218 = arith.mulf %216, %217 : vector<2x8x8xf32>
    %219 = vector.extract_strided_slice %194 {offsets = [0, 0, 8], sizes = [2, 8, 8], strides = [1, 1, 1]} : vector<2x8x32xf32> to vector<2x8x8xf32>
    %220 = vector.extract_strided_slice %196 {offsets = [0, 0, 8], sizes = [2, 8, 8], strides = [1, 1, 1]} : vector<2x8x32xf32> to vector<2x8x8xf32>
    %221 = vector.extract_strided_slice %198 {offsets = [0, 0, 8], sizes = [2, 8, 8], strides = [1, 1, 1]} : vector<2x8x32xf32> to vector<2x8x8xf32>
    "tpu.trace_start"() <{level = 10 : i32, message = "nqd,nkd->nqk"}> : () -> ()
    %cst_86 = arith.constant dense<0.000000e+00> : vector<2x8x8xf32>
    %222 = tpu.matmul %219, %220, %cst_86 {dimension_numbers = #tpu.dot_dimension_numbers<[2], [2], [1], [1], [0, 0, 0, 1, 1, 1], [0], [0]>} : vector<2x8x8xf32>, vector<2x8x8xf32>, vector<2x8x8xf32> -> vector<2x8x8xf32>
    "tpu.trace_stop"() : () -> ()
    %223 = arith.addf %222, %21 : vector<2x8x8xf32>
    %cst_87 = arith.constant dense<0xFF800000> : vector<2x8xf32>
    %224 = vector.multi_reduction <maximumf>, %223, %cst_87 [2] : vector<2x8x8xf32> to vector<2x8xf32>
    %225 = vector.shape_cast %224 : vector<2x8xf32> to vector<2x8x1xf32>
    %226 = vector.broadcast %225 : vector<2x8x1xf32> to vector<2x8x8xf32>
    %227 = arith.subf %223, %226 : vector<2x8x8xf32>
    %228 = math.exp %227 : vector<2x8x8xf32>
    %cst_88 = arith.constant dense<0.000000e+00> : vector<2x8xf32>
    %229 = vector.multi_reduction <add>, %228, %cst_88 [2] : vector<2x8x8xf32> to vector<2x8xf32>
    %230 = vector.shape_cast %229 : vector<2x8xf32> to vector<2x8x1xf32>
    %231 = tpu.reciprocal %230 {approx = true} : vector<2x8x1xf32> -> vector<2x8x1xf32>
    %232 = arith.mulf %230, %231 : vector<2x8x1xf32>
    %cst_89 = arith.constant 2.000000e+00 : f32
    %233 = vector.broadcast %cst_89 : f32 to vector<2x8x1xf32>
    %234 = arith.subf %233, %232 : vector<2x8x1xf32>
    %235 = arith.mulf %231, %234 : vector<2x8x1xf32>
    "tpu.trace_start"() <{level = 10 : i32, message = "nqk,nkd->nqd"}> : () -> ()
    %cst_90 = arith.constant dense<0.000000e+00> : vector<2x8x8xf32>
    %236 = tpu.matmul %228, %221, %cst_90 {dimension_numbers = #tpu.dot_dimension_numbers<[2], [1], [1], [2], [0, 0, 0, 1, 1, 2], [0], [0]>} : vector<2x8x8xf32>, vector<2x8x8xf32>, vector<2x8x8xf32> -> vector<2x8x8xf32>
    "tpu.trace_stop"() : () -> ()
    %237 = vector.broadcast %235 : vector<2x8x1xf32> to vector<2x8x8xf32>
    %238 = arith.mulf %236, %237 : vector<2x8x8xf32>
    %239 = vector.extract_strided_slice %194 {offsets = [0, 0, 16], sizes = [2, 8, 8], strides = [1, 1, 1]} : vector<2x8x32xf32> to vector<2x8x8xf32>
    %240 = vector.extract_strided_slice %196 {offsets = [0, 0, 16], sizes = [2, 8, 8], strides = [1, 1, 1]} : vector<2x8x32xf32> to vector<2x8x8xf32>
    %241 = vector.extract_strided_slice %198 {offsets = [0, 0, 16], sizes = [2, 8, 8], strides = [1, 1, 1]} : vector<2x8x32xf32> to vector<2x8x8xf32>
    "tpu.trace_start"() <{level = 10 : i32, message = "nqd,nkd->nqk"}> : () -> ()
    %cst_91 = arith.constant dense<0.000000e+00> : vector<2x8x8xf32>
    %242 = tpu.matmul %239, %240, %cst_91 {dimension_numbers = #tpu.dot_dimension_numbers<[2], [2], [1], [1], [0, 0, 0, 1, 1, 1], [0], [0]>} : vector<2x8x8xf32>, vector<2x8x8xf32>, vector<2x8x8xf32> -> vector<2x8x8xf32>
    "tpu.trace_stop"() : () -> ()
    %243 = arith.addf %242, %21 : vector<2x8x8xf32>
    %cst_92 = arith.constant dense<0xFF800000> : vector<2x8xf32>
    %244 = vector.multi_reduction <maximumf>, %243, %cst_92 [2] : vector<2x8x8xf32> to vector<2x8xf32>
    %245 = vector.shape_cast %244 : vector<2x8xf32> to vector<2x8x1xf32>
    %246 = vector.broadcast %245 : vector<2x8x1xf32> to vector<2x8x8xf32>
    %247 = arith.subf %243, %246 : vector<2x8x8xf32>
    %248 = math.exp %247 : vector<2x8x8xf32>
    %cst_93 = arith.constant dense<0.000000e+00> : vector<2x8xf32>
    %249 = vector.multi_reduction <add>, %248, %cst_93 [2] : vector<2x8x8xf32> to vector<2x8xf32>
    %250 = vector.shape_cast %249 : vector<2x8xf32> to vector<2x8x1xf32>
    %251 = tpu.reciprocal %250 {approx = true} : vector<2x8x1xf32> -> vector<2x8x1xf32>
    %252 = arith.mulf %250, %251 : vector<2x8x1xf32>
    %cst_94 = arith.constant 2.000000e+00 : f32
    %253 = vector.broadcast %cst_94 : f32 to vector<2x8x1xf32>
    %254 = arith.subf %253, %252 : vector<2x8x1xf32>
    %255 = arith.mulf %251, %254 : vector<2x8x1xf32>
    "tpu.trace_start"() <{level = 10 : i32, message = "nqk,nkd->nqd"}> : () -> ()
    %cst_95 = arith.constant dense<0.000000e+00> : vector<2x8x8xf32>
    %256 = tpu.matmul %248, %241, %cst_95 {dimension_numbers = #tpu.dot_dimension_numbers<[2], [1], [1], [2], [0, 0, 0, 1, 1, 2], [0], [0]>} : vector<2x8x8xf32>, vector<2x8x8xf32>, vector<2x8x8xf32> -> vector<2x8x8xf32>
    "tpu.trace_stop"() : () -> ()
    %257 = vector.broadcast %255 : vector<2x8x1xf32> to vector<2x8x8xf32>
    %258 = arith.mulf %256, %257 : vector<2x8x8xf32>
    %259 = vector.extract_strided_slice %194 {offsets = [0, 0, 24], sizes = [2, 8, 8], strides = [1, 1, 1]} : vector<2x8x32xf32> to vector<2x8x8xf32>
    %260 = vector.extract_strided_slice %196 {offsets = [0, 0, 24], sizes = [2, 8, 8], strides = [1, 1, 1]} : vector<2x8x32xf32> to vector<2x8x8xf32>
    %261 = vector.extract_strided_slice %198 {offsets = [0, 0, 24], sizes = [2, 8, 8], strides = [1, 1, 1]} : vector<2x8x32xf32> to vector<2x8x8xf32>
    "tpu.trace_start"() <{level = 10 : i32, message = "nqd,nkd->nqk"}> : () -> ()
    %cst_96 = arith.constant dense<0.000000e+00> : vector<2x8x8xf32>
    %262 = tpu.matmul %259, %260, %cst_96 {dimension_numbers = #tpu.dot_dimension_numbers<[2], [2], [1], [1], [0, 0, 0, 1, 1, 1], [0], [0]>} : vector<2x8x8xf32>, vector<2x8x8xf32>, vector<2x8x8xf32> -> vector<2x8x8xf32>
    "tpu.trace_stop"() : () -> ()
    %263 = arith.addf %262, %21 : vector<2x8x8xf32>
    %cst_97 = arith.constant dense<0xFF800000> : vector<2x8xf32>
    %264 = vector.multi_reduction <maximumf>, %263, %cst_97 [2] : vector<2x8x8xf32> to vector<2x8xf32>
    %265 = vector.shape_cast %264 : vector<2x8xf32> to vector<2x8x1xf32>
    %266 = vector.broadcast %265 : vector<2x8x1xf32> to vector<2x8x8xf32>
    %267 = arith.subf %263, %266 : vector<2x8x8xf32>
    %268 = math.exp %267 : vector<2x8x8xf32>
    %cst_98 = arith.constant dense<0.000000e+00> : vector<2x8xf32>
    %269 = vector.multi_reduction <add>, %268, %cst_98 [2] : vector<2x8x8xf32> to vector<2x8xf32>
    %270 = vector.shape_cast %269 : vector<2x8xf32> to vector<2x8x1xf32>
    %271 = tpu.reciprocal %270 {approx = true} : vector<2x8x1xf32> -> vector<2x8x1xf32>
    %272 = arith.mulf %270, %271 : vector<2x8x1xf32>
    %cst_99 = arith.constant 2.000000e+00 : f32
    %273 = vector.broadcast %cst_99 : f32 to vector<2x8x1xf32>
    %274 = arith.subf %273, %272 : vector<2x8x1xf32>
    %275 = arith.mulf %271, %274 : vector<2x8x1xf32>
    "tpu.trace_start"() <{level = 10 : i32, message = "nqk,nkd->nqd"}> : () -> ()
    %cst_100 = arith.constant dense<0.000000e+00> : vector<2x8x8xf32>
    %276 = tpu.matmul %268, %261, %cst_100 {dimension_numbers = #tpu.dot_dimension_numbers<[2], [1], [1], [2], [0, 0, 0, 1, 1, 2], [0], [0]>} : vector<2x8x8xf32>, vector<2x8x8xf32>, vector<2x8x8xf32> -> vector<2x8x8xf32>
    "tpu.trace_stop"() : () -> ()
    %277 = vector.broadcast %275 : vector<2x8x1xf32> to vector<2x8x8xf32>
    %278 = arith.mulf %276, %277 : vector<2x8x8xf32>
    %279 = tpu.concatenate %218, %238, %258, %278 in 2 : vector<2x8x8xf32>, vector<2x8x8xf32>, vector<2x8x8xf32>, vector<2x8x8xf32> -> vector<2x8x32xf32>
    %280 = vector.shape_cast %279 : vector<2x8x32xf32> to vector<16x32xf32>
    %c1_101 = arith.constant 1 : index
    %c0_102 = arith.constant 0 : index
    %c0_103 = arith.constant 0 : index
    %281 = vector.load %arg5[%c1_101, %c0_102, %c0_103] : memref<2x32x32xf32, #tpu.memory_space<vmem>>, vector<1x32x32xf32>
    %282 = vector.shape_cast %281 : vector<1x32x32xf32> to vector<32x32xf32>
    %cst_104 = arith.constant dense<0.000000e+00> : vector<16x32xf32>
    %283 = tpu.matmul %280, %282, %cst_104 {dimension_numbers = #tpu.dot_dimension_numbers<[1], [0], [0], [1], [0, 0, 1, 1], [], []>} : vector<16x32xf32>, vector<32x32xf32>, vector<16x32xf32> -> vector<16x32xf32>
    %c1_105 = arith.constant 1 : index
    %c0_106 = arith.constant 0 : index
    %c0_107 = arith.constant 0 : index
    %284 = vector.load %arg6[%c1_105, %c0_106, %c0_107] : memref<2x1x32xf32, #tpu.memory_space<vmem>>, vector<1x1x32xf32>
    %285 = vector.shape_cast %284 : vector<1x1x32xf32> to vector<1x32xf32>
    %286 = vector.broadcast %285 : vector<1x32xf32> to vector<16x32xf32>
    %287 = arith.addf %283, %286 : vector<16x32xf32>
    %288 = arith.addf %287, %189 : vector<16x32xf32>
    %cst_108 = arith.constant dense<0.000000e+00> : vector<16xf32>
    %289 = vector.multi_reduction <add>, %288, %cst_108 [1] : vector<16x32xf32> to vector<16xf32>
    %290 = vector.shape_cast %289 : vector<16xf32> to vector<16x1xf32>
    %291 = arith.mulf %288, %288 : vector<16x32xf32>
    %cst_109 = arith.constant dense<0.000000e+00> : vector<16xf32>
    %292 = vector.multi_reduction <add>, %291, %cst_109 [1] : vector<16x32xf32> to vector<16xf32>
    %293 = vector.shape_cast %292 : vector<16xf32> to vector<16x1xf32>
    %cst_110 = arith.constant 3.125000e-02 : f32
    %294 = vector.broadcast %cst_110 : f32 to vector<16x1xf32>
    %295 = arith.mulf %290, %294 : vector<16x1xf32>
    %cst_111 = arith.constant 3.125000e-02 : f32
    %296 = vector.broadcast %cst_111 : f32 to vector<16x1xf32>
    %297 = arith.mulf %293, %296 : vector<16x1xf32>
    %298 = arith.mulf %295, %295 : vector<16x1xf32>
    %299 = arith.subf %297, %298 : vector<16x1xf32>
    %300 = vector.broadcast %295 : vector<16x1xf32> to vector<16x32xf32>
    %301 = arith.subf %288, %300 : vector<16x32xf32>
    %cst_112 = arith.constant 9.99999974E-6 : f32
    %302 = vector.broadcast %cst_112 : f32 to vector<16x1xf32>
    %303 = arith.addf %299, %302 : vector<16x1xf32>
    %304 = math.rsqrt %303 : vector<16x1xf32>
    %305 = vector.broadcast %304 : vector<16x1xf32> to vector<16x32xf32>
    %306 = arith.mulf %301, %305 : vector<16x32xf32>
    %c1_113 = arith.constant 1 : index
    %c0_114 = arith.constant 0 : index
    %c0_115 = arith.constant 0 : index
    %307 = vector.load %arg7[%c1_113, %c0_114, %c0_115] : memref<2x1x32xf32, #tpu.memory_space<vmem>>, vector<1x1x32xf32>
    %308 = vector.shape_cast %307 : vector<1x1x32xf32> to vector<1x32xf32>
    %309 = vector.broadcast %308 : vector<1x32xf32> to vector<16x32xf32>
    %310 = arith.mulf %306, %309 : vector<16x32xf32>
    %c1_116 = arith.constant 1 : index
    %c0_117 = arith.constant 0 : index
    %c0_118 = arith.constant 0 : index
    %311 = vector.load %arg8[%c1_116, %c0_117, %c0_118] : memref<2x1x32xf32, #tpu.memory_space<vmem>>, vector<1x1x32xf32>
    %312 = vector.shape_cast %311 : vector<1x1x32xf32> to vector<1x32xf32>
    %313 = vector.broadcast %312 : vector<1x32xf32> to vector<16x32xf32>
    %314 = arith.addf %310, %313 : vector<16x32xf32>
    %c1_119 = arith.constant 1 : index
    %c0_120 = arith.constant 0 : index
    %c0_121 = arith.constant 0 : index
    %315 = vector.load %arg9[%c1_119, %c0_120, %c0_121] : memref<2x32x128xf32, #tpu.memory_space<vmem>>, vector<1x32x128xf32>
    %316 = vector.shape_cast %315 : vector<1x32x128xf32> to vector<32x128xf32>
    %cst_122 = arith.constant dense<0.000000e+00> : vector<16x128xf32>
    %317 = tpu.matmul %314, %316, %cst_122 {dimension_numbers = #tpu.dot_dimension_numbers<[1], [0], [0], [1], [0, 0, 1, 1], [], []>} : vector<16x32xf32>, vector<32x128xf32>, vector<16x128xf32> -> vector<16x128xf32>
    %c1_123 = arith.constant 1 : index
    %c0_124 = arith.constant 0 : index
    %c0_125 = arith.constant 0 : index
    %318 = vector.load %arg10[%c1_123, %c0_124, %c0_125] : memref<2x1x128xf32, #tpu.memory_space<vmem>>, vector<1x1x128xf32>
    %319 = vector.shape_cast %318 : vector<1x1x128xf32> to vector<1x128xf32>
    %320 = vector.broadcast %319 : vector<1x128xf32> to vector<16x128xf32>
    %321 = arith.addf %317, %320 : vector<16x128xf32>
    %cst_126 = arith.constant 0.000000e+00 : f32
    %322 = vector.broadcast %cst_126 : f32 to vector<16x128xf32>
    %323 = arith.maximumf %321, %322 : vector<16x128xf32>
    %c1_127 = arith.constant 1 : index
    %c0_128 = arith.constant 0 : index
    %c0_129 = arith.constant 0 : index
    %324 = vector.load %arg11[%c1_127, %c0_128, %c0_129] : memref<2x128x32xf32, #tpu.memory_space<vmem>>, vector<1x128x32xf32>
    %325 = vector.shape_cast %324 : vector<1x128x32xf32> to vector<128x32xf32>
    %cst_130 = arith.constant dense<0.000000e+00> : vector<16x32xf32>
    %326 = tpu.matmul %323, %325, %cst_130 {dimension_numbers = #tpu.dot_dimension_numbers<[1], [0], [0], [1], [0, 0, 1, 1], [], []>} : vector<16x128xf32>, vector<128x32xf32>, vector<16x32xf32> -> vector<16x32xf32>
    %c1_131 = arith.constant 1 : index
    %c0_132 = arith.constant 0 : index
    %c0_133 = arith.constant 0 : index
    %327 = vector.load %arg12[%c1_131, %c0_132, %c0_133] : memref<2x1x32xf32, #tpu.memory_space<vmem>>, vector<1x1x32xf32>
    %328 = vector.shape_cast %327 : vector<1x1x32xf32> to vector<1x32xf32>
    %329 = vector.broadcast %328 : vector<1x32xf32> to vector<16x32xf32>
    %330 = arith.addf %326, %329 : vector<16x32xf32>
    %331 = arith.addf %330, %314 : vector<16x32xf32>
    %cst_134 = arith.constant dense<0.000000e+00> : vector<16xf32>
    %332 = vector.multi_reduction <add>, %331, %cst_134 [1] : vector<16x32xf32> to vector<16xf32>
    %333 = vector.shape_cast %332 : vector<16xf32> to vector<16x1xf32>
    %334 = arith.mulf %331, %331 : vector<16x32xf32>
    %cst_135 = arith.constant dense<0.000000e+00> : vector<16xf32>
    %335 = vector.multi_reduction <add>, %334, %cst_135 [1] : vector<16x32xf32> to vector<16xf32>
    %336 = vector.shape_cast %335 : vector<16xf32> to vector<16x1xf32>
    %cst_136 = arith.constant 3.125000e-02 : f32
    %337 = vector.broadcast %cst_136 : f32 to vector<16x1xf32>
    %338 = arith.mulf %333, %337 : vector<16x1xf32>
    %cst_137 = arith.constant 3.125000e-02 : f32
    %339 = vector.broadcast %cst_137 : f32 to vector<16x1xf32>
    %340 = arith.mulf %336, %339 : vector<16x1xf32>
    %341 = arith.mulf %338, %338 : vector<16x1xf32>
    %342 = arith.subf %340, %341 : vector<16x1xf32>
    %343 = vector.broadcast %338 : vector<16x1xf32> to vector<16x32xf32>
    %344 = arith.subf %331, %343 : vector<16x32xf32>
    %cst_138 = arith.constant 9.99999974E-6 : f32
    %345 = vector.broadcast %cst_138 : f32 to vector<16x1xf32>
    %346 = arith.addf %342, %345 : vector<16x1xf32>
    %347 = math.rsqrt %346 : vector<16x1xf32>
    %348 = vector.broadcast %347 : vector<16x1xf32> to vector<16x32xf32>
    %349 = arith.mulf %344, %348 : vector<16x32xf32>
    %c1_139 = arith.constant 1 : index
    %c0_140 = arith.constant 0 : index
    %c0_141 = arith.constant 0 : index
    %350 = vector.load %arg13[%c1_139, %c0_140, %c0_141] : memref<2x1x32xf32, #tpu.memory_space<vmem>>, vector<1x1x32xf32>
    %351 = vector.shape_cast %350 : vector<1x1x32xf32> to vector<1x32xf32>
    %352 = vector.broadcast %351 : vector<1x32xf32> to vector<16x32xf32>
    %353 = arith.mulf %349, %352 : vector<16x32xf32>
    %c1_142 = arith.constant 1 : index
    %c0_143 = arith.constant 0 : index
    %c0_144 = arith.constant 0 : index
    %354 = vector.load %arg14[%c1_142, %c0_143, %c0_144] : memref<2x1x32xf32, #tpu.memory_space<vmem>>, vector<1x1x32xf32>
    %355 = vector.shape_cast %354 : vector<1x1x32xf32> to vector<1x32xf32>
    %356 = vector.broadcast %355 : vector<1x32xf32> to vector<16x32xf32>
    %357 = arith.addf %353, %356 : vector<16x32xf32>
    %358 = vector.shape_cast %357 : vector<16x32xf32> to vector<2x8x32xf32>
    %c0_145 = arith.constant 0 : index
    %c0_146 = arith.constant 0 : index
    %c0_147 = arith.constant 0 : index
    %359 = vector.load %arg15[%c0_145, %c0_146, %c0_147] : memref<2x8x32xf32, #tpu.memory_space<vmem>>, vector<2x8x32xf32>
    tpu.vector_store %arg15[%c0_145, %c0_146, %c0_147], %358 {strides = array<i32>} : memref<2x8x32xf32, #tpu.memory_space<vmem>>, vector<2x8x32xf32>,
    return
  }
}

</mosaic_0001>

<llo_original>
// kernel: encoder_forward.1
$region0: #{encoder_forward.1}
  #allocation0 [shape = 'u32[]', space=smem, size = 0x4, offset = 0x4, fixed_abs, tag = 'smem constant byte address 0x4 - core index']
  #allocation1 [shape = 'u32[144,128]{1,0:T(1,128)}', space=vmem, size = 0x12000, scoped, tag = 'internal scratch']
  %s0 = inlined_call_operand.vmem [shape: s32[16,1], index: 0, kind: input, shape index: {}]
  %s1 = inlined_call_operand.vmem [shape: s32[2,1,8], index: 1, kind: input, shape index: {}]
  %s2 = inlined_call_operand.vmem [shape: f32[50,32], index: 2, kind: input, shape index: {}]
  %s3 = inlined_call_operand.vmem [shape: f32[16,32], index: 3, kind: input, shape index: {}]
  %s4 = inlined_call_operand.vmem [shape: f32[2,32,96], index: 4, kind: input, shape index: {}]
  %s5 = inlined_call_operand.vmem [shape: f32[2,32,32], index: 5, kind: input, shape index: {}]
  %s6 = inlined_call_operand.vmem [shape: f32[2,1,32], index: 6, kind: input, shape index: {}]
  %s7 = inlined_call_operand.vmem [shape: f32[2,1,32], index: 7, kind: input, shape index: {}]
  %s8 = inlined_call_operand.vmem [shape: f32[2,1,32], index: 8, kind: input, shape index: {}]
  %s9 = inlined_call_operand.vmem [shape: f32[2,32,128], index: 9, kind: input, shape index: {}]
  %s10 = inlined_call_operand.vmem [shape: f32[2,1,128], index: 10, kind: input, shape index: {}]
  %s11 = inlined_call_operand.vmem [shape: f32[2,128,32], index: 11, kind: input, shape index: {}]
  %s12 = inlined_call_operand.vmem [shape: f32[2,1,32], index: 12, kind: input, shape index: {}]
  %s13 = inlined_call_operand.vmem [shape: f32[2,1,32], index: 13, kind: input, shape index: {}]
  %s14 = inlined_call_operand.vmem [shape: f32[2,1,32], index: 14, kind: input, shape index: {}]
  %s15 = inlined_call_operand.hbm [shape: f32[2,8,32], index: 15, kind: output, shape index: {}]
  %s16 = sld [smem:[#allocation0]]
  $region70: #{encoder_forward.1} parent=0
    _
  %s18 = ssub.s32 1, %s16
  %s19 = scalar_select 0, %s18, %s16
  $region1: #{encoder_forward.1} parent=0
    #allocation2 [shape = 'u8[8192]{0}', space=vmem, size = 0x2000, scoped, tag = 'output window, operand 0, single buffered']
    #allocation3 [shape = 's32[1]{0}', space=sflag, size = 0x4, scoped, tag = 'scoped memory for encoder_forward.1']
    %20 = vsyncpa [#allocation3], 0
    // Predicated region
    $region2: #{encoder_forward.1} parent=1 // pred_check
      _
    $region3: #{encoder_forward.1} parent=1 // pred_check_branch
      %22 = sbr.rel (0) target = $region5
    $region4: #{encoder_forward.1} parent=1 // pred_region
      _
    $region5: #{encoder_forward.1} parent=1 // pred_fallthru
      _
    // Predicated region
    $region6: #{encoder_forward.1} parent=1 // pred_check
      _
    $region7: #{encoder_forward.1} parent=1 // pred_check_branch
      %24 = sbr.rel (0) target = $region9
    $region8: #{encoder_forward.1} parent=1 // pred_region
      _
    $region9: #{encoder_forward.1} parent=1 // pred_fallthru
      _
    // Predicated region
    $region10: #{encoder_forward.1} parent=1 // pred_check
      _
    $region11: #{encoder_forward.1} parent=1 // pred_check_branch
      %26 = sbr.rel (0) target = $region13
    $region12: #{encoder_forward.1} parent=1 // pred_region
      _
    $region13: #{encoder_forward.1} parent=1 // pred_fallthru
      _
    // Predicated region
    $region14: #{encoder_forward.1} parent=1 // pred_check
      _
    $region15: #{encoder_forward.1} parent=1 // pred_check_branch
      %28 = sbr.rel (0) target = $region17
    $region16: #{encoder_forward.1} parent=1 // pred_region
      _
    $region17: #{encoder_forward.1} parent=1 // pred_fallthru
      _
    // Predicated region
    $region18: #{encoder_forward.1} parent=1 // pred_check
      _
    $region19: #{encoder_forward.1} parent=1 // pred_check_branch
      %30 = sbr.rel (0) target = $region21
    $region20: #{encoder_forward.1} parent=1 // pred_region
      _
    $region21: #{encoder_forward.1} parent=1 // pred_fallthru
      _
    // Predicated region
    $region22: #{encoder_forward.1} parent=1 // pred_check
      _
    $region23: #{encoder_forward.1} parent=1 // pred_check_branch
      %32 = sbr.rel (0) target = $region25
    $region24: #{encoder_forward.1} parent=1 // pred_region
      _
    $region25: #{encoder_forward.1} parent=1 // pred_fallthru
      _
    // Predicated region
    $region26: #{encoder_forward.1} parent=1 // pred_check
      _
    $region27: #{encoder_forward.1} parent=1 // pred_check_branch
      %34 = sbr.rel (0) target = $region29
    $region28: #{encoder_forward.1} parent=1 // pred_region
      _
    $region29: #{encoder_forward.1} parent=1 // pred_fallthru
      _
    // Predicated region
    $region30: #{encoder_forward.1} parent=1 // pred_check
      _
    $region31: #{encoder_forward.1} parent=1 // pred_check_branch
      %36 = sbr.rel (0) target = $region33
    $region32: #{encoder_forward.1} parent=1 // pred_region
      _
    $region33: #{encoder_forward.1} parent=1 // pred_fallthru
      _
    // Predicated region
    $region34: #{encoder_forward.1} parent=1 // pred_check
      _
    $region35: #{encoder_forward.1} parent=1 // pred_check_branch
      %38 = sbr.rel (0) target = $region37
    $region36: #{encoder_forward.1} parent=1 // pred_region
      _
    $region37: #{encoder_forward.1} parent=1 // pred_fallthru
      _
    // Predicated region
    $region38: #{encoder_forward.1} parent=1 // pred_check
      _
    $region39: #{encoder_forward.1} parent=1 // pred_check_branch
      %40 = sbr.rel (0) target = $region41
    $region40: #{encoder_forward.1} parent=1 // pred_region
      _
    $region41: #{encoder_forward.1} parent=1 // pred_fallthru
      _
    // Predicated region
    $region42: #{encoder_forward.1} parent=1 // pred_check
      _
    $region43: #{encoder_forward.1} parent=1 // pred_check_branch
      %42 = sbr.rel (0) target = $region45
    $region44: #{encoder_forward.1} parent=1 // pred_region
      _
    $region45: #{encoder_forward.1} parent=1 // pred_fallthru
      _
    // Predicated region
    $region46: #{encoder_forward.1} parent=1 // pred_check
      _
    $region47: #{encoder_forward.1} parent=1 // pred_check_branch
      %44 = sbr.rel (0) target = $region49
    $region48: #{encoder_forward.1} parent=1 // pred_region
      _
    $region49: #{encoder_forward.1} parent=1 // pred_fallthru
      _
    // Predicated region
    $region50: #{encoder_forward.1} parent=1 // pred_check
      _
    $region51: #{encoder_forward.1} parent=1 // pred_check_branch
      %46 = sbr.rel (0) target = $region53
    $region52: #{encoder_forward.1} parent=1 // pred_region
      _
    $region53: #{encoder_forward.1} parent=1 // pred_fallthru
      _
    // Predicated region
    $region54: #{encoder_forward.1} parent=1 // pred_check
      _
    $region55: #{encoder_forward.1} parent=1 // pred_check_branch
      %48 = sbr.rel (0) target = $region57
    $region56: #{encoder_forward.1} parent=1 // pred_region
      _
    $region57: #{encoder_forward.1} parent=1 // pred_fallthru
      _
    // Predicated region
    $region58: #{encoder_forward.1} parent=1 // pred_check
      _
    $region59: #{encoder_forward.1} parent=1 // pred_check_branch
      %50 = sbr.rel (0) target = $region61
    $region60: #{encoder_forward.1} parent=1 // pred_region
      _
    $region61: #{encoder_forward.1} parent=1 // pred_fallthru
      _
    %v51 = vld [vmem:[%s0] sm:$0xff]
    %v52 = vld [vmem:[%s0 + $0x8] sm:$0xff]
    %v53 = vlaneseq
    %v54 = vand.u32 %v53, 127
    %55 = vset.pattern.permute.xlu0 0
    %56 = vperm.xlu0 %55, %v51
    %v57 = vpop.permute.xlu0 %56
    %58 = vset.pattern.permute.xlu0 0
    %59 = vperm.xlu0 %58, %v52
    %v60 = vpop.permute.xlu0 %59
    %vm61 = vcmp.eq.s32.totalorder %v54, %v57
    %vm62 = vcmp.eq.s32.totalorder %v54, %v60
    %v63 = vsel %vm61, 1, 0
    %v64 = vsel %vm62, 1, 0
    %v65 = vcvt.s32.f32 %v63
    %v66 = vcvt.s32.f32 %v64
    %v67 = vld [vmem:[%s2] sm:$0xff]
    %v68 = vld [vmem:[%s2 + $0x8] sm:$0xff]
    %v69 = vld [vmem:[%s2 + $0x10] sm:$0xff]
    %v70 = vld [vmem:[%s2 + $0x18] sm:$0xff]
    %v71 = vld [vmem:[%s2 + $0x20] sm:$0xff]
    %v72 = vld [vmem:[%s2 + $0x28] sm:$0xff]
    %v73 = vld [vmem:[%s2 + $0x30] sm:$0x3]
    %vm74 = vcmask 408576
    %v76 = vsel %vm74, %v65, 0
    %v79 = vsel %vm74, %v66, 0
    %vm81 = vcmask 1041408
    %v83 = vsel %vm81, %v73, 0
    %85 = vmatprep.subr.mxu0 0.0
    %86 = vmatpush1.msra.mxu0 %v67
    %87 = vmatprep.subr.mxu0 0.0
    %88 = vmatpush1.msra.mxu0 %v68
    %89 = vmatprep.subr.mxu0 0.0
    %90 = vmatpush1.msra.mxu0 %v69
    %91 = vmatprep.subr.mxu0 0.0
    %92 = vmatpush1.msra.mxu0 %v70
    %93 = vmatprep.subr.mxu0 0.0
    %94 = vmatpush1.msra.mxu0 %v71
    %95 = vmatprep.subr.mxu0 0.0
    %96 = vmatpush1.msra.mxu0 %v72
    %97 = vmatprep.subr.mxu0 0.0
    %98 = vmatpush1.msra.mxu0 %v83
    %99 = vmatprep.subr.mxu0 0.0
    %100 = vmatpush1.msra.mxu0 0.0
    %101 = vmatprep.subr.mxu0 0.0
    %102 = vmatpush1.msra.mxu0 0.0
    %103 = vmatprep.subr.mxu0 0.0
    %104 = vmatpush1.msra.mxu0 0.0
    %105 = vmatprep.subr.mxu0 0.0
    %106 = vmatpush1.msra.mxu0 0.0
    %107 = vmatprep.subr.mxu0 0.0
    %108 = vmatpush1.msra.mxu0 0.0
    %109 = vmatprep.subr.mxu0 0.0
    %110 = vmatpush1.msra.mxu0 0.0
    %111 = vmatprep.subr.mxu0 0.0
    %112 = vmatpush1.msra.mxu0 0.0
    %113 = vmatprep.subr.mxu0 0.0
    %114 = vmatpush1.msra.mxu0 0.0
    %115 = vmatprep.subr.mxu0 0.0
    %116 = vmatpush1.msra.mxu0 0.0
    %117 = vmatprep.subr.mxu0 0.0
    %118 = vmatpush1.msra.mxu0 0.0
    %119 = vmatprep.subr.mxu0 0.0
    %120 = vmatpush1.msra.mxu0 0.0
    %121 = vmatprep.subr.mxu0 0.0
    %122 = vmatpush1.msra.mxu0 0.0
    %123 = vmatprep.subr.mxu0 0.0
    %124 = vmatpush1.msra.mxu0 0.0
    %125 = vmatprep.subr.mxu0 0.0
    %126 = vmatpush1.msra.mxu0 0.0
    %127 = vmatprep.subr.mxu0 0.0
    %128 = vmatpush1.msra.mxu0 0.0
    %129 = vmatprep.subr.mxu0 0.0
    %130 = vmatpush1.msra.mxu0 0.0
    %131 = vmatprep.subr.mxu0 0.0
    %132 = vmatpush1.msra.mxu0 0.0
    %133 = vmatprep.subr.mxu0 0.0
    %134 = vmatpush1.msra.mxu0 0.0
    %135 = vmatprep.subr.mxu0 0.0
    %136 = vmatpush1.msra.mxu0 0.0
    %137 = vmatprep.subr.mxu0 0.0
    %138 = vmatpush1.msra.mxu0 0.0
    %139 = vmatprep.subr.mxu0 0.0
    %140 = vmatpush1.msra.mxu0 0.0
    %141 = vmatprep.subr.mxu0 0.0
    %142 = vmatpush1.msra.mxu0 0.0
    %143 = vmatprep.subr.mxu0 0.0
    %144 = vmatpush1.msra.mxu0 0.0
    %145 = vmatprep.subr.mxu0 0.0
    %146 = vmatpush1.msra.mxu0 0.0
    %147 = vmatprep.subr.mxu0 0.0
    %148 = vmatpush1.msra.mxu0 0.0
    %149 = vmatprep.mubr.f32.mxu0 0.0
    %150 = vmatmul.mubr.f32.gmra.mrb[0].mxu0 %v76
    %v151 = vpop.f32.mrb[0].mxu0
    %v152 = vadd.f32 0.0, %v151
    %v153 = vpop.f32.mrb[0].mxu0
    %154 = vmatprep.mubr.f32.mxu0 0.0
    %155 = vmatmul.mubr.f32.gmra.mrb[0].mxu0 %v79
    %v156 = vpop.f32.mrb[0].mxu0
    %v157 = vadd.f32 0.0, %v156
    %v158 = vpop.f32.mrb[0].mxu0
    %159 = vdwg.mxu0
    %v160 = vld [vmem:[%s3] sm:$0xff]
    %v161 = vadd.f32 %v152, %v160
    %v162 = vadd.f32 %v157, %v160
    %v163 = vld [vmem:[%s1] sm:$0x1]
    %v164 = vld [vmem:[%s1 + $0x1] sm:$0x1]
    %vm165 = vcmp.eq.s32.totalorder %v163, 0
    %vm166 = vcmp.eq.s32.totalorder %v164, 0
    %v167 = vsel %vm165, -1.767767e+19, 0.0
    %v168 = vsel %vm166, -1.767767e+19, 0.0
    %v171 = vlaneseq
    %v172 = vshrl.u32 %v171, 7
    %v173 = vsub.s32 0, %v172
    %v174 = vrot.slane %v167, %v173
    %v175 = vlaneseq
    %v176 = vshrl.u32 %v175, 7
    %v177 = vsub.s32 0, %v176
    %v178 = vrot.slane %v168, %v177
    %v181 = vld [vmem:[%s4] sm:$0xff]
    %v182 = vld [vmem:[%s4 + $0x8] sm:$0xff]
    %v183 = vld [vmem:[%s4 + $0x10] sm:$0xff]
    %v184 = vld [vmem:[%s4 + $0x18] sm:$0xff]
    %vm185 = vcmask 261120
    %v187 = vsel %vm185, %v161, 0
    %v190 = vsel %vm185, %v162, 0
    %192 = vmatprep.subr.mxu0 0.0
    %193 = vmatpush1.msra.mxu0 %v181
    %194 = vmatprep.subr.mxu0 0.0
    %195 = vmatpush1.msra.mxu0 %v182
    %196 = vmatprep.subr.mxu0 0.0
    %197 = vmatpush1.msra.mxu0 %v183
    %198 = vmatprep.subr.mxu0 0.0
    %199 = vmatpush1.msra.mxu0 %v184
    %200 = vmatprep.subr.mxu0 0.0
    %201 = vmatpush1.msra.mxu0 0.0
    %202 = vmatprep.subr.mxu0 0.0
    %203 = vmatpush1.msra.mxu0 0.0
    %204 = vmatprep.subr.mxu0 0.0
    %205 = vmatpush1.msra.mxu0 0.0
    %206 = vmatprep.subr.mxu0 0.0
    %207 = vmatpush1.msra.mxu0 0.0
    %208 = vmatprep.subr.mxu0 0.0
    %209 = vmatpush1.msra.mxu0 0.0
    %210 = vmatprep.subr.mxu0 0.0
    %211 = vmatpush1.msra.mxu0 0.0
    %212 = vmatprep.subr.mxu0 0.0
    %213 = vmatpush1.msra.mxu0 0.0
    %214 = vmatprep.subr.mxu0 0.0
    %215 = vmatpush1.msra.mxu0 0.0
    %216 = vmatprep.subr.mxu0 0.0
    %217 = vmatpush1.msra.mxu0 0.0
    %218 = vmatprep.subr.mxu0 0.0
    %219 = vmatpush1.msra.mxu0 0.0
    %220 = vmatprep.subr.mxu0 0.0
    %221 = vmatpush1.msra.mxu0 0.0
    %222 = vmatprep.subr.mxu0 0.0
    %223 = vmatpush1.msra.mxu0 0.0
    %224 = vmatprep.subr.mxu0 0.0
    %225 = vmatpush1.msra.mxu0 0.0
    %226 = vmatprep.subr.mxu0 0.0
    %227 = vmatpush1.msra.mxu0 0.0
    %228 = vmatprep.subr.mxu0 0.0
    %229 = vmatpush1.msra.mxu0 0.0
    %230 = vmatprep.subr.mxu0 0.0
    %231 = vmatpush1.msra.mxu0 0.0
    %232 = vmatprep.subr.mxu0 0.0
    %233 = vmatpush1.msra.mxu0 0.0
    %234 = vmatprep.subr.mxu0 0.0
    %235 = vmatpush1.msra.mxu0 0.0
    %236 = vmatprep.subr.mxu0 0.0
    %237 = vmatpush1.msra.mxu0 0.0
    %238 = vmatprep.subr.mxu0 0.0
    %239 = vmatpush1.msra.mxu0 0.0
    %240 = vmatprep.subr.mxu0 0.0
    %241 = vmatpush1.msra.mxu0 0.0
    %242 = vmatprep.subr.mxu0 0.0
    %243 = vmatpush1.msra.mxu0 0.0
    %244 = vmatprep.subr.mxu0 0.0
    %245 = vmatpush1.msra.mxu0 0.0
    %246 = vmatprep.subr.mxu0 0.0
    %247 = vmatpush1.msra.mxu0 0.0
    %248 = vmatprep.subr.mxu0 0.0
    %249 = vmatpush1.msra.mxu0 0.0
    %250 = vmatprep.subr.mxu0 0.0
    %251 = vmatpush1.msra.mxu0 0.0
    %252 = vmatprep.subr.mxu0 0.0
    %253 = vmatpush1.msra.mxu0 0.0
    %254 = vmatprep.subr.mxu0 0.0
    %255 = vmatpush1.msra.mxu0 0.0
    %256 = vmatprep.mubr.f32.mxu0 0.0
    %257 = vmatmul.mubr.f32.gmra.mrb[0].mxu0 %v187
    %v258 = vpop.f32.mrb[0].mxu0
    %v259 = vadd.f32 0.0, %v258
    %v260 = vpop.f32.mrb[0].mxu0
    %261 = vmatprep.mubr.f32.mxu0 0.0
    %262 = vmatmul.mubr.f32.gmra.mrb[0].mxu0 %v190
    %v263 = vpop.f32.mrb[0].mxu0
    %v264 = vadd.f32 0.0, %v263
    %v265 = vpop.f32.mrb[0].mxu0
    %266 = vdwg.mxu0
    %268 = vrot.lane.b32.xlu0 %v259, 96
    %v269 = vpop.permute.xlu0 %268
    %vm270 = vcmask 64512
    %v271 = vsel %vm270, %v259, 0
    %v273 = vsel %vm270, %v269, 0
    %275 = vmatprep.subr.mxu0 0.0
    %276 = vmatpush1.xpose.msra.mxu0 %v273
    %277 = vmatprep.subr.mxu0 0.0
    %278 = vmatpush1.xpose.msra.mxu0 0.0
    %279 = vmatprep.subr.mxu0 0.0
    %280 = vmatpush1.xpose.msra.mxu0 0.0
    %281 = vmatprep.subr.mxu0 0.0
    %282 = vmatpush1.xpose.msra.mxu0 0.0
    %283 = vmatprep.subr.mxu0 0.0
    %284 = vmatpush1.xpose.msra.mxu0 0.0
    %285 = vmatprep.subr.mxu0 0.0
    %286 = vmatpush1.xpose.msra.mxu0 0.0
    %287 = vmatprep.subr.mxu0 0.0
    %288 = vmatpush1.xpose.msra.mxu0 0.0
    %289 = vmatprep.subr.mxu0 0.0
    %290 = vmatpush1.xpose.msra.mxu0 0.0
    %291 = vmatprep.subr.mxu0 0.0
    %292 = vmatpush1.xpose.msra.mxu0 0.0
    %293 = vmatprep.subr.mxu0 0.0
    %294 = vmatpush1.xpose.msra.mxu0 0.0
    %295 = vmatprep.subr.mxu0 0.0
    %296 = vmatpush1.xpose.msra.mxu0 0.0
    %297 = vmatprep.subr.mxu0 0.0
    %298 = vmatpush1.xpose.msra.mxu0 0.0
    %299 = vmatprep.subr.mxu0 0.0
    %300 = vmatpush1.xpose.msra.mxu0 0.0
    %301 = vmatprep.subr.mxu0 0.0
    %302 = vmatpush1.xpose.msra.mxu0 0.0
    %303 = vmatprep.subr.mxu0 0.0
    %304 = vmatpush1.xpose.msra.mxu0 0.0
    %305 = vmatprep.subr.mxu0 0.0
    %306 = vmatpush1.xpose.msra.mxu0 0.0
    %307 = vmatprep.subr.mxu0 0.0
    %308 = vmatpush1.xpose.msra.mxu0 0.0
    %309 = vmatprep.subr.mxu0 0.0
    %310 = vmatpush1.xpose.msra.mxu0 0.0
    %311 = vmatprep.subr.mxu0 0.0
    %312 = vmatpush1.xpose.msra.mxu0 0.0
    %313 = vmatprep.subr.mxu0 0.0
    %314 = vmatpush1.xpose.msra.mxu0 0.0
    %315 = vmatprep.subr.mxu0 0.0
    %316 = vmatpush1.xpose.msra.mxu0 0.0
    %317 = vmatprep.subr.mxu0 0.0
    %318 = vmatpush1.xpose.msra.mxu0 0.0
    %319 = vmatprep.subr.mxu0 0.0
    %320 = vmatpush1.xpose.msra.mxu0 0.0
    %321 = vmatprep.subr.mxu0 0.0
    %322 = vmatpush1.xpose.msra.mxu0 0.0
    %323 = vmatprep.subr.mxu0 0.0
    %324 = vmatpush1.xpose.msra.mxu0 0.0
    %325 = vmatprep.subr.mxu0 0.0
    %326 = vmatpush1.xpose.msra.mxu0 0.0
    %327 = vmatprep.subr.mxu0 0.0
    %328 = vmatpush1.xpose.msra.mxu0 0.0
    %329 = vmatprep.subr.mxu0 0.0
    %330 = vmatpush1.xpose.msra.mxu0 0.0
    %331 = vmatprep.subr.mxu0 0.0
    %332 = vmatpush1.xpose.msra.mxu0 0.0
    %333 = vmatprep.subr.mxu0 0.0
    %334 = vmatpush1.xpose.msra.mxu0 0.0
    %335 = vmatprep.subr.mxu0 0.0
    %336 = vmatpush1.xpose.msra.mxu0 0.0
    %337 = vmatprep.subr.mxu0 0.0
    %338 = vmatpush1.xpose.msra.mxu0 0.0
    %339 = vmatprep.mubr.f32.mxu0 0.0
    %340 = vmatmul.mubr.f32.gmra.mrb[0].mxu0 %v271
    %v341 = vpop.f32.mrb[0].mxu0
    %v342 = vadd.f32 %v174, %v341
    %v343 = vpop.f32.mrb[0].mxu0
    %344 = vdwg.mxu0
    %346 = vrot.lane.b32.xlu0 %v264, 96
    %v347 = vpop.permute.xlu0 %346
    %v348 = vsel %vm270, %v264, 0
    %v350 = vsel %vm270, %v347, 0
    %352 = vmatprep.subr.mxu0 0.0
    %353 = vmatpush1.xpose.msra.mxu0 %v350
    %354 = vmatprep.subr.mxu0 0.0
    %355 = vmatpush1.xpose.msra.mxu0 0.0
    %356 = vmatprep.subr.mxu0 0.0
    %357 = vmatpush1.xpose.msra.mxu0 0.0
    %358 = vmatprep.subr.mxu0 0.0
    %359 = vmatpush1.xpose.msra.mxu0 0.0
    %360 = vmatprep.subr.mxu0 0.0
    %361 = vmatpush1.xpose.msra.mxu0 0.0
    %362 = vmatprep.subr.mxu0 0.0
    %363 = vmatpush1.xpose.msra.mxu0 0.0
    %364 = vmatprep.subr.mxu0 0.0
    %365 = vmatpush1.xpose.msra.mxu0 0.0
    %366 = vmatprep.subr.mxu0 0.0
    %367 = vmatpush1.xpose.msra.mxu0 0.0
    %368 = vmatprep.subr.mxu0 0.0
    %369 = vmatpush1.xpose.msra.mxu0 0.0
    %370 = vmatprep.subr.mxu0 0.0
    %371 = vmatpush1.xpose.msra.mxu0 0.0
    %372 = vmatprep.subr.mxu0 0.0
    %373 = vmatpush1.xpose.msra.mxu0 0.0
    %374 = vmatprep.subr.mxu0 0.0
    %375 = vmatpush1.xpose.msra.mxu0 0.0
    %376 = vmatprep.subr.mxu0 0.0
    %377 = vmatpush1.xpose.msra.mxu0 0.0
    %378 = vmatprep.subr.mxu0 0.0
    %379 = vmatpush1.xpose.msra.mxu0 0.0
    %380 = vmatprep.subr.mxu0 0.0
    %381 = vmatpush1.xpose.msra.mxu0 0.0
    %382 = vmatprep.subr.mxu0 0.0
    %383 = vmatpush1.xpose.msra.mxu0 0.0
    %384 = vmatprep.subr.mxu0 0.0
    %385 = vmatpush1.xpose.msra.mxu0 0.0
    %386 = vmatprep.subr.mxu0 0.0
    %387 = vmatpush1.xpose.msra.mxu0 0.0
    %388 = vmatprep.subr.mxu0 0.0
    %389 = vmatpush1.xpose.msra.mxu0 0.0
    %390 = vmatprep.subr.mxu0 0.0
    %391 = vmatpush1.xpose.msra.mxu0 0.0
    %392 = vmatprep.subr.mxu0 0.0
    %393 = vmatpush1.xpose.msra.mxu0 0.0
    %394 = vmatprep.subr.mxu0 0.0
    %395 = vmatpush1.xpose.msra.mxu0 0.0
    %396 = vmatprep.subr.mxu0 0.0
    %397 = vmatpush1.xpose.msra.mxu0 0.0
    %398 = vmatprep.subr.mxu0 0.0
    %399 = vmatpush1.xpose.msra.mxu0 0.0
    %400 = vmatprep.subr.mxu0 0.0
    %401 = vmatpush1.xpose.msra.mxu0 0.0
    %402 = vmatprep.subr.mxu0 0.0
    %403 = vmatpush1.xpose.msra.mxu0 0.0
    %404 = vmatprep.subr.mxu0 0.0
    %405 = vmatpush1.xpose.msra.mxu0 0.0
    %406 = vmatprep.subr.mxu0 0.0
    %407 = vmatpush1.xpose.msra.mxu0 0.0
    %408 = vmatprep.subr.mxu0 0.0
    %409 = vmatpush1.xpose.msra.mxu0 0.0
    %410 = vmatprep.subr.mxu0 0.0
    %411 = vmatpush1.xpose.msra.mxu0 0.0
    %412 = vmatprep.subr.mxu0 0.0
    %413 = vmatpush1.xpose.msra.mxu0 0.0
    %414 = vmatprep.subr.mxu0 0.0
    %415 = vmatpush1.xpose.msra.mxu0 0.0
    %416 = vmatprep.mubr.f32.mxu0 0.0
    %417 = vmatmul.mubr.f32.gmra.mrb[0].mxu0 %v348
    %v418 = vpop.f32.mrb[0].mxu0
    %v419 = vadd.f32 %v178, %v418
    %v420 = vpop.f32.mrb[0].mxu0
    %421 = vdwg.mxu0
    %v422 = vsel %vm270, %v342, -inf
    %423 = vmax.xlane.f32.xlu0 %v422
    %v424 = vpop.xlane.xlu0 %423
    %v425 = vsel %vm270, %v419, -inf
    %426 = vmax.xlane.f32.xlu0 %v425
    %v427 = vpop.xlane.xlu0 %426
    %v428 = vsub.f32 %v342, %v424
    %v429 = vsub.f32 %v419, %v427
    %v430 = vmul.f32 %v428, 1.442695
    %v431 = vpow.pop %v430
    %v432 = vmul.f32 %v429, 1.442695
    %v433 = vpow.pop %v432
    %v434 = vsel %vm270, %v431, 0.0
    %435 = vadd.xlane.f32.xlu0 %v434
    %v436 = vpop.xlane.xlu0 %435
    %v437 = vsel %vm270, %v433, 0.0
    %438 = vadd.xlane.f32.xlu0 %v437
    %v439 = vpop.xlane.xlu0 %438
    %v440 = vrcp.pop %v436
    %v441 = vrcp.pop %v439
    %v442 = vmul.f32 %v436, %v440
    %v443 = vmul.f32 %v439, %v441
    %v444 = vsub.f32 2.0, %v442
    %v445 = vsub.f32 2.0, %v443
    %v446 = vmul.f32 %v440, %v444
    %v447 = vmul.f32 %v441, %v445
    %448 = vrot.lane.b32.xlu0 %v259, 64
    %v449 = vpop.permute.xlu0 %448
    %v452 = vsel %vm270, %v431, 0
    %454 = vmatprep.subr.mxu0 0.0
    %455 = vmatpush1.msra.mxu0 %v449
    %456 = vmatprep.subr.mxu0 0.0
    %457 = vmatpush1.msra.mxu0 0.0
    %458 = vmatprep.subr.mxu0 0.0
    %459 = vmatpush1.msra.mxu0 0.0
    %460 = vmatprep.subr.mxu0 0.0
    %461 = vmatpush1.msra.mxu0 0.0
    %462 = vmatprep.subr.mxu0 0.0
    %463 = vmatpush1.msra.mxu0 0.0
    %464 = vmatprep.subr.mxu0 0.0
    %465 = vmatpush1.msra.mxu0 0.0
    %466 = vmatprep.subr.mxu0 0.0
    %467 = vmatpush1.msra.mxu0 0.0
    %468 = vmatprep.subr.mxu0 0.0
    %469 = vmatpush1.msra.mxu0 0.0
    %470 = vmatprep.subr.mxu0 0.0
    %471 = vmatpush1.msra.mxu0 0.0
    %472 = vmatprep.subr.mxu0 0.0
    %473 = vmatpush1.msra.mxu0 0.0
    %474 = vmatprep.subr.mxu0 0.0
    %475 = vmatpush1.msra.mxu0 0.0
    %476 = vmatprep.subr.mxu0 0.0
    %477 = vmatpush1.msra.mxu0 0.0
    %478 = vmatprep.subr.mxu0 0.0
    %479 = vmatpush1.msra.mxu0 0.0
    %480 = vmatprep.subr.mxu0 0.0
    %481 = vmatpush1.msra.mxu0 0.0
    %482 = vmatprep.subr.mxu0 0.0
    %483 = vmatpush1.msra.mxu0 0.0
    %484 = vmatprep.subr.mxu0 0.0
    %485 = vmatpush1.msra.mxu0 0.0
    %486 = vmatprep.subr.mxu0 0.0
    %487 = vmatpush1.msra.mxu0 0.0
    %488 = vmatprep.subr.mxu0 0.0
    %489 = vmatpush1.msra.mxu0 0.0
    %490 = vmatprep.subr.mxu0 0.0
    %491 = vmatpush1.msra.mxu0 0.0
    %492 = vmatprep.subr.mxu0 0.0
    %493 = vmatpush1.msra.mxu0 0.0
    %494 = vmatprep.subr.mxu0 0.0
    %495 = vmatpush1.msra.mxu0 0.0
    %496 = vmatprep.subr.mxu0 0.0
    %497 = vmatpush1.msra.mxu0 0.0
    %498 = vmatprep.subr.mxu0 0.0
    %499 = vmatpush1.msra.mxu0 0.0
    %500 = vmatprep.subr.mxu0 0.0
    %501 = vmatpush1.msra.mxu0 0.0
    %502 = vmatprep.subr.mxu0 0.0
    %503 = vmatpush1.msra.mxu0 0.0
    %504 = vmatprep.subr.mxu0 0.0
    %505 = vmatpush1.msra.mxu0 0.0
    %506 = vmatprep.subr.mxu0 0.0
    %507 = vmatpush1.msra.mxu0 0.0
    %508 = vmatprep.subr.mxu0 0.0
    %509 = vmatpush1.msra.mxu0 0.0
    %510 = vmatprep.subr.mxu0 0.0
    %511 = vmatpush1.msra.mxu0 0.0
    %512 = vmatprep.subr.mxu0 0.0
    %513 = vmatpush1.msra.mxu0 0.0
    %514 = vmatprep.subr.mxu0 0.0
    %515 = vmatpush1.msra.mxu0 0.0
    %516 = vmatprep.subr.mxu0 0.0
    %517 = vmatpush1.msra.mxu0 0.0
    %518 = vmatprep.mubr.f32.mxu0 0.0
    %519 = vmatmul.mubr.f32.gmra.mrb[0].mxu0 %v452
    %v520 = vpop.f32.mrb[0].mxu0
    %v521 = vadd.f32 0.0, %v520
    %v522 = vpop.f32.mrb[0].mxu0
    %523 = vdwg.mxu0
    %524 = vrot.lane.b32.xlu0 %v264, 64
    %v525 = vpop.permute.xlu0 %524
    %v528 = vsel %vm270, %v433, 0
    %530 = vmatprep.subr.mxu0 0.0
    %531 = vmatpush1.msra.mxu0 %v525
    %532 = vmatprep.subr.mxu0 0.0
    %533 = vmatpush1.msra.mxu0 0.0
    %534 = vmatprep.subr.mxu0 0.0
    %535 = vmatpush1.msra.mxu0 0.0
    %536 = vmatprep.subr.mxu0 0.0
    %537 = vmatpush1.msra.mxu0 0.0
    %538 = vmatprep.subr.mxu0 0.0
    %539 = vmatpush1.msra.mxu0 0.0
    %540 = vmatprep.subr.mxu0 0.0
    %541 = vmatpush1.msra.mxu0 0.0
    %542 = vmatprep.subr.mxu0 0.0
    %543 = vmatpush1.msra.mxu0 0.0
    %544 = vmatprep.subr.mxu0 0.0
    %545 = vmatpush1.msra.mxu0 0.0
    %546 = vmatprep.subr.mxu0 0.0
    %547 = vmatpush1.msra.mxu0 0.0
    %548 = vmatprep.subr.mxu0 0.0
    %549 = vmatpush1.msra.mxu0 0.0
    %550 = vmatprep.subr.mxu0 0.0
    %551 = vmatpush1.msra.mxu0 0.0
    %552 = vmatprep.subr.mxu0 0.0
    %553 = vmatpush1.msra.mxu0 0.0
    %554 = vmatprep.subr.mxu0 0.0
    %555 = vmatpush1.msra.mxu0 0.0
    %556 = vmatprep.subr.mxu0 0.0
    %557 = vmatpush1.msra.mxu0 0.0
    %558 = vmatprep.subr.mxu0 0.0
    %559 = vmatpush1.msra.mxu0 0.0
    %560 = vmatprep.subr.mxu0 0.0
    %561 = vmatpush1.msra.mxu0 0.0
    %562 = vmatprep.subr.mxu0 0.0
    %563 = vmatpush1.msra.mxu0 0.0
    %564 = vmatprep.subr.mxu0 0.0
    %565 = vmatpush1.msra.mxu0 0.0
    %566 = vmatprep.subr.mxu0 0.0
    %567 = vmatpush1.msra.mxu0 0.0
    %568 = vmatprep.subr.mxu0 0.0
    %569 = vmatpush1.msra.mxu0 0.0
    %570 = vmatprep.subr.mxu0 0.0
    %571 = vmatpush1.msra.mxu0 0.0
    %572 = vmatprep.subr.mxu0 0.0
    %573 = vmatpush1.msra.mxu0 0.0
    %574 = vmatprep.subr.mxu0 0.0
    %575 = vmatpush1.msra.mxu0 0.0
    %576 = vmatprep.subr.mxu0 0.0
    %577 = vmatpush1.msra.mxu0 0.0
    %578 = vmatprep.subr.mxu0 0.0
    %579 = vmatpush1.msra.mxu0 0.0
    %580 = vmatprep.subr.mxu0 0.0
    %581 = vmatpush1.msra.mxu0 0.0
    %582 = vmatprep.subr.mxu0 0.0
    %583 = vmatpush1.msra.mxu0 0.0
    %584 = vmatprep.subr.mxu0 0.0
    %585 = vmatpush1.msra.mxu0 0.0
    %586 = vmatprep.subr.mxu0 0.0
    %587 = vmatpush1.msra.mxu0 0.0
    %588 = vmatprep.subr.mxu0 0.0
    %589 = vmatpush1.msra.mxu0 0.0
    %590 = vmatprep.subr.mxu0 0.0
    %591 = vmatpush1.msra.mxu0 0.0
    %592 = vmatprep.subr.mxu0 0.0
    %593 = vmatpush1.msra.mxu0 0.0
    %594 = vmatprep.mubr.f32.mxu0 0.0
    %595 = vmatmul.mubr.f32.gmra.mrb[0].mxu0 %v528
    %v596 = vpop.f32.mrb[0].mxu0
    %v597 = vadd.f32 0.0, %v596
    %v598 = vpop.f32.mrb[0].mxu0
    %599 = vdwg.mxu0
    %v600 = vmul.f32 %v521, %v446
    %v601 = vmul.f32 %v597, %v447
    %602 = vrot.lane.b32.xlu0 %v259, 120
    %v603 = vpop.permute.xlu0 %602
    %604 = vrot.lane.b32.xlu0 %v259, 88
    %v605 = vpop.permute.xlu0 %604
    %v606 = vsel %vm270, %v603, 0
    %v608 = vsel %vm270, %v605, 0
    %610 = vmatprep.subr.mxu0 0.0
    %611 = vmatpush1.xpose.msra.mxu0 %v608
    %612 = vmatprep.subr.mxu0 0.0
    %613 = vmatpush1.xpose.msra.mxu0 0.0
    %614 = vmatprep.subr.mxu0 0.0
    %615 = vmatpush1.xpose.msra.mxu0 0.0
    %616 = vmatprep.subr.mxu0 0.0
    %617 = vmatpush1.xpose.msra.mxu0 0.0
    %618 = vmatprep.subr.mxu0 0.0
    %619 = vmatpush1.xpose.msra.mxu0 0.0
    %620 = vmatprep.subr.mxu0 0.0
    %621 = vmatpush1.xpose.msra.mxu0 0.0
    %622 = vmatprep.subr.mxu0 0.0
    %623 = vmatpush1.xpose.msra.mxu0 0.0
    %624 = vmatprep.subr.mxu0 0.0
    %625 = vmatpush1.xpose.msra.mxu0 0.0
    %626 = vmatprep.subr.mxu0 0.0
    %627 = vmatpush1.xpose.msra.mxu0 0.0
    %628 = vmatprep.subr.mxu0 0.0
    %629 = vmatpush1.xpose.msra.mxu0 0.0
    %630 = vmatprep.subr.mxu0 0.0
    %631 = vmatpush1.xpose.msra.mxu0 0.0
    %632 = vmatprep.subr.mxu0 0.0
    %633 = vmatpush1.xpose.msra.mxu0 0.0
    %634 = vmatprep.subr.mxu0 0.0
    %635 = vmatpush1.xpose.msra.mxu0 0.0
    %636 = vmatprep.subr.mxu0 0.0
    %637 = vmatpush1.xpose.msra.mxu0 0.0
    %638 = vmatprep.subr.mxu0 0.0
    %639 = vmatpush1.xpose.msra.mxu0 0.0
    %640 = vmatprep.subr.mxu0 0.0
    %641 = vmatpush1.xpose.msra.mxu0 0.0
    %642 = vmatprep.subr.mxu0 0.0
    %643 = vmatpush1.xpose.msra.mxu0 0.0
    %644 = vmatprep.subr.mxu0 0.0
    %645 = vmatpush1.xpose.msra.mxu0 0.0
    %646 = vmatprep.subr.mxu0 0.0
    %647 = vmatpush1.xpose.msra.mxu0 0.0
    %648 = vmatprep.subr.mxu0 0.0
    %649 = vmatpush1.xpose.msra.mxu0 0.0
    %650 = vmatprep.subr.mxu0 0.0
    %651 = vmatpush1.xpose.msra.mxu0 0.0
    %652 = vmatprep.subr.mxu0 0.0
    %653 = vmatpush1.xpose.msra.mxu0 0.0
    %654 = vmatprep.subr.mxu0 0.0
    %655 = vmatpush1.xpose.msra.mxu0 0.0
    %656 = vmatprep.subr.mxu0 0.0
    %657 = vmatpush1.xpose.msra.mxu0 0.0
    %658 = vmatprep.subr.mxu0 0.0
    %659 = vmatpush1.xpose.msra.mxu0 0.0
    %660 = vmatprep.subr.mxu0 0.0
    %661 = vmatpush1.xpose.msra.mxu0 0.0
    %662 = vmatprep.subr.mxu0 0.0
    %663 = vmatpush1.xpose.msra.mxu0 0.0
    %664 = vmatprep.subr.mxu0 0.0
    %665 = vmatpush1.xpose.msra.mxu0 0.0
    %666 = vmatprep.subr.mxu0 0.0
    %667 = vmatpush1.xpose.msra.mxu0 0.0
    %668 = vmatprep.subr.mxu0 0.0
    %669 = vmatpush1.xpose.msra.mxu0 0.0
    %670 = vmatprep.subr.mxu0 0.0
    %671 = vmatpush1.xpose.msra.mxu0 0.0
    %672 = vmatprep.subr.mxu0 0.0
    %673 = vmatpush1.xpose.msra.mxu0 0.0
    %674 = vmatprep.mubr.f32.mxu0 0.0
    %675 = vmatmul.mubr.f32.gmra.mrb[0].mxu0 %v606
    %v676 = vpop.f32.mrb[0].mxu0
    %v677 = vadd.f32 %v174, %v676
    %v678 = vpop.f32.mrb[0].mxu0
    %679 = vdwg.mxu0
    %680 = vrot.lane.b32.xlu0 %v264, 120
    %v681 = vpop.permute.xlu0 %680
    %682 = vrot.lane.b32.xlu0 %v264, 88
    %v683 = vpop.permute.xlu0 %682
    %v684 = vsel %vm270, %v681, 0
    %v686 = vsel %vm270, %v683, 0
    %688 = vmatprep.subr.mxu0 0.0
    %689 = vmatpush1.xpose.msra.mxu0 %v686
    %690 = vmatprep.subr.mxu0 0.0
    %691 = vmatpush1.xpose.msra.mxu0 0.0
    %692 = vmatprep.subr.mxu0 0.0
    %693 = vmatpush1.xpose.msra.mxu0 0.0
    %694 = vmatprep.subr.mxu0 0.0
    %695 = vmatpush1.xpose.msra.mxu0 0.0
    %696 = vmatprep.subr.mxu0 0.0
    %697 = vmatpush1.xpose.msra.mxu0 0.0
    %698 = vmatprep.subr.mxu0 0.0
    %699 = vmatpush1.xpose.msra.mxu0 0.0
    %700 = vmatprep.subr.mxu0 0.0
    %701 = vmatpush1.xpose.msra.mxu0 0.0
    %702 = vmatprep.subr.mxu0 0.0
    %703 = vmatpush1.xpose.msra.mxu0 0.0
    %704 = vmatprep.subr.mxu0 0.0
    %705 = vmatpush1.xpose.msra.mxu0 0.0
    %706 = vmatprep.subr.mxu0 0.0
    %707 = vmatpush1.xpose.msra.mxu0 0.0
    %708 = vmatprep.subr.mxu0 0.0
    %709 = vmatpush1.xpose.msra.mxu0 0.0
    %710 = vmatprep.subr.mxu0 0.0
    %711 = vmatpush1.xpose.msra.mxu0 0.0
    %712 = vmatprep.subr.mxu0 0.0
    %713 = vmatpush1.xpose.msra.mxu0 0.0
    %714 = vmatprep.subr.mxu0 0.0
    %715 = vmatpush1.xpose.msra.mxu0 0.0
    %716 = vmatprep.subr.mxu0 0.0
    %717 = vmatpush1.xpose.msra.mxu0 0.0
    %718 = vmatprep.subr.mxu0 0.0
    %719 = vmatpush1.xpose.msra.mxu0 0.0
    %720 = vmatprep.subr.mxu0 0.0
    %721 = vmatpush1.xpose.msra.mxu0 0.0
    %722 = vmatprep.subr.mxu0 0.0
    %723 = vmatpush1.xpose.msra.mxu0 0.0
    %724 = vmatprep.subr.mxu0 0.0
    %725 = vmatpush1.xpose.msra.mxu0 0.0
    %726 = vmatprep.subr.mxu0 0.0
    %727 = vmatpush1.xpose.msra.mxu0 0.0
    %728 = vmatprep.subr.mxu0 0.0
    %729 = vmatpush1.xpose.msra.mxu0 0.0
    %730 = vmatprep.subr.mxu0 0.0
    %731 = vmatpush1.xpose.msra.mxu0 0.0
    %732 = vmatprep.subr.mxu0 0.0
    %733 = vmatpush1.xpose.msra.mxu0 0.0
    %734 = vmatprep.subr.mxu0 0.0
    %735 = vmatpush1.xpose.msra.mxu0 0.0
    %736 = vmatprep.subr.mxu0 0.0
    %737 = vmatpush1.xpose.msra.mxu0 0.0
    %738 = vmatprep.subr.mxu0 0.0
    %739 = vmatpush1.xpose.msra.mxu0 0.0
    %740 = vmatprep.subr.mxu0 0.0
    %741 = vmatpush1.xpose.msra.mxu0 0.0
    %742 = vmatprep.subr.mxu0 0.0
    %743 = vmatpush1.xpose.msra.mxu0 0.0
    %744 = vmatprep.subr.mxu0 0.0
    %745 = vmatpush1.xpose.msra.mxu0 0.0
    %746 = vmatprep.subr.mxu0 0.0
    %747 = vmatpush1.xpose.msra.mxu0 0.0
    %748 = vmatprep.subr.mxu0 0.0
    %749 = vmatpush1.xpose.msra.mxu0 0.0
    %750 = vmatprep.subr.mxu0 0.0
    %751 = vmatpush1.xpose.msra.mxu0 0.0
    %752 = vmatprep.mubr.f32.mxu0 0.0
    %753 = vmatmul.mubr.f32.gmra.mrb[0].mxu0 %v684
    %v754 = vpop.f32.mrb[0].mxu0
    %v755 = vadd.f32 %v178, %v754
    %v756 = vpop.f32.mrb[0].mxu0
    %757 = vdwg.mxu0
    %v758 = vsel %vm270, %v677, -inf
    %759 = vmax.xlane.f32.xlu0 %v758
    %v760 = vpop.xlane.xlu0 %759
    %v761 = vsel %vm270, %v755, -inf
    %762 = vmax.xlane.f32.xlu0 %v761
    %v763 = vpop.xlane.xlu0 %762
    %v764 = vsub.f32 %v677, %v760
    %v765 = vsub.f32 %v755, %v763
    %v766 = vmul.f32 %v764, 1.442695
    %v767 = vpow.pop %v766
    %v768 = vmul.f32 %v765, 1.442695
    %v769 = vpow.pop %v768
    %v770 = vsel %vm270, %v767, 0.0
    %771 = vadd.xlane.f32.xlu0 %v770
    %v772 = vpop.xlane.xlu0 %771
    %v773 = vsel %vm270, %v769, 0.0
    %774 = vadd.xlane.f32.xlu0 %v773
    %v775 = vpop.xlane.xlu0 %774
    %v776 = vrcp.pop %v772
    %v777 = vrcp.pop %v775
    %v778 = vmul.f32 %v772, %v776
    %v779 = vmul.f32 %v775, %v777
    %v780 = vsub.f32 2.0, %v778
    %v781 = vsub.f32 2.0, %v779
    %v782 = vmul.f32 %v776, %v780
    %v783 = vmul.f32 %v777, %v781
    %784 = vrot.lane.b32.xlu0 %v259, 56
    %v785 = vpop.permute.xlu0 %784
    %v788 = vsel %vm270, %v767, 0
    %790 = vmatprep.subr.mxu0 0.0
    %791 = vmatpush1.msra.mxu0 %v785
    %792 = vmatprep.subr.mxu0 0.0
    %793 = vmatpush1.msra.mxu0 0.0
    %794 = vmatprep.subr.mxu0 0.0
    %795 = vmatpush1.msra.mxu0 0.0
    %796 = vmatprep.subr.mxu0 0.0
    %797 = vmatpush1.msra.mxu0 0.0
    %798 = vmatprep.subr.mxu0 0.0
    %799 = vmatpush1.msra.mxu0 0.0
    %800 = vmatprep.subr.mxu0 0.0
    %801 = vmatpush1.msra.mxu0 0.0
    %802 = vmatprep.subr.mxu0 0.0
    %803 = vmatpush1.msra.mxu0 0.0
    %804 = vmatprep.subr.mxu0 0.0
    %805 = vmatpush1.msra.mxu0 0.0
    %806 = vmatprep.subr.mxu0 0.0
    %807 = vmatpush1.msra.mxu0 0.0
    %808 = vmatprep.subr.mxu0 0.0
    %809 = vmatpush1.msra.mxu0 0.0
    %810 = vmatprep.subr.mxu0 0.0
    %811 = vmatpush1.msra.mxu0 0.0
    %812 = vmatprep.subr.mxu0 0.0
    %813 = vmatpush1.msra.mxu0 0.0
    %814 = vmatprep.subr.mxu0 0.0
    %815 = vmatpush1.msra.mxu0 0.0
    %816 = vmatprep.subr.mxu0 0.0
    %817 = vmatpush1.msra.mxu0 0.0
    %818 = vmatprep.subr.mxu0 0.0
    %819 = vmatpush1.msra.mxu0 0.0
    %820 = vmatprep.subr.mxu0 0.0
    %821 = vmatpush1.msra.mxu0 0.0
    %822 = vmatprep.subr.mxu0 0.0
    %823 = vmatpush1.msra.mxu0 0.0
    %824 = vmatprep.subr.mxu0 0.0
    %825 = vmatpush1.msra.mxu0 0.0
    %826 = vmatprep.subr.mxu0 0.0
    %827 = vmatpush1.msra.mxu0 0.0
    %828 = vmatprep.subr.mxu0 0.0
    %829 = vmatpush1.msra.mxu0 0.0
    %830 = vmatprep.subr.mxu0 0.0
    %831 = vmatpush1.msra.mxu0 0.0
    %832 = vmatprep.subr.mxu0 0.0
    %833 = vmatpush1.msra.mxu0 0.0
    %834 = vmatprep.subr.mxu0 0.0
    %835 = vmatpush1.msra.mxu0 0.0
    %836 = vmatprep.subr.mxu0 0.0
    %837 = vmatpush1.msra.mxu0 0.0
    %838 = vmatprep.subr.mxu0 0.0
    %839 = vmatpush1.msra.mxu0 0.0
    %840 = vmatprep.subr.mxu0 0.0
    %841 = vmatpush1.msra.mxu0 0.0
    %842 = vmatprep.subr.mxu0 0.0
    %843 = vmatpush1.msra.mxu0 0.0
    %844 = vmatprep.subr.mxu0 0.0
    %845 = vmatpush1.msra.mxu0 0.0
    %846 = vmatprep.subr.mxu0 0.0
    %847 = vmatpush1.msra.mxu0 0.0
    %848 = vmatprep.subr.mxu0 0.0
    %849 = vmatpush1.msra.mxu0 0.0
    %850 = vmatprep.subr.mxu0 0.0
    %851 = vmatpush1.msra.mxu0 0.0
    %852 = vmatprep.subr.mxu0 0.0
    %853 = vmatpush1.msra.mxu0 0.0
    %854 = vmatprep.mubr.f32.mxu0 0.0
    %855 = vmatmul.mubr.f32.gmra.mrb[0].mxu0 %v788
    %v856 = vpop.f32.mrb[0].mxu0
    %v857 = vadd.f32 0.0, %v856
    %v858 = vpop.f32.mrb[0].mxu0
    %859 = vdwg.mxu0
    %860 = vrot.lane.b32.xlu0 %v264, 56
    %v861 = vpop.permute.xlu0 %860
    %v864 = vsel %vm270, %v769, 0
    %866 = vmatprep.subr.mxu0 0.0
    %867 = vmatpush1.msra.mxu0 %v861
    %868 = vmatprep.subr.mxu0 0.0
    %869 = vmatpush1.msra.mxu0 0.0
    %870 = vmatprep.subr.mxu0 0.0
    %871 = vmatpush1.msra.mxu0 0.0
    %872 = vmatprep.subr.mxu0 0.0
    %873 = vmatpush1.msra.mxu0 0.0
    %874 = vmatprep.subr.mxu0 0.0
    %875 = vmatpush1.msra.mxu0 0.0
    %876 = vmatprep.subr.mxu0 0.0
    %877 = vmatpush1.msra.mxu0 0.0
    %878 = vmatprep.subr.mxu0 0.0
    %879 = vmatpush1.msra.mxu0 0.0
    %880 = vmatprep.subr.mxu0 0.0
    %881 = vmatpush1.msra.mxu0 0.0
    %882 = vmatprep.subr.mxu0 0.0
    %883 = vmatpush1.msra.mxu0 0.0
    %884 = vmatprep.subr.mxu0 0.0
    %885 = vmatpush1.msra.mxu0 0.0
    %886 = vmatprep.subr.mxu0 0.0
    %887 = vmatpush1.msra.mxu0 0.0
    %888 = vmatprep.subr.mxu0 0.0
    %889 = vmatpush1.msra.mxu0 0.0
    %890 = vmatprep.subr.mxu0 0.0
    %891 = vmatpush1.msra.mxu0 0.0
    %892 = vmatprep.subr.mxu0 0.0
    %893 = vmatpush1.msra.mxu0 0.0
    %894 = vmatprep.subr.mxu0 0.0
    %895 = vmatpush1.msra.mxu0 0.0
    %896 = vmatprep.subr.mxu0 0.0
    %897 = vmatpush1.msra.mxu0 0.0
    %898 = vmatprep.subr.mxu0 0.0
    %899 = vmatpush1.msra.mxu0 0.0
    %900 = vmatprep.subr.mxu0 0.0
    %901 = vmatpush1.msra.mxu0 0.0
    %902 = vmatprep.subr.mxu0 0.0
    %903 = vmatpush1.msra.mxu0 0.0
    %904 = vmatprep.subr.mxu0 0.0
    %905 = vmatpush1.msra.mxu0 0.0
    %906 = vmatprep.subr.mxu0 0.0
    %907 = vmatpush1.msra.mxu0 0.0
    %908 = vmatprep.subr.mxu0 0.0
    %909 = vmatpush1.msra.mxu0 0.0
    %910 = vmatprep.subr.mxu0 0.0
    %911 = vmatpush1.msra.mxu0 0.0
    %912 = vmatprep.subr.mxu0 0.0
    %913 = vmatpush1.msra.mxu0 0.0
    %914 = vmatprep.subr.mxu0 0.0
    %915 = vmatpush1.msra.mxu0 0.0
    %916 = vmatprep.subr.mxu0 0.0
    %917 = vmatpush1.msra.mxu0 0.0
    %918 = vmatprep.subr.mxu0 0.0
    %919 = vmatpush1.msra.mxu0 0.0
    %920 = vmatprep.subr.mxu0 0.0
    %921 = vmatpush1.msra.mxu0 0.0
    %922 = vmatprep.subr.mxu0 0.0
    %923 = vmatpush1.msra.mxu0 0.0
    %924 = vmatprep.subr.mxu0 0.0
    %925 = vmatpush1.msra.mxu0 0.0
    %926 = vmatprep.subr.mxu0 0.0
    %927 = vmatpush1.msra.mxu0 0.0
    %928 = vmatprep.subr.mxu0 0.0
    %929 = vmatpush1.msra.mxu0 0.0
    %930 = vmatprep.mubr.f32.mxu0 0.0
    %931 = vmatmul.mubr.f32.gmra.mrb[0].mxu0 %v864
    %v932 = vpop.f32.mrb[0].mxu0
    %v933 = vadd.f32 0.0, %v932
    %v934 = vpop.f32.mrb[0].mxu0
    %935 = vdwg.mxu0
    %v936 = vmul.f32 %v857, %v782
    %v937 = vmul.f32 %v933, %v783
    %938 = vrot.lane.b32.xlu0 %v259, 112
    %v939 = vpop.permute.xlu0 %938
    %940 = vrot.lane.b32.xlu0 %v259, 80
    %v941 = vpop.permute.xlu0 %940
    %v942 = vsel %vm270, %v939, 0
    %v944 = vsel %vm270, %v941, 0
    %946 = vmatprep.subr.mxu0 0.0
    %947 = vmatpush1.xpose.msra.mxu0 %v944
    %948 = vmatprep.subr.mxu0 0.0
    %949 = vmatpush1.xpose.msra.mxu0 0.0
    %950 = vmatprep.subr.mxu0 0.0
    %951 = vmatpush1.xpose.msra.mxu0 0.0
    %952 = vmatprep.subr.mxu0 0.0
    %953 = vmatpush1.xpose.msra.mxu0 0.0
    %954 = vmatprep.subr.mxu0 0.0
    %955 = vmatpush1.xpose.msra.mxu0 0.0
    %956 = vmatprep.subr.mxu0 0.0
    %957 = vmatpush1.xpose.msra.mxu0 0.0
    %958 = vmatprep.subr.mxu0 0.0
    %959 = vmatpush1.xpose.msra.mxu0 0.0
    %960 = vmatprep.subr.mxu0 0.0
    %961 = vmatpush1.xpose.msra.mxu0 0.0
    %962 = vmatprep.subr.mxu0 0.0
    %963 = vmatpush1.xpose.msra.mxu0 0.0
    %964 = vmatprep.subr.mxu0 0.0
    %965 = vmatpush1.xpose.msra.mxu0 0.0
    %966 = vmatprep.subr.mxu0 0.0
    %967 = vmatpush1.xpose.msra.mxu0 0.0
    %968 = vmatprep.subr.mxu0 0.0
    %969 = vmatpush1.xpose.msra.mxu0 0.0
    %970 = vmatprep.subr.mxu0 0.0
    %971 = vmatpush1.xpose.msra.mxu0 0.0
    %972 = vmatprep.subr.mxu0 0.0
    %973 = vmatpush1.xpose.msra.mxu0 0.0
    %974 = vmatprep.subr.mxu0 0.0
    %975 = vmatpush1.xpose.msra.mxu0 0.0
    %976 = vmatprep.subr.mxu0 0.0
    %977 = vmatpush1.xpose.msra.mxu0 0.0
    %978 = vmatprep.subr.mxu0 0.0
    %979 = vmatpush1.xpose.msra.mxu0 0.0
    %980 = vmatprep.subr.mxu0 0.0
    %981 = vmatpush1.xpose.msra.mxu0 0.0
    %982 = vmatprep.subr.mxu0 0.0
    %983 = vmatpush1.xpose.msra.mxu0 0.0
    %984 = vmatprep.subr.mxu0 0.0
    %985 = vmatpush1.xpose.msra.mxu0 0.0
    %986 = vmatprep.subr.mxu0 0.0
    %987 = vmatpush1.xpose.msra.mxu0 0.0
    %988 = vmatprep.subr.mxu0 0.0
    %989 = vmatpush1.xpose.msra.mxu0 0.0
    %990 = vmatprep.subr.mxu0 0.0
    %991 = vmatpush1.xpose.msra.mxu0 0.0
    %992 = vmatprep.subr.mxu0 0.0
    %993 = vmatpush1.xpose.msra.mxu0 0.0
    %994 = vmatprep.subr.mxu0 0.0
    %995 = vmatpush1.xpose.msra.mxu0 0.0
    %996 = vmatprep.subr.mxu0 0.0
    %997 = vmatpush1.xpose.msra.mxu0 0.0
    %998 = vmatprep.subr.mxu0 0.0
    %999 = vmatpush1.xpose.msra.mxu0 0.0
    %1000 = vmatprep.subr.mxu0 0.0
    %1001 = vmatpush1.xpose.msra.mxu0 0.0
    %1002 = vmatprep.subr.mxu0 0.0
    %1003 = vmatpush1.xpose.msra.mxu0 0.0
    %1004 = vmatprep.subr.mxu0 0.0
    %1005 = vmatpush1.xpose.msra.mxu0 0.0
    %1006 = vmatprep.subr.mxu0 0.0
    %1007 = vmatpush1.xpose.msra.mxu0 0.0
    %1008 = vmatprep.subr.mxu0 0.0
    %1009 = vmatpush1.xpose.msra.mxu0 0.0
    %1010 = vmatprep.mubr.f32.mxu0 0.0
    %1011 = vmatmul.mubr.f32.gmra.mrb[0].mxu0 %v942
    %v1012 = vpop.f32.mrb[0].mxu0
    %v1013 = vadd.f32 %v174, %v1012
    %v1014 = vpop.f32.mrb[0].mxu0
    %1015 = vdwg.mxu0
    %1016 = vrot.lane.b32.xlu0 %v264, 112
    %v1017 = vpop.permute.xlu0 %1016
    %1018 = vrot.lane.b32.xlu0 %v264, 80
    %v1019 = vpop.permute.xlu0 %1018
    %v1020 = vsel %vm270, %v1017, 0
    %v1022 = vsel %vm270, %v1019, 0
    %1024 = vmatprep.subr.mxu0 0.0
    %1025 = vmatpush1.xpose.msra.mxu0 %v1022
    %1026 = vmatprep.subr.mxu0 0.0
    %1027 = vmatpush1.xpose.msra.mxu0 0.0
    %1028 = vmatprep.subr.mxu0 0.0
    %1029 = vmatpush1.xpose.msra.mxu0 0.0
    %1030 = vmatprep.subr.mxu0 0.0
    %1031 = vmatpush1.xpose.msra.mxu0 0.0
    %1032 = vmatprep.subr.mxu0 0.0
    %1033 = vmatpush1.xpose.msra.mxu0 0.0
    %1034 = vmatprep.subr.mxu0 0.0
    %1035 = vmatpush1.xpose.msra.mxu0 0.0
    %1036 = vmatprep.subr.mxu0 0.0
    %1037 = vmatpush1.xpose.msra.mxu0 0.0
    %1038 = vmatprep.subr.mxu0 0.0
    %1039 = vmatpush1.xpose.msra.mxu0 0.0
    %1040 = vmatprep.subr.mxu0 0.0
    %1041 = vmatpush1.xpose.msra.mxu0 0.0
    %1042 = vmatprep.subr.mxu0 0.0
    %1043 = vmatpush1.xpose.msra.mxu0 0.0
    %1044 = vmatprep.subr.mxu0 0.0
    %1045 = vmatpush1.xpose.msra.mxu0 0.0
    %1046 = vmatprep.subr.mxu0 0.0
    %1047 = vmatpush1.xpose.msra.mxu0 0.0
    %1048 = vmatprep.subr.mxu0 0.0
    %1049 = vmatpush1.xpose.msra.mxu0 0.0
    %1050 = vmatprep.subr.mxu0 0.0
    %1051 = vmatpush1.xpose.msra.mxu0 0.0
    %1052 = vmatprep.subr.mxu0 0.0
    %1053 = vmatpush1.xpose.msra.mxu0 0.0
    %1054 = vmatprep.subr.mxu0 0.0
    %1055 = vmatpush1.xpose.msra.mxu0 0.0
    %1056 = vmatprep.subr.mxu0 0.0
    %1057 = vmatpush1.xpose.msra.mxu0 0.0
    %1058 = vmatprep.subr.mxu0 0.0
    %1059 = vmatpush1.xpose.msra.mxu0 0.0
    %1060 = vmatprep.subr.mxu0 0.0
    %1061 = vmatpush1.xpose.msra.mxu0 0.0
    %1062 = vmatprep.subr.mxu0 0.0
    %1063 = vmatpush1.xpose.msra.mxu0 0.0
    %1064 = vmatprep.subr.mxu0 0.0
    %1065 = vmatpush1.xpose.msra.mxu0 0.0
    %1066 = vmatprep.subr.mxu0 0.0
    %1067 = vmatpush1.xpose.msra.mxu0 0.0
    %1068 = vmatprep.subr.mxu0 0.0
    %1069 = vmatpush1.xpose.msra.mxu0 0.0
    %1070 = vmatprep.subr.mxu0 0.0
    %1071 = vmatpush1.xpose.msra.mxu0 0.0
    %1072 = vmatprep.subr.mxu0 0.0
    %1073 = vmatpush1.xpose.msra.mxu0 0.0
    %1074 = vmatprep.subr.mxu0 0.0
    %1075 = vmatpush1.xpose.msra.mxu0 0.0
    %1076 = vmatprep.subr.mxu0 0.0
    %1077 = vmatpush1.xpose.msra.mxu0 0.0
    %1078 = vmatprep.subr.mxu0 0.0
    %1079 = vmatpush1.xpose.msra.mxu0 0.0
    %1080 = vmatprep.subr.mxu0 0.0
    %1081 = vmatpush1.xpose.msra.mxu0 0.0
    %1082 = vmatprep.subr.mxu0 0.0
    %1083 = vmatpush1.xpose.msra.mxu0 0.0
    %1084 = vmatprep.subr.mxu0 0.0
    %1085 = vmatpush1.xpose.msra.mxu0 0.0
    %1086 = vmatprep.subr.mxu0 0.0
    %1087 = vmatpush1.xpose.msra.mxu0 0.0
    %1088 = vmatprep.mubr.f32.mxu0 0.0
    %1089 = vmatmul.mubr.f32.gmra.mrb[0].mxu0 %v1020
    %v1090 = vpop.f32.mrb[0].mxu0
    %v1091 = vadd.f32 %v178, %v1090
    %v1092 = vpop.f32.mrb[0].mxu0
    %1093 = vdwg.mxu0
    %v1094 = vsel %vm270, %v1013, -inf
    %1095 = vmax.xlane.f32.xlu0 %v1094
    %v1096 = vpop.xlane.xlu0 %1095
    %v1097 = vsel %vm270, %v1091, -inf
    %1098 = vmax.xlane.f32.xlu0 %v1097
    %v1099 = vpop.xlane.xlu0 %1098
    %v1100 = vsub.f32 %v1013, %v1096
    %v1101 = vsub.f32 %v1091, %v1099
    %v1102 = vmul.f32 %v1100, 1.442695
    %v1103 = vpow.pop %v1102
    %v1104 = vmul.f32 %v1101, 1.442695
    %v1105 = vpow.pop %v1104
    %v1106 = vsel %vm270, %v1103, 0.0
    %1107 = vadd.xlane.f32.xlu0 %v1106
    %v1108 = vpop.xlane.xlu0 %1107
    %v1109 = vsel %vm270, %v1105, 0.0
    %1110 = vadd.xlane.f32.xlu0 %v1109
    %v1111 = vpop.xlane.xlu0 %1110
    %v1112 = vrcp.pop %v1108
    %v1113 = vrcp.pop %v1111
    %v1114 = vmul.f32 %v1108, %v1112
    %v1115 = vmul.f32 %v1111, %v1113
    %v1116 = vsub.f32 2.0, %v1114
    %v1117 = vsub.f32 2.0, %v1115
    %v1118 = vmul.f32 %v1112, %v1116
    %v1119 = vmul.f32 %v1113, %v1117
    %1120 = vrot.lane.b32.xlu0 %v259, 48
    %v1121 = vpop.permute.xlu0 %1120
    %v1124 = vsel %vm270, %v1103, 0
    %1126 = vmatprep.subr.mxu0 0.0
    %1127 = vmatpush1.msra.mxu0 %v1121
    %1128 = vmatprep.subr.mxu0 0.0
    %1129 = vmatpush1.msra.mxu0 0.0
    %1130 = vmatprep.subr.mxu0 0.0
    %1131 = vmatpush1.msra.mxu0 0.0
    %1132 = vmatprep.subr.mxu0 0.0
    %1133 = vmatpush1.msra.mxu0 0.0
    %1134 = vmatprep.subr.mxu0 0.0
    %1135 = vmatpush1.msra.mxu0 0.0
    %1136 = vmatprep.subr.mxu0 0.0
    %1137 = vmatpush1.msra.mxu0 0.0
    %1138 = vmatprep.subr.mxu0 0.0
    %1139 = vmatpush1.msra.mxu0 0.0
    %1140 = vmatprep.subr.mxu0 0.0
    %1141 = vmatpush1.msra.mxu0 0.0
    %1142 = vmatprep.subr.mxu0 0.0
    %1143 = vmatpush1.msra.mxu0 0.0
    %1144 = vmatprep.subr.mxu0 0.0
    %1145 = vmatpush1.msra.mxu0 0.0
    %1146 = vmatprep.subr.mxu0 0.0
    %1147 = vmatpush1.msra.mxu0 0.0
    %1148 = vmatprep.subr.mxu0 0.0
    %1149 = vmatpush1.msra.mxu0 0.0
    %1150 = vmatprep.subr.mxu0 0.0
    %1151 = vmatpush1.msra.mxu0 0.0
    %1152 = vmatprep.subr.mxu0 0.0
    %1153 = vmatpush1.msra.mxu0 0.0
    %1154 = vmatprep.subr.mxu0 0.0
    %1155 = vmatpush1.msra.mxu0 0.0
    %1156 = vmatprep.subr.mxu0 0.0
    %1157 = vmatpush1.msra.mxu0 0.0
    %1158 = vmatprep.subr.mxu0 0.0
    %1159 = vmatpush1.msra.mxu0 0.0
    %1160 = vmatprep.subr.mxu0 0.0
    %1161 = vmatpush1.msra.mxu0 0.0
    %1162 = vmatprep.subr.mxu0 0.0
    %1163 = vmatpush1.msra.mxu0 0.0
    %1164 = vmatprep.subr.mxu0 0.0
    %1165 = vmatpush1.msra.mxu0 0.0
    %1166 = vmatprep.subr.mxu0 0.0
    %1167 = vmatpush1.msra.mxu0 0.0
    %1168 = vmatprep.subr.mxu0 0.0
    %1169 = vmatpush1.msra.mxu0 0.0
    %1170 = vmatprep.subr.mxu0 0.0
    %1171 = vmatpush1.msra.mxu0 0.0
    %1172 = vmatprep.subr.mxu0 0.0
    %1173 = vmatpush1.msra.mxu0 0.0
    %1174 = vmatprep.subr.mxu0 0.0
    %1175 = vmatpush1.msra.mxu0 0.0
    %1176 = vmatprep.subr.mxu0 0.0
    %1177 = vmatpush1.msra.mxu0 0.0
    %1178 = vmatprep.subr.mxu0 0.0
    %1179 = vmatpush1.msra.mxu0 0.0
    %1180 = vmatprep.subr.mxu0 0.0
    %1181 = vmatpush1.msra.mxu0 0.0
    %1182 = vmatprep.subr.mxu0 0.0
    %1183 = vmatpush1.msra.mxu0 0.0
    %1184 = vmatprep.subr.mxu0 0.0
    %1185 = vmatpush1.msra.mxu0 0.0
    %1186 = vmatprep.subr.mxu0 0.0
    %1187 = vmatpush1.msra.mxu0 0.0
    %1188 = vmatprep.subr.mxu0 0.0
    %1189 = vmatpush1.msra.mxu0 0.0
    %1190 = vmatprep.mubr.f32.mxu0 0.0
    %1191 = vmatmul.mubr.f32.gmra.mrb[0].mxu0 %v1124
    %v1192 = vpop.f32.mrb[0].mxu0
    %v1193 = vadd.f32 0.0, %v1192
    %v1194 = vpop.f32.mrb[0].mxu0
    %1195 = vdwg.mxu0
    %1196 = vrot.lane.b32.xlu0 %v264, 48
    %v1197 = vpop.permute.xlu0 %1196
    %v1200 = vsel %vm270, %v1105, 0
    %1202 = vmatprep.subr.mxu0 0.0
    %1203 = vmatpush1.msra.mxu0 %v1197
    %1204 = vmatprep.subr.mxu0 0.0
    %1205 = vmatpush1.msra.mxu0 0.0
    %1206 = vmatprep.subr.mxu0 0.0
    %1207 = vmatpush1.msra.mxu0 0.0
    %1208 = vmatprep.subr.mxu0 0.0
    %1209 = vmatpush1.msra.mxu0 0.0
    %1210 = vmatprep.subr.mxu0 0.0
    %1211 = vmatpush1.msra.mxu0 0.0
    %1212 = vmatprep.subr.mxu0 0.0
    %1213 = vmatpush1.msra.mxu0 0.0
    %1214 = vmatprep.subr.mxu0 0.0
    %1215 = vmatpush1.msra.mxu0 0.0
    %1216 = vmatprep.subr.mxu0 0.0
    %1217 = vmatpush1.msra.mxu0 0.0
    %1218 = vmatprep.subr.mxu0 0.0
    %1219 = vmatpush1.msra.mxu0 0.0
    %1220 = vmatprep.subr.mxu0 0.0
    %1221 = vmatpush1.msra.mxu0 0.0
    %1222 = vmatprep.subr.mxu0 0.0
    %1223 = vmatpush1.msra.mxu0 0.0
    %1224 = vmatprep.subr.mxu0 0.0
    %1225 = vmatpush1.msra.mxu0 0.0
    %1226 = vmatprep.subr.mxu0 0.0
    %1227 = vmatpush1.msra.mxu0 0.0
    %1228 = vmatprep.subr.mxu0 0.0
    %1229 = vmatpush1.msra.mxu0 0.0
    %1230 = vmatprep.subr.mxu0 0.0
    %1231 = vmatpush1.msra.mxu0 0.0
    %1232 = vmatprep.subr.mxu0 0.0
    %1233 = vmatpush1.msra.mxu0 0.0
    %1234 = vmatprep.subr.mxu0 0.0
    %1235 = vmatpush1.msra.mxu0 0.0
    %1236 = vmatprep.subr.mxu0 0.0
    %1237 = vmatpush1.msra.mxu0 0.0
    %1238 = vmatprep.subr.mxu0 0.0
    %1239 = vmatpush1.msra.mxu0 0.0
    %1240 = vmatprep.subr.mxu0 0.0
    %1241 = vmatpush1.msra.mxu0 0.0
    %1242 = vmatprep.subr.mxu0 0.0
    %1243 = vmatpush1.msra.mxu0 0.0
    %1244 = vmatprep.subr.mxu0 0.0
    %1245 = vmatpush1.msra.mxu0 0.0
    %1246 = vmatprep.subr.mxu0 0.0
    %1247 = vmatpush1.msra.mxu0 0.0
    %1248 = vmatprep.subr.mxu0 0.0
    %1249 = vmatpush1.msra.mxu0 0.0
    %1250 = vmatprep.subr.mxu0 0.0
    %1251 = vmatpush1.msra.mxu0 0.0
    %1252 = vmatprep.subr.mxu0 0.0
    %1253 = vmatpush1.msra.mxu0 0.0
    %1254 = vmatprep.subr.mxu0 0.0
    %1255 = vmatpush1.msra.mxu0 0.0
    %1256 = vmatprep.subr.mxu0 0.0
    %1257 = vmatpush1.msra.mxu0 0.0
    %1258 = vmatprep.subr.mxu0 0.0
    %1259 = vmatpush1.msra.mxu0 0.0
    %1260 = vmatprep.subr.mxu0 0.0
    %1261 = vmatpush1.msra.mxu0 0.0
    %1262 = vmatprep.subr.mxu0 0.0
    %1263 = vmatpush1.msra.mxu0 0.0
    %1264 = vmatprep.subr.mxu0 0.0
    %1265 = vmatpush1.msra.mxu0 0.0
    %1266 = vmatprep.mubr.f32.mxu0 0.0
    %1267 = vmatmul.mubr.f32.gmra.mrb[0].mxu0 %v1200
    %v1268 = vpop.f32.mrb[0].mxu0
    %v1269 = vadd.f32 0.0, %v1268
    %v1270 = vpop.f32.mrb[0].mxu0
    %1271 = vdwg.mxu0
    %v1272 = vmul.f32 %v1193, %v1118
    %v1273 = vmul.f32 %v1269, %v1119
    %1274 = vrot.lane.b32.xlu0 %v259, 104
    %v1275 = vpop.permute.xlu0 %1274
    %1276 = vrot.lane.b32.xlu0 %v259, 72
    %v1277 = vpop.permute.xlu0 %1276
    %v1278 = vsel %vm270, %v1275, 0
    %v1280 = vsel %vm270, %v1277, 0
    %1282 = vmatprep.subr.mxu0 0.0
    %1283 = vmatpush1.xpose.msra.mxu0 %v1280
    %1284 = vmatprep.subr.mxu0 0.0
    %1285 = vmatpush1.xpose.msra.mxu0 0.0
    %1286 = vmatprep.subr.mxu0 0.0
    %1287 = vmatpush1.xpose.msra.mxu0 0.0
    %1288 = vmatprep.subr.mxu0 0.0
    %1289 = vmatpush1.xpose.msra.mxu0 0.0
    %1290 = vmatprep.subr.mxu0 0.0
    %1291 = vmatpush1.xpose.msra.mxu0 0.0
    %1292 = vmatprep.subr.mxu0 0.0
    %1293 = vmatpush1.xpose.msra.mxu0 0.0
    %1294 = vmatprep.subr.mxu0 0.0
    %1295 = vmatpush1.xpose.msra.mxu0 0.0
    %1296 = vmatprep.subr.mxu0 0.0
    %1297 = vmatpush1.xpose.msra.mxu0 0.0
    %1298 = vmatprep.subr.mxu0 0.0
    %1299 = vmatpush1.xpose.msra.mxu0 0.0
    %1300 = vmatprep.subr.mxu0 0.0
    %1301 = vmatpush1.xpose.msra.mxu0 0.0
    %1302 = vmatprep.subr.mxu0 0.0
    %1303 = vmatpush1.xpose.msra.mxu0 0.0
    %1304 = vmatprep.subr.mxu0 0.0
    %1305 = vmatpush1.xpose.msra.mxu0 0.0
    %1306 = vmatprep.subr.mxu0 0.0
    %1307 = vmatpush1.xpose.msra.mxu0 0.0
    %1308 = vmatprep.subr.mxu0 0.0
    %1309 = vmatpush1.xpose.msra.mxu0 0.0
    %1310 = vmatprep.subr.mxu0 0.0
    %1311 = vmatpush1.xpose.msra.mxu0 0.0
    %1312 = vmatprep.subr.mxu0 0.0
    %1313 = vmatpush1.xpose.msra.mxu0 0.0
    %1314 = vmatprep.subr.mxu0 0.0
    %1315 = vmatpush1.xpose.msra.mxu0 0.0
    %1316 = vmatprep.subr.mxu0 0.0
    %1317 = vmatpush1.xpose.msra.mxu0 0.0
    %1318 = vmatprep.subr.mxu0 0.0
    %1319 = vmatpush1.xpose.msra.mxu0 0.0
    %1320 = vmatprep.subr.mxu0 0.0
    %1321 = vmatpush1.xpose.msra.mxu0 0.0
    %1322 = vmatprep.subr.mxu0 0.0
    %1323 = vmatpush1.xpose.msra.mxu0 0.0
    %1324 = vmatprep.subr.mxu0 0.0
    %1325 = vmatpush1.xpose.msra.mxu0 0.0
    %1326 = vmatprep.subr.mxu0 0.0
    %1327 = vmatpush1.xpose.msra.mxu0 0.0
    %1328 = vmatprep.subr.mxu0 0.0
    %1329 = vmatpush1.xpose.msra.mxu0 0.0
    %1330 = vmatprep.subr.mxu0 0.0
    %1331 = vmatpush1.xpose.msra.mxu0 0.0
    %1332 = vmatprep.subr.mxu0 0.0
    %1333 = vmatpush1.xpose.msra.mxu0 0.0
    %1334 = vmatprep.subr.mxu0 0.0
    %1335 = vmatpush1.xpose.msra.mxu0 0.0
    %1336 = vmatprep.subr.mxu0 0.0
    %1337 = vmatpush1.xpose.msra.mxu0 0.0
    %1338 = vmatprep.subr.mxu0 0.0
    %1339 = vmatpush1.xpose.msra.mxu0 0.0
    %1340 = vmatprep.subr.mxu0 0.0
    %1341 = vmatpush1.xpose.msra.mxu0 0.0
    %1342 = vmatprep.subr.mxu0 0.0
    %1343 = vmatpush1.xpose.msra.mxu0 0.0
    %1344 = vmatprep.subr.mxu0 0.0
    %1345 = vmatpush1.xpose.msra.mxu0 0.0
    %1346 = vmatprep.mubr.f32.mxu0 0.0
    %1347 = vmatmul.mubr.f32.gmra.mrb[0].mxu0 %v1278
    %v1348 = vpop.f32.mrb[0].mxu0
    %v1349 = vadd.f32 %v174, %v1348
    %v1350 = vpop.f32.mrb[0].mxu0
    %1351 = vdwg.mxu0
    %1352 = vrot.lane.b32.xlu0 %v264, 104
    %v1353 = vpop.permute.xlu0 %1352
    %1354 = vrot.lane.b32.xlu0 %v264, 72
    %v1355 = vpop.permute.xlu0 %1354
    %v1356 = vsel %vm270, %v1353, 0
    %v1358 = vsel %vm270, %v1355, 0
    %1360 = vmatprep.subr.mxu0 0.0
    %1361 = vmatpush1.xpose.msra.mxu0 %v1358
    %1362 = vmatprep.subr.mxu0 0.0
    %1363 = vmatpush1.xpose.msra.mxu0 0.0
    %1364 = vmatprep.subr.mxu0 0.0
    %1365 = vmatpush1.xpose.msra.mxu0 0.0
    %1366 = vmatprep.subr.mxu0 0.0
    %1367 = vmatpush1.xpose.msra.mxu0 0.0
    %1368 = vmatprep.subr.mxu0 0.0
    %1369 = vmatpush1.xpose.msra.mxu0 0.0
    %1370 = vmatprep.subr.mxu0 0.0
    %1371 = vmatpush1.xpose.msra.mxu0 0.0
    %1372 = vmatprep.subr.mxu0 0.0
    %1373 = vmatpush1.xpose.msra.mxu0 0.0
    %1374 = vmatprep.subr.mxu0 0.0
    %1375 = vmatpush1.xpose.msra.mxu0 0.0
    %1376 = vmatprep.subr.mxu0 0.0
    %1377 = vmatpush1.xpose.msra.mxu0 0.0
    %1378 = vmatprep.subr.mxu0 0.0
    %1379 = vmatpush1.xpose.msra.mxu0 0.0
    %1380 = vmatprep.subr.mxu0 0.0
    %1381 = vmatpush1.xpose.msra.mxu0 0.0
    %1382 = vmatprep.subr.mxu0 0.0
    %1383 = vmatpush1.xpose.msra.mxu0 0.0
    %1384 = vmatprep.subr.mxu0 0.0
    %1385 = vmatpush1.xpose.msra.mxu0 0.0
    %1386 = vmatprep.subr.mxu0 0.0
    %1387 = vmatpush1.xpose.msra.mxu0 0.0
    %1388 = vmatprep.subr.mxu0 0.0
    %1389 = vmatpush1.xpose.msra.mxu0 0.0
    %1390 = vmatprep.subr.mxu0 0.0
    %1391 = vmatpush1.xpose.msra.mxu0 0.0
    %1392 = vmatprep.subr.mxu0 0.0
    %1393 = vmatpush1.xpose.msra.mxu0 0.0
    %1394 = vmatprep.subr.mxu0 0.0
    %1395 = vmatpush1.xpose.msra.mxu0 0.0
    %1396 = vmatprep.subr.mxu0 0.0
    %1397 = vmatpush1.xpose.msra.mxu0 0.0
    %1398 = vmatprep.subr.mxu0 0.0
    %1399 = vmatpush1.xpose.msra.mxu0 0.0
    %1400 = vmatprep.subr.mxu0 0.0
    %1401 = vmatpush1.xpose.msra.mxu0 0.0
    %1402 = vmatprep.subr.mxu0 0.0
    %1403 = vmatpush1.xpose.msra.mxu0 0.0
    %1404 = vmatprep.subr.mxu0 0.0
    %1405 = vmatpush1.xpose.msra.mxu0 0.0
    %1406 = vmatprep.subr.mxu0 0.0
    %1407 = vmatpush1.xpose.msra.mxu0 0.0
    %1408 = vmatprep.subr.mxu0 0.0
    %1409 = vmatpush1.xpose.msra.mxu0 0.0
    %1410 = vmatprep.subr.mxu0 0.0
    %1411 = vmatpush1.xpose.msra.mxu0 0.0
    %1412 = vmatprep.subr.mxu0 0.0
    %1413 = vmatpush1.xpose.msra.mxu0 0.0
    %1414 = vmatprep.subr.mxu0 0.0
    %1415 = vmatpush1.xpose.msra.mxu0 0.0
    %1416 = vmatprep.subr.mxu0 0.0
    %1417 = vmatpush1.xpose.msra.mxu0 0.0
    %1418 = vmatprep.subr.mxu0 0.0
    %1419 = vmatpush1.xpose.msra.mxu0 0.0
    %1420 = vmatprep.subr.mxu0 0.0
    %1421 = vmatpush1.xpose.msra.mxu0 0.0
    %1422 = vmatprep.subr.mxu0 0.0
    %1423 = vmatpush1.xpose.msra.mxu0 0.0
    %1424 = vmatprep.mubr.f32.mxu0 0.0
    %1425 = vmatmul.mubr.f32.gmra.mrb[0].mxu0 %v1356
    %v1426 = vpop.f32.mrb[0].mxu0
    %v1427 = vadd.f32 %v178, %v1426
    %v1428 = vpop.f32.mrb[0].mxu0
    %1429 = vdwg.mxu0
    %v1430 = vsel %vm270, %v1349, -inf
    %1431 = vmax.xlane.f32.xlu0 %v1430
    %v1432 = vpop.xlane.xlu0 %1431
    %v1433 = vsel %vm270, %v1427, -inf
    %1434 = vmax.xlane.f32.xlu0 %v1433
    %v1435 = vpop.xlane.xlu0 %1434
    %v1436 = vsub.f32 %v1349, %v1432
    %v1437 = vsub.f32 %v1427, %v1435
    %v1438 = vmul.f32 %v1436, 1.442695
    %v1439 = vpow.pop %v1438
    %v1440 = vmul.f32 %v1437, 1.442695
    %v1441 = vpow.pop %v1440
    %v1442 = vsel %vm270, %v1439, 0.0
    %1443 = vadd.xlane.f32.xlu0 %v1442
    %v1444 = vpop.xlane.xlu0 %1443
    %v1445 = vsel %vm270, %v1441, 0.0
    %1446 = vadd.xlane.f32.xlu0 %v1445
    %v1447 = vpop.xlane.xlu0 %1446
    %v1448 = vrcp.pop %v1444
    %v1449 = vrcp.pop %v1447
    %v1450 = vmul.f32 %v1444, %v1448
    %v1451 = vmul.f32 %v1447, %v1449
    %v1452 = vsub.f32 2.0, %v1450
    %v1453 = vsub.f32 2.0, %v1451
    %v1454 = vmul.f32 %v1448, %v1452
    %v1455 = vmul.f32 %v1449, %v1453
    %1456 = vrot.lane.b32.xlu0 %v259, 40
    %v1457 = vpop.permute.xlu0 %1456
    %v1460 = vsel %vm270, %v1439, 0
    %1462 = vmatprep.subr.mxu0 0.0
    %1463 = vmatpush1.msra.mxu0 %v1457
    %1464 = vmatprep.subr.mxu0 0.0
    %1465 = vmatpush1.msra.mxu0 0.0
    %1466 = vmatprep.subr.mxu0 0.0
    %1467 = vmatpush1.msra.mxu0 0.0
    %1468 = vmatprep.subr.mxu0 0.0
    %1469 = vmatpush1.msra.mxu0 0.0
    %1470 = vmatprep.subr.mxu0 0.0
    %1471 = vmatpush1.msra.mxu0 0.0
    %1472 = vmatprep.subr.mxu0 0.0
    %1473 = vmatpush1.msra.mxu0 0.0
    %1474 = vmatprep.subr.mxu0 0.0
    %1475 = vmatpush1.msra.mxu0 0.0
    %1476 = vmatprep.subr.mxu0 0.0
    %1477 = vmatpush1.msra.mxu0 0.0
    %1478 = vmatprep.subr.mxu0 0.0
    %1479 = vmatpush1.msra.mxu0 0.0
    %1480 = vmatprep.subr.mxu0 0.0
    %1481 = vmatpush1.msra.mxu0 0.0
    %1482 = vmatprep.subr.mxu0 0.0
    %1483 = vmatpush1.msra.mxu0 0.0
    %1484 = vmatprep.subr.mxu0 0.0
    %1485 = vmatpush1.msra.mxu0 0.0
    %1486 = vmatprep.subr.mxu0 0.0
    %1487 = vmatpush1.msra.mxu0 0.0
    %1488 = vmatprep.subr.mxu0 0.0
    %1489 = vmatpush1.msra.mxu0 0.0
    %1490 = vmatprep.subr.mxu0 0.0
    %1491 = vmatpush1.msra.mxu0 0.0
    %1492 = vmatprep.subr.mxu0 0.0
    %1493 = vmatpush1.msra.mxu0 0.0
    %1494 = vmatprep.subr.mxu0 0.0
    %1495 = vmatpush1.msra.mxu0 0.0
    %1496 = vmatprep.subr.mxu0 0.0
    %1497 = vmatpush1.msra.mxu0 0.0
    %1498 = vmatprep.subr.mxu0 0.0
    %1499 = vmatpush1.msra.mxu0 0.0
    %1500 = vmatprep.subr.mxu0 0.0
    %1501 = vmatpush1.msra.mxu0 0.0
    %1502 = vmatprep.subr.mxu0 0.0
    %1503 = vmatpush1.msra.mxu0 0.0
    %1504 = vmatprep.subr.mxu0 0.0
    %1505 = vmatpush1.msra.mxu0 0.0
    %1506 = vmatprep.subr.mxu0 0.0
    %1507 = vmatpush1.msra.mxu0 0.0
    %1508 = vmatprep.subr.mxu0 0.0
    %1509 = vmatpush1.msra.mxu0 0.0
    %1510 = vmatprep.subr.mxu0 0.0
    %1511 = vmatpush1.msra.mxu0 0.0
    %1512 = vmatprep.subr.mxu0 0.0
    %1513 = vmatpush1.msra.mxu0 0.0
    %1514 = vmatprep.subr.mxu0 0.0
    %1515 = vmatpush1.msra.mxu0 0.0
    %1516 = vmatprep.subr.mxu0 0.0
    %1517 = vmatpush1.msra.mxu0 0.0
    %1518 = vmatprep.subr.mxu0 0.0
    %1519 = vmatpush1.msra.mxu0 0.0
    %1520 = vmatprep.subr.mxu0 0.0
    %1521 = vmatpush1.msra.mxu0 0.0
    %1522 = vmatprep.subr.mxu0 0.0
    %1523 = vmatpush1.msra.mxu0 0.0
    %1524 = vmatprep.subr.mxu0 0.0
    %1525 = vmatpush1.msra.mxu0 0.0
    %1526 = vmatprep.mubr.f32.mxu0 0.0
    %1527 = vmatmul.mubr.f32.gmra.mrb[0].mxu0 %v1460
    %v1528 = vpop.f32.mrb[0].mxu0
    %v1529 = vadd.f32 0.0, %v1528
    %v1530 = vpop.f32.mrb[0].mxu0
    %1531 = vdwg.mxu0
    %1532 = vrot.lane.b32.xlu0 %v264, 40
    %v1533 = vpop.permute.xlu0 %1532
    %v1536 = vsel %vm270, %v1441, 0
    %1538 = vmatprep.subr.mxu0 0.0
    %1539 = vmatpush1.msra.mxu0 %v1533
    %1540 = vmatprep.subr.mxu0 0.0
    %1541 = vmatpush1.msra.mxu0 0.0
    %1542 = vmatprep.subr.mxu0 0.0
    %1543 = vmatpush1.msra.mxu0 0.0
    %1544 = vmatprep.subr.mxu0 0.0
    %1545 = vmatpush1.msra.mxu0 0.0
    %1546 = vmatprep.subr.mxu0 0.0
    %1547 = vmatpush1.msra.mxu0 0.0
    %1548 = vmatprep.subr.mxu0 0.0
    %1549 = vmatpush1.msra.mxu0 0.0
    %1550 = vmatprep.subr.mxu0 0.0
    %1551 = vmatpush1.msra.mxu0 0.0
    %1552 = vmatprep.subr.mxu0 0.0
    %1553 = vmatpush1.msra.mxu0 0.0
    %1554 = vmatprep.subr.mxu0 0.0
    %1555 = vmatpush1.msra.mxu0 0.0
    %1556 = vmatprep.subr.mxu0 0.0
    %1557 = vmatpush1.msra.mxu0 0.0
    %1558 = vmatprep.subr.mxu0 0.0
    %1559 = vmatpush1.msra.mxu0 0.0
    %1560 = vmatprep.subr.mxu0 0.0
    %1561 = vmatpush1.msra.mxu0 0.0
    %1562 = vmatprep.subr.mxu0 0.0
    %1563 = vmatpush1.msra.mxu0 0.0
    %1564 = vmatprep.subr.mxu0 0.0
    %1565 = vmatpush1.msra.mxu0 0.0
    %1566 = vmatprep.subr.mxu0 0.0
    %1567 = vmatpush1.msra.mxu0 0.0
    %1568 = vmatprep.subr.mxu0 0.0
    %1569 = vmatpush1.msra.mxu0 0.0
    %1570 = vmatprep.subr.mxu0 0.0
    %1571 = vmatpush1.msra.mxu0 0.0
    %1572 = vmatprep.subr.mxu0 0.0
    %1573 = vmatpush1.msra.mxu0 0.0
    %1574 = vmatprep.subr.mxu0 0.0
    %1575 = vmatpush1.msra.mxu0 0.0
    %1576 = vmatprep.subr.mxu0 0.0
    %1577 = vmatpush1.msra.mxu0 0.0
    %1578 = vmatprep.subr.mxu0 0.0
    %1579 = vmatpush1.msra.mxu0 0.0
    %1580 = vmatprep.subr.mxu0 0.0
    %1581 = vmatpush1.msra.mxu0 0.0
    %1582 = vmatprep.subr.mxu0 0.0
    %1583 = vmatpush1.msra.mxu0 0.0
    %1584 = vmatprep.subr.mxu0 0.0
    %1585 = vmatpush1.msra.mxu0 0.0
    %1586 = vmatprep.subr.mxu0 0.0
    %1587 = vmatpush1.msra.mxu0 0.0
    %1588 = vmatprep.subr.mxu0 0.0
    %1589 = vmatpush1.msra.mxu0 0.0
    %1590 = vmatprep.subr.mxu0 0.0
    %1591 = vmatpush1.msra.mxu0 0.0
    %1592 = vmatprep.subr.mxu0 0.0
    %1593 = vmatpush1.msra.mxu0 0.0
    %1594 = vmatprep.subr.mxu0 0.0
    %1595 = vmatpush1.msra.mxu0 0.0
    %1596 = vmatprep.subr.mxu0 0.0
    %1597 = vmatpush1.msra.mxu0 0.0
    %1598 = vmatprep.subr.mxu0 0.0
    %1599 = vmatpush1.msra.mxu0 0.0
    %1600 = vmatprep.subr.mxu0 0.0
    %1601 = vmatpush1.msra.mxu0 0.0
    %1602 = vmatprep.mubr.f32.mxu0 0.0
    %1603 = vmatmul.mubr.f32.gmra.mrb[0].mxu0 %v1536
    %v1604 = vpop.f32.mrb[0].mxu0
    %v1605 = vadd.f32 0.0, %v1604
    %v1606 = vpop.f32.mrb[0].mxu0
    %1607 = vdwg.mxu0
    %v1608 = vmul.f32 %v1529, %v1454
    %v1609 = vmul.f32 %v1605, %v1455
    %1612 = vrot.lane.b32.xlu0 %v936, 8
    %v1613 = vpop.permute.xlu0 %1612
    %1614 = vrot.lane.b32.xlu0 %v937, 8
    %v1615 = vpop.permute.xlu0 %1614
    %1620 = vrot.lane.b32.xlu0 %v1272, 16
    %v1621 = vpop.permute.xlu0 %1620
    %1622 = vrot.lane.b32.xlu0 %v1273, 16
    %v1623 = vpop.permute.xlu0 %1622
    %1628 = vrot.lane.b32.xlu0 %v1608, 24
    %v1629 = vpop.permute.xlu0 %1628
    %1630 = vrot.lane.b32.xlu0 %v1609, 24
    %v1631 = vpop.permute.xlu0 %1630
    %v1634 = vsel %vm270, %v600, %v1613
    %v1635 = vsel %vm270, %v601, %v1615
    %vm1636 = vcmask 130048
    %v1637 = vsel %vm1636, %v1634, %v1621
    %v1638 = vsel %vm1636, %v1635, %v1623
    %vm1639 = vcmask 195584
    %v1640 = vsel %vm1639, %v1637, %v1629
    %v1641 = vsel %vm1639, %v1638, %v1631
    %v1642 = vld [vmem:[%s5] sm:$0xff]
    %v1643 = vld [vmem:[%s5 + $0x8] sm:$0xff]
    %v1644 = vld [vmem:[%s5 + $0x10] sm:$0xff]
    %v1645 = vld [vmem:[%s5 + $0x18] sm:$0xff]
    %v1646 = vld [vmem:[%s6] sm:$0x1]
    %v1648 = vlaneseq
    %v1649 = vshrl.u32 %v1648, 7
    %v1650 = vsub.s32 0, %v1649
    %v1651 = vrot.slane %v1646, %v1650
    %v1654 = vsel %vm185, %v1640, 0
    %v1657 = vsel %vm185, %v1641, 0
    %1659 = vmatprep.subr.mxu0 0.0
    %1660 = vmatpush1.msra.mxu0 %v1642
    %1661 = vmatprep.subr.mxu0 0.0
    %1662 = vmatpush1.msra.mxu0 %v1643
    %1663 = vmatprep.subr.mxu0 0.0
    %1664 = vmatpush1.msra.mxu0 %v1644
    %1665 = vmatprep.subr.mxu0 0.0
    %1666 = vmatpush1.msra.mxu0 %v1645
    %1667 = vmatprep.subr.mxu0 0.0
    %1668 = vmatpush1.msra.mxu0 0.0
    %1669 = vmatprep.subr.mxu0 0.0
    %1670 = vmatpush1.msra.mxu0 0.0
    %1671 = vmatprep.subr.mxu0 0.0
    %1672 = vmatpush1.msra.mxu0 0.0
    %1673 = vmatprep.subr.mxu0 0.0
    %1674 = vmatpush1.msra.mxu0 0.0
    %1675 = vmatprep.subr.mxu0 0.0
    %1676 = vmatpush1.msra.mxu0 0.0
    %1677 = vmatprep.subr.mxu0 0.0
    %1678 = vmatpush1.msra.mxu0 0.0
    %1679 = vmatprep.subr.mxu0 0.0
    %1680 = vmatpush1.msra.mxu0 0.0
    %1681 = vmatprep.subr.mxu0 0.0
    %1682 = vmatpush1.msra.mxu0 0.0
    %1683 = vmatprep.subr.mxu0 0.0
    %1684 = vmatpush1.msra.mxu0 0.0
    %1685 = vmatprep.subr.mxu0 0.0
    %1686 = vmatpush1.msra.mxu0 0.0
    %1687 = vmatprep.subr.mxu0 0.0
    %1688 = vmatpush1.msra.mxu0 0.0
    %1689 = vmatprep.subr.mxu0 0.0
    %1690 = vmatpush1.msra.mxu0 0.0
    %1691 = vmatprep.subr.mxu0 0.0
    %1692 = vmatpush1.msra.mxu0 0.0
    %1693 = vmatprep.subr.mxu0 0.0
    %1694 = vmatpush1.msra.mxu0 0.0
    %1695 = vmatprep.subr.mxu0 0.0
    %1696 = vmatpush1.msra.mxu0 0.0
    %1697 = vmatprep.subr.mxu0 0.0
    %1698 = vmatpush1.msra.mxu0 0.0
    %1699 = vmatprep.subr.mxu0 0.0
    %1700 = vmatpush1.msra.mxu0 0.0
    %1701 = vmatprep.subr.mxu0 0.0
    %1702 = vmatpush1.msra.mxu0 0.0
    %1703 = vmatprep.subr.mxu0 0.0
    %1704 = vmatpush1.msra.mxu0 0.0
    %1705 = vmatprep.subr.mxu0 0.0
    %1706 = vmatpush1.msra.mxu0 0.0
    %1707 = vmatprep.subr.mxu0 0.0
    %1708 = vmatpush1.msra.mxu0 0.0
    %1709 = vmatprep.subr.mxu0 0.0
    %1710 = vmatpush1.msra.mxu0 0.0
    %1711 = vmatprep.subr.mxu0 0.0
    %1712 = vmatpush1.msra.mxu0 0.0
    %1713 = vmatprep.subr.mxu0 0.0
    %1714 = vmatpush1.msra.mxu0 0.0
    %1715 = vmatprep.subr.mxu0 0.0
    %1716 = vmatpush1.msra.mxu0 0.0
    %1717 = vmatprep.subr.mxu0 0.0
    %1718 = vmatpush1.msra.mxu0 0.0
    %1719 = vmatprep.subr.mxu0 0.0
    %1720 = vmatpush1.msra.mxu0 0.0
    %1721 = vmatprep.subr.mxu0 0.0
    %1722 = vmatpush1.msra.mxu0 0.0
    %1723 = vmatprep.mubr.f32.mxu0 0.0
    %1724 = vmatmul.mubr.f32.gmra.mrb[0].mxu0 %v1654
    %v1725 = vpop.f32.mrb[0].mxu0
    %v1726 = vadd.f32 %v1651, %v1725
    %v1727 = vpop.f32.mrb[0].mxu0
    %1728 = vmatprep.mubr.f32.mxu0 0.0
    %1729 = vmatmul.mubr.f32.gmra.mrb[0].mxu0 %v1657
    %v1730 = vpop.f32.mrb[0].mxu0
    %v1731 = vadd.f32 %v1651, %v1730
    %v1732 = vpop.f32.mrb[0].mxu0
    %1733 = vdwg.mxu0
    %v1734 = vadd.f32 %v1726, %v161
    %v1735 = vadd.f32 %v1731, %v162
    %v1736 = vsel %vm185, %v1734, 0.0
    %1737 = vadd.xlane.f32.xlu0 %v1736
    %v1738 = vpop.xlane.xlu0 %1737
    %v1739 = vsel %vm185, %v1735, 0.0
    %1740 = vadd.xlane.f32.xlu0 %v1739
    %v1741 = vpop.xlane.xlu0 %1740
    %v1742 = vmul.f32 %v1734, %v1734
    %v1743 = vmul.f32 %v1735, %v1735
    %v1744 = vsel %vm185, %v1742, 0.0
    %1745 = vadd.xlane.f32.xlu0 %v1744
    %v1746 = vpop.xlane.xlu0 %1745
    %v1747 = vsel %vm185, %v1743, 0.0
    %1748 = vadd.xlane.f32.xlu0 %v1747
    %v1749 = vpop.xlane.xlu0 %1748
    %v1750 = vmul.f32 %v1738, 0.03125
    %v1751 = vmul.f32 %v1741, 0.03125
    %v1752 = vmul.f32 %v1746, 0.03125
    %v1753 = vmul.f32 %v1749, 0.03125
    %v1754 = vmul.f32 %v1750, %v1750
    %v1755 = vmul.f32 %v1751, %v1751
    %v1756 = vsub.f32 %v1752, %v1754
    %v1757 = vsub.f32 %v1753, %v1755
    %v1758 = vsub.f32 %v1734, %v1750
    %v1759 = vsub.f32 %v1735, %v1751
    %v1760 = vadd.f32 %v1756, 1e-05
    %v1761 = vadd.f32 %v1757, 1e-05
    %v1762 = vrsqrt.pop %v1760
    %v1763 = vrsqrt.pop %v1761
    %v1764 = vmul.f32 %v1758, %v1762
    %v1765 = vmul.f32 %v1759, %v1763
    %v1766 = vld [vmem:[%s7] sm:$0x1]
    %v1768 = vlaneseq
    %v1769 = vshrl.u32 %v1768, 7
    %v1770 = vsub.s32 0, %v1769
    %v1771 = vrot.slane %v1766, %v1770
    %v1773 = vmul.f32 %v1764, %v1771
    %v1774 = vmul.f32 %v1765, %v1771
    %v1775 = vld [vmem:[%s8] sm:$0x1]
    %v1777 = vlaneseq
    %v1778 = vshrl.u32 %v1777, 7
    %v1779 = vsub.s32 0, %v1778
    %v1780 = vrot.slane %v1775, %v1779
    %v1782 = vadd.f32 %v1773, %v1780
    %v1783 = vadd.f32 %v1774, %v1780
    %v1784 = vld [vmem:[%s9] sm:$0xff]
    %v1785 = vld [vmem:[%s9 + $0x8] sm:$0xff]
    %v1786 = vld [vmem:[%s9 + $0x10] sm:$0xff]
    %v1787 = vld [vmem:[%s9 + $0x18] sm:$0xff]
    %v1788 = vld [vmem:[%s10] sm:$0x1]
    %v1790 = vlaneseq
    %v1791 = vshrl.u32 %v1790, 7
    %v1792 = vsub.s32 0, %v1791
    %v1793 = vrot.slane %v1788, %v1792
    %v1796 = vsel %vm185, %v1782, 0
    %v1799 = vsel %vm185, %v1783, 0
    %1801 = vmatprep.subr.mxu0 0.0
    %1802 = vmatpush1.msra.mxu0 %v1784
    %1803 = vmatprep.subr.mxu0 0.0
    %1804 = vmatpush1.msra.mxu0 %v1785
    %1805 = vmatprep.subr.mxu0 0.0
    %1806 = vmatpush1.msra.mxu0 %v1786
    %1807 = vmatprep.subr.mxu0 0.0
    %1808 = vmatpush1.msra.mxu0 %v1787
    %1809 = vmatprep.subr.mxu0 0.0
    %1810 = vmatpush1.msra.mxu0 0.0
    %1811 = vmatprep.subr.mxu0 0.0
    %1812 = vmatpush1.msra.mxu0 0.0
    %1813 = vmatprep.subr.mxu0 0.0
    %1814 = vmatpush1.msra.mxu0 0.0
    %1815 = vmatprep.subr.mxu0 0.0
    %1816 = vmatpush1.msra.mxu0 0.0
    %1817 = vmatprep.subr.mxu0 0.0
    %1818 = vmatpush1.msra.mxu0 0.0
    %1819 = vmatprep.subr.mxu0 0.0
    %1820 = vmatpush1.msra.mxu0 0.0
    %1821 = vmatprep.subr.mxu0 0.0
    %1822 = vmatpush1.msra.mxu0 0.0
    %1823 = vmatprep.subr.mxu0 0.0
    %1824 = vmatpush1.msra.mxu0 0.0
    %1825 = vmatprep.subr.mxu0 0.0
    %1826 = vmatpush1.msra.mxu0 0.0
    %1827 = vmatprep.subr.mxu0 0.0
    %1828 = vmatpush1.msra.mxu0 0.0
    %1829 = vmatprep.subr.mxu0 0.0
    %1830 = vmatpush1.msra.mxu0 0.0
    %1831 = vmatprep.subr.mxu0 0.0
    %1832 = vmatpush1.msra.mxu0 0.0
    %1833 = vmatprep.subr.mxu0 0.0
    %1834 = vmatpush1.msra.mxu0 0.0
    %1835 = vmatprep.subr.mxu0 0.0
    %1836 = vmatpush1.msra.mxu0 0.0
    %1837 = vmatprep.subr.mxu0 0.0
    %1838 = vmatpush1.msra.mxu0 0.0
    %1839 = vmatprep.subr.mxu0 0.0
    %1840 = vmatpush1.msra.mxu0 0.0
    %1841 = vmatprep.subr.mxu0 0.0
    %1842 = vmatpush1.msra.mxu0 0.0
    %1843 = vmatprep.subr.mxu0 0.0
    %1844 = vmatpush1.msra.mxu0 0.0
    %1845 = vmatprep.subr.mxu0 0.0
    %1846 = vmatpush1.msra.mxu0 0.0
    %1847 = vmatprep.subr.mxu0 0.0
    %1848 = vmatpush1.msra.mxu0 0.0
    %1849 = vmatprep.subr.mxu0 0.0
    %1850 = vmatpush1.msra.mxu0 0.0
    %1851 = vmatprep.subr.mxu0 0.0
    %1852 = vmatpush1.msra.mxu0 0.0
    %1853 = vmatprep.subr.mxu0 0.0
    %1854 = vmatpush1.msra.mxu0 0.0
    %1855 = vmatprep.subr.mxu0 0.0
    %1856 = vmatpush1.msra.mxu0 0.0
    %1857 = vmatprep.subr.mxu0 0.0
    %1858 = vmatpush1.msra.mxu0 0.0
    %1859 = vmatprep.subr.mxu0 0.0
    %1860 = vmatpush1.msra.mxu0 0.0
    %1861 = vmatprep.subr.mxu0 0.0
    %1862 = vmatpush1.msra.mxu0 0.0
    %1863 = vmatprep.subr.mxu0 0.0
    %1864 = vmatpush1.msra.mxu0 0.0
    %1865 = vmatprep.mubr.f32.mxu0 0.0
    %1866 = vmatmul.mubr.f32.gmra.mrb[0].mxu0 %v1796
    %v1867 = vpop.f32.mrb[0].mxu0
    %v1868 = vadd.f32 %v1793, %v1867
    %v1869 = vpop.f32.mrb[0].mxu0
    %1870 = vmatprep.mubr.f32.mxu0 0.0
    %1871 = vmatmul.mubr.f32.gmra.mrb[0].mxu0 %v1799
    %v1872 = vpop.f32.mrb[0].mxu0
    %v1873 = vadd.f32 %v1793, %v1872
    %v1874 = vpop.f32.mrb[0].mxu0
    %1875 = vdwg.mxu0
    %v1876 = vmax.f32 %v1868, 0.0
    %v1877 = vmax.f32 %v1873, 0.0
    %v1878 = vld [vmem:[%s11] sm:$0xff]
    %v1879 = vld [vmem:[%s11 + $0x8] sm:$0xff]
    %v1880 = vld [vmem:[%s11 + $0x10] sm:$0xff]
    %v1881 = vld [vmem:[%s11 + $0x18] sm:$0xff]
    %v1882 = vld [vmem:[%s11 + $0x20] sm:$0xff]
    %v1883 = vld [vmem:[%s11 + $0x28] sm:$0xff]
    %v1884 = vld [vmem:[%s11 + $0x30] sm:$0xff]
    %v1885 = vld [vmem:[%s11 + $0x38] sm:$0xff]
    %v1886 = vld [vmem:[%s11 + $0x40] sm:$0xff]
    %v1887 = vld [vmem:[%s11 + $0x48] sm:$0xff]
    %v1888 = vld [vmem:[%s11 + $0x50] sm:$0xff]
    %v1889 = vld [vmem:[%s11 + $0x58] sm:$0xff]
    %v1890 = vld [vmem:[%s11 + $0x60] sm:$0xff]
    %v1891 = vld [vmem:[%s11 + $0x68] sm:$0xff]
    %v1892 = vld [vmem:[%s11 + $0x70] sm:$0xff]
    %v1893 = vld [vmem:[%s11 + $0x78] sm:$0xff]
    %v1894 = vld [vmem:[%s12] sm:$0x1]
    %v1896 = vlaneseq
    %v1897 = vshrl.u32 %v1896, 7
    %v1898 = vsub.s32 0, %v1897
    %v1899 = vrot.slane %v1894, %v1898
    %1901 = vmatprep.subr.mxu0 0.0
    %1902 = vmatpush1.msra.mxu0 %v1878
    %1903 = vmatprep.subr.mxu0 0.0
    %1904 = vmatpush1.msra.mxu0 %v1879
    %1905 = vmatprep.subr.mxu0 0.0
    %1906 = vmatpush1.msra.mxu0 %v1880
    %1907 = vmatprep.subr.mxu0 0.0
    %1908 = vmatpush1.msra.mxu0 %v1881
    %1909 = vmatprep.subr.mxu0 0.0
    %1910 = vmatpush1.msra.mxu0 %v1882
    %1911 = vmatprep.subr.mxu0 0.0
    %1912 = vmatpush1.msra.mxu0 %v1883
    %1913 = vmatprep.subr.mxu0 0.0
    %1914 = vmatpush1.msra.mxu0 %v1884
    %1915 = vmatprep.subr.mxu0 0.0
    %1916 = vmatpush1.msra.mxu0 %v1885
    %1917 = vmatprep.subr.mxu0 0.0
    %1918 = vmatpush1.msra.mxu0 %v1886
    %1919 = vmatprep.subr.mxu0 0.0
    %1920 = vmatpush1.msra.mxu0 %v1887
    %1921 = vmatprep.subr.mxu0 0.0
    %1922 = vmatpush1.msra.mxu0 %v1888
    %1923 = vmatprep.subr.mxu0 0.0
    %1924 = vmatpush1.msra.mxu0 %v1889
    %1925 = vmatprep.subr.mxu0 0.0
    %1926 = vmatpush1.msra.mxu0 %v1890
    %1927 = vmatprep.subr.mxu0 0.0
    %1928 = vmatpush1.msra.mxu0 %v1891
    %1929 = vmatprep.subr.mxu0 0.0
    %1930 = vmatpush1.msra.mxu0 %v1892
    %1931 = vmatprep.subr.mxu0 0.0
    %1932 = vmatpush1.msra.mxu0 %v1893
    %1933 = vmatprep.subr.mxu0 0.0
    %1934 = vmatpush1.msra.mxu0 0.0
    %1935 = vmatprep.subr.mxu0 0.0
    %1936 = vmatpush1.msra.mxu0 0.0
    %1937 = vmatprep.subr.mxu0 0.0
    %1938 = vmatpush1.msra.mxu0 0.0
    %1939 = vmatprep.subr.mxu0 0.0
    %1940 = vmatpush1.msra.mxu0 0.0
    %1941 = vmatprep.subr.mxu0 0.0
    %1942 = vmatpush1.msra.mxu0 0.0
    %1943 = vmatprep.subr.mxu0 0.0
    %1944 = vmatpush1.msra.mxu0 0.0
    %1945 = vmatprep.subr.mxu0 0.0
    %1946 = vmatpush1.msra.mxu0 0.0
    %1947 = vmatprep.subr.mxu0 0.0
    %1948 = vmatpush1.msra.mxu0 0.0
    %1949 = vmatprep.subr.mxu0 0.0
    %1950 = vmatpush1.msra.mxu0 0.0
    %1951 = vmatprep.subr.mxu0 0.0
    %1952 = vmatpush1.msra.mxu0 0.0
    %1953 = vmatprep.subr.mxu0 0.0
    %1954 = vmatpush1.msra.mxu0 0.0
    %1955 = vmatprep.subr.mxu0 0.0
    %1956 = vmatpush1.msra.mxu0 0.0
    %1957 = vmatprep.subr.mxu0 0.0
    %1958 = vmatpush1.msra.mxu0 0.0
    %1959 = vmatprep.subr.mxu0 0.0
    %1960 = vmatpush1.msra.mxu0 0.0
    %1961 = vmatprep.subr.mxu0 0.0
    %1962 = vmatpush1.msra.mxu0 0.0
    %1963 = vmatprep.subr.mxu0 0.0
    %1964 = vmatpush1.msra.mxu0 0.0
    %1965 = vmatprep.mubr.f32.mxu0 0.0
    %1966 = vmatmul.mubr.f32.gmra.mrb[0].mxu0 %v1876
    %v1967 = vpop.f32.mrb[0].mxu0
    %v1968 = vadd.f32 %v1899, %v1967
    %v1969 = vpop.f32.mrb[0].mxu0
    %1970 = vmatprep.mubr.f32.mxu0 0.0
    %1971 = vmatmul.mubr.f32.gmra.mrb[0].mxu0 %v1877
    %v1972 = vpop.f32.mrb[0].mxu0
    %v1973 = vadd.f32 %v1899, %v1972
    %v1974 = vpop.f32.mrb[0].mxu0
    %1975 = vdwg.mxu0
    %v1976 = vadd.f32 %v1968, %v1782
    %v1977 = vadd.f32 %v1973, %v1783
    %v1978 = vsel %vm185, %v1976, 0.0
    %1979 = vadd.xlane.f32.xlu0 %v1978
    %v1980 = vpop.xlane.xlu0 %1979
    %v1981 = vsel %vm185, %v1977, 0.0
    %1982 = vadd.xlane.f32.xlu0 %v1981
    %v1983 = vpop.xlane.xlu0 %1982
    %v1984 = vmul.f32 %v1976, %v1976
    %v1985 = vmul.f32 %v1977, %v1977
    %v1986 = vsel %vm185, %v1984, 0.0
    %1987 = vadd.xlane.f32.xlu0 %v1986
    %v1988 = vpop.xlane.xlu0 %1987
    %v1989 = vsel %vm185, %v1985, 0.0
    %1990 = vadd.xlane.f32.xlu0 %v1989
    %v1991 = vpop.xlane.xlu0 %1990
    %v1992 = vmul.f32 %v1980, 0.03125
    %v1993 = vmul.f32 %v1983, 0.03125
    %v1994 = vmul.f32 %v1988, 0.03125
    %v1995 = vmul.f32 %v1991, 0.03125
    %v1996 = vmul.f32 %v1992, %v1992
    %v1997 = vmul.f32 %v1993, %v1993
    %v1998 = vsub.f32 %v1994, %v1996
    %v1999 = vsub.f32 %v1995, %v1997
    %v2000 = vsub.f32 %v1976, %v1992
    %v2001 = vsub.f32 %v1977, %v1993
    %v2002 = vadd.f32 %v1998, 1e-05
    %v2003 = vadd.f32 %v1999, 1e-05
    %v2004 = vrsqrt.pop %v2002
    %v2005 = vrsqrt.pop %v2003
    %v2006 = vmul.f32 %v2000, %v2004
    %v2007 = vmul.f32 %v2001, %v2005
    %v2008 = vld [vmem:[%s13] sm:$0x1]
    %v2010 = vlaneseq
    %v2011 = vshrl.u32 %v2010, 7
    %v2012 = vsub.s32 0, %v2011
    %v2013 = vrot.slane %v2008, %v2012
    %v2015 = vmul.f32 %v2006, %v2013
    %v2016 = vmul.f32 %v2007, %v2013
    %v2017 = vld [vmem:[%s14] sm:$0x1]
    %v2019 = vlaneseq
    %v2020 = vshrl.u32 %v2019, 7
    %v2021 = vsub.s32 0, %v2020
    %v2022 = vrot.slane %v2017, %v2021
    %v2024 = vadd.f32 %v2015, %v2022
    %v2025 = vadd.f32 %v2016, %v2022
    %s2026 = scalar_lea.vmem %s4, 32
    %v2027 = vld [vmem:[%s2026] sm:$0xff]
    %v2028 = vld [vmem:[%s2026 + $0x8] sm:$0xff]
    %v2029 = vld [vmem:[%s2026 + $0x10] sm:$0xff]
    %v2030 = vld [vmem:[%s2026 + $0x18] sm:$0xff]
    %v2032 = vsel %vm185, %v2024, 0
    %v2035 = vsel %vm185, %v2025, 0
    %2037 = vmatprep.subr.mxu0 0.0
    %2038 = vmatpush1.msra.mxu0 %v2027
    %2039 = vmatprep.subr.mxu0 0.0
    %2040 = vmatpush1.msra.mxu0 %v2028
    %2041 = vmatprep.subr.mxu0 0.0
    %2042 = vmatpush1.msra.mxu0 %v2029
    %2043 = vmatprep.subr.mxu0 0.0
    %2044 = vmatpush1.msra.mxu0 %v2030
    %2045 = vmatprep.subr.mxu0 0.0
    %2046 = vmatpush1.msra.mxu0 0.0
    %2047 = vmatprep.subr.mxu0 0.0
    %2048 = vmatpush1.msra.mxu0 0.0
    %2049 = vmatprep.subr.mxu0 0.0
    %2050 = vmatpush1.msra.mxu0 0.0
    %2051 = vmatprep.subr.mxu0 0.0
    %2052 = vmatpush1.msra.mxu0 0.0
    %2053 = vmatprep.subr.mxu0 0.0
    %2054 = vmatpush1.msra.mxu0 0.0
    %2055 = vmatprep.subr.mxu0 0.0
    %2056 = vmatpush1.msra.mxu0 0.0
    %2057 = vmatprep.subr.mxu0 0.0
    %2058 = vmatpush1.msra.mxu0 0.0
    %2059 = vmatprep.subr.mxu0 0.0
    %2060 = vmatpush1.msra.mxu0 0.0
    %2061 = vmatprep.subr.mxu0 0.0
    %2062 = vmatpush1.msra.mxu0 0.0
    %2063 = vmatprep.subr.mxu0 0.0
    %2064 = vmatpush1.msra.mxu0 0.0
    %2065 = vmatprep.subr.mxu0 0.0
    %2066 = vmatpush1.msra.mxu0 0.0
    %2067 = vmatprep.subr.mxu0 0.0
    %2068 = vmatpush1.msra.mxu0 0.0
    %2069 = vmatprep.subr.mxu0 0.0
    %2070 = vmatpush1.msra.mxu0 0.0
    %2071 = vmatprep.subr.mxu0 0.0
    %2072 = vmatpush1.msra.mxu0 0.0
    %2073 = vmatprep.subr.mxu0 0.0
    %2074 = vmatpush1.msra.mxu0 0.0
    %2075 = vmatprep.subr.mxu0 0.0
    %2076 = vmatpush1.msra.mxu0 0.0
    %2077 = vmatprep.subr.mxu0 0.0
    %2078 = vmatpush1.msra.mxu0 0.0
    %2079 = vmatprep.subr.mxu0 0.0
    %2080 = vmatpush1.msra.mxu0 0.0
    %2081 = vmatprep.subr.mxu0 0.0
    %2082 = vmatpush1.msra.mxu0 0.0
    %2083 = vmatprep.subr.mxu0 0.0
    %2084 = vmatpush1.msra.mxu0 0.0
    %2085 = vmatprep.subr.mxu0 0.0
    %2086 = vmatpush1.msra.mxu0 0.0
    %2087 = vmatprep.subr.mxu0 0.0
    %2088 = vmatpush1.msra.mxu0 0.0
    %2089 = vmatprep.subr.mxu0 0.0
    %2090 = vmatpush1.msra.mxu0 0.0
    %2091 = vmatprep.subr.mxu0 0.0
    %2092 = vmatpush1.msra.mxu0 0.0
    %2093 = vmatprep.subr.mxu0 0.0
    %2094 = vmatpush1.msra.mxu0 0.0
    %2095 = vmatprep.subr.mxu0 0.0
    %2096 = vmatpush1.msra.mxu0 0.0
    %2097 = vmatprep.subr.mxu0 0.0
    %2098 = vmatpush1.msra.mxu0 0.0
    %2099 = vmatprep.subr.mxu0 0.0
    %2100 = vmatpush1.msra.mxu0 0.0
    %2101 = vmatprep.mubr.f32.mxu0 0.0
    %2102 = vmatmul.mubr.f32.gmra.mrb[0].mxu0 %v2032
    %v2103 = vpop.f32.mrb[0].mxu0
    %v2104 = vadd.f32 0.0, %v2103
    %v2105 = vpop.f32.mrb[0].mxu0
    %2106 = vmatprep.mubr.f32.mxu0 0.0
    %2107 = vmatmul.mubr.f32.gmra.mrb[0].mxu0 %v2035
    %v2108 = vpop.f32.mrb[0].mxu0
    %v2109 = vadd.f32 0.0, %v2108
    %v2110 = vpop.f32.mrb[0].mxu0
    %2111 = vdwg.mxu0
    %2113 = vrot.lane.b32.xlu0 %v2104, 96
    %v2114 = vpop.permute.xlu0 %2113
    %v2115 = vsel %vm270, %v2104, 0
    %v2117 = vsel %vm270, %v2114, 0
    %2119 = vmatprep.subr.mxu0 0.0
    %2120 = vmatpush1.xpose.msra.mxu0 %v2117
    %2121 = vmatprep.subr.mxu0 0.0
    %2122 = vmatpush1.xpose.msra.mxu0 0.0
    %2123 = vmatprep.subr.mxu0 0.0
    %2124 = vmatpush1.xpose.msra.mxu0 0.0
    %2125 = vmatprep.subr.mxu0 0.0
    %2126 = vmatpush1.xpose.msra.mxu0 0.0
    %2127 = vmatprep.subr.mxu0 0.0
    %2128 = vmatpush1.xpose.msra.mxu0 0.0
    %2129 = vmatprep.subr.mxu0 0.0
    %2130 = vmatpush1.xpose.msra.mxu0 0.0
    %2131 = vmatprep.subr.mxu0 0.0
    %2132 = vmatpush1.xpose.msra.mxu0 0.0
    %2133 = vmatprep.subr.mxu0 0.0
    %2134 = vmatpush1.xpose.msra.mxu0 0.0
    %2135 = vmatprep.subr.mxu0 0.0
    %2136 = vmatpush1.xpose.msra.mxu0 0.0
    %2137 = vmatprep.subr.mxu0 0.0
    %2138 = vmatpush1.xpose.msra.mxu0 0.0
    %2139 = vmatprep.subr.mxu0 0.0
    %2140 = vmatpush1.xpose.msra.mxu0 0.0
    %2141 = vmatprep.subr.mxu0 0.0
    %2142 = vmatpush1.xpose.msra.mxu0 0.0
    %2143 = vmatprep.subr.mxu0 0.0
    %2144 = vmatpush1.xpose.msra.mxu0 0.0
    %2145 = vmatprep.subr.mxu0 0.0
    %2146 = vmatpush1.xpose.msra.mxu0 0.0
    %2147 = vmatprep.subr.mxu0 0.0
    %2148 = vmatpush1.xpose.msra.mxu0 0.0
    %2149 = vmatprep.subr.mxu0 0.0
    %2150 = vmatpush1.xpose.msra.mxu0 0.0
    %2151 = vmatprep.subr.mxu0 0.0
    %2152 = vmatpush1.xpose.msra.mxu0 0.0
    %2153 = vmatprep.subr.mxu0 0.0
    %2154 = vmatpush1.xpose.msra.mxu0 0.0
    %2155 = vmatprep.subr.mxu0 0.0
    %2156 = vmatpush1.xpose.msra.mxu0 0.0
    %2157 = vmatprep.subr.mxu0 0.0
    %2158 = vmatpush1.xpose.msra.mxu0 0.0
    %2159 = vmatprep.subr.mxu0 0.0
    %2160 = vmatpush1.xpose.msra.mxu0 0.0
    %2161 = vmatprep.subr.mxu0 0.0
    %2162 = vmatpush1.xpose.msra.mxu0 0.0
    %2163 = vmatprep.subr.mxu0 0.0
    %2164 = vmatpush1.xpose.msra.mxu0 0.0
    %2165 = vmatprep.subr.mxu0 0.0
    %2166 = vmatpush1.xpose.msra.mxu0 0.0
    %2167 = vmatprep.subr.mxu0 0.0
    %2168 = vmatpush1.xpose.msra.mxu0 0.0
    %2169 = vmatprep.subr.mxu0 0.0
    %2170 = vmatpush1.xpose.msra.mxu0 0.0
    %2171 = vmatprep.subr.mxu0 0.0
    %2172 = vmatpush1.xpose.msra.mxu0 0.0
    %2173 = vmatprep.subr.mxu0 0.0
    %2174 = vmatpush1.xpose.msra.mxu0 0.0
    %2175 = vmatprep.subr.mxu0 0.0
    %2176 = vmatpush1.xpose.msra.mxu0 0.0
    %2177 = vmatprep.subr.mxu0 0.0
    %2178 = vmatpush1.xpose.msra.mxu0 0.0
    %2179 = vmatprep.subr.mxu0 0.0
    %2180 = vmatpush1.xpose.msra.mxu0 0.0
    %2181 = vmatprep.subr.mxu0 0.0
    %2182 = vmatpush1.xpose.msra.mxu0 0.0
    %2183 = vmatprep.mubr.f32.mxu0 0.0
    %2184 = vmatmul.mubr.f32.gmra.mrb[0].mxu0 %v2115
    %v2185 = vpop.f32.mrb[0].mxu0
    %v2186 = vadd.f32 %v174, %v2185
    %v2187 = vpop.f32.mrb[0].mxu0
    %2188 = vdwg.mxu0
    %2190 = vrot.lane.b32.xlu0 %v2109, 96
    %v2191 = vpop.permute.xlu0 %2190
    %v2192 = vsel %vm270, %v2109, 0
    %v2194 = vsel %vm270, %v2191, 0
    %2196 = vmatprep.subr.mxu0 0.0
    %2197 = vmatpush1.xpose.msra.mxu0 %v2194
    %2198 = vmatprep.subr.mxu0 0.0
    %2199 = vmatpush1.xpose.msra.mxu0 0.0
    %2200 = vmatprep.subr.mxu0 0.0
    %2201 = vmatpush1.xpose.msra.mxu0 0.0
    %2202 = vmatprep.subr.mxu0 0.0
    %2203 = vmatpush1.xpose.msra.mxu0 0.0
    %2204 = vmatprep.subr.mxu0 0.0
    %2205 = vmatpush1.xpose.msra.mxu0 0.0
    %2206 = vmatprep.subr.mxu0 0.0
    %2207 = vmatpush1.xpose.msra.mxu0 0.0
    %2208 = vmatprep.subr.mxu0 0.0
    %2209 = vmatpush1.xpose.msra.mxu0 0.0
    %2210 = vmatprep.subr.mxu0 0.0
    %2211 = vmatpush1.xpose.msra.mxu0 0.0
    %2212 = vmatprep.subr.mxu0 0.0
    %2213 = vmatpush1.xpose.msra.mxu0 0.0
    %2214 = vmatprep.subr.mxu0 0.0
    %2215 = vmatpush1.xpose.msra.mxu0 0.0
    %2216 = vmatprep.subr.mxu0 0.0
    %2217 = vmatpush1.xpose.msra.mxu0 0.0
    %2218 = vmatprep.subr.mxu0 0.0
    %2219 = vmatpush1.xpose.msra.mxu0 0.0
    %2220 = vmatprep.subr.mxu0 0.0
    %2221 = vmatpush1.xpose.msra.mxu0 0.0
    %2222 = vmatprep.subr.mxu0 0.0
    %2223 = vmatpush1.xpose.msra.mxu0 0.0
    %2224 = vmatprep.subr.mxu0 0.0
    %2225 = vmatpush1.xpose.msra.mxu0 0.0
    %2226 = vmatprep.subr.mxu0 0.0
    %2227 = vmatpush1.xpose.msra.mxu0 0.0
    %2228 = vmatprep.subr.mxu0 0.0
    %2229 = vmatpush1.xpose.msra.mxu0 0.0
    %2230 = vmatprep.subr.mxu0 0.0
    %2231 = vmatpush1.xpose.msra.mxu0 0.0
    %2232 = vmatprep.subr.mxu0 0.0
    %2233 = vmatpush1.xpose.msra.mxu0 0.0
    %2234 = vmatprep.subr.mxu0 0.0
    %2235 = vmatpush1.xpose.msra.mxu0 0.0
    %2236 = vmatprep.subr.mxu0 0.0
    %2237 = vmatpush1.xpose.msra.mxu0 0.0
    %2238 = vmatprep.subr.mxu0 0.0
    %2239 = vmatpush1.xpose.msra.mxu0 0.0
    %2240 = vmatprep.subr.mxu0 0.0
    %2241 = vmatpush1.xpose.msra.mxu0 0.0
    %2242 = vmatprep.subr.mxu0 0.0
    %2243 = vmatpush1.xpose.msra.mxu0 0.0
    %2244 = vmatprep.subr.mxu0 0.0
    %2245 = vmatpush1.xpose.msra.mxu0 0.0
    %2246 = vmatprep.subr.mxu0 0.0
    %2247 = vmatpush1.xpose.msra.mxu0 0.0
    %2248 = vmatprep.subr.mxu0 0.0
    %2249 = vmatpush1.xpose.msra.mxu0 0.0
    %2250 = vmatprep.subr.mxu0 0.0
    %2251 = vmatpush1.xpose.msra.mxu0 0.0
    %2252 = vmatprep.subr.mxu0 0.0
    %2253 = vmatpush1.xpose.msra.mxu0 0.0
    %2254 = vmatprep.subr.mxu0 0.0
    %2255 = vmatpush1.xpose.msra.mxu0 0.0
    %2256 = vmatprep.subr.mxu0 0.0
    %2257 = vmatpush1.xpose.msra.mxu0 0.0
    %2258 = vmatprep.subr.mxu0 0.0
    %2259 = vmatpush1.xpose.msra.mxu0 0.0
    %2260 = vmatprep.mubr.f32.mxu0 0.0
    %2261 = vmatmul.mubr.f32.gmra.mrb[0].mxu0 %v2192
    %v2262 = vpop.f32.mrb[0].mxu0
    %v2263 = vadd.f32 %v178, %v2262
    %v2264 = vpop.f32.mrb[0].mxu0
    %2265 = vdwg.mxu0
    %v2266 = vsel %vm270, %v2186, -inf
    %2267 = vmax.xlane.f32.xlu0 %v2266
    %v2268 = vpop.xlane.xlu0 %2267
    %v2269 = vsel %vm270, %v2263, -inf
    %2270 = vmax.xlane.f32.xlu0 %v2269
    %v2271 = vpop.xlane.xlu0 %2270
    %v2272 = vsub.f32 %v2186, %v2268
    %v2273 = vsub.f32 %v2263, %v2271
    %v2274 = vmul.f32 %v2272, 1.442695
    %v2275 = vpow.pop %v2274
    %v2276 = vmul.f32 %v2273, 1.442695
    %v2277 = vpow.pop %v2276
    %v2278 = vsel %vm270, %v2275, 0.0
    %2279 = vadd.xlane.f32.xlu0 %v2278
    %v2280 = vpop.xlane.xlu0 %2279
    %v2281 = vsel %vm270, %v2277, 0.0
    %2282 = vadd.xlane.f32.xlu0 %v2281
    %v2283 = vpop.xlane.xlu0 %2282
    %v2284 = vrcp.pop %v2280
    %v2285 = vrcp.pop %v2283
    %v2286 = vmul.f32 %v2280, %v2284
    %v2287 = vmul.f32 %v2283, %v2285
    %v2288 = vsub.f32 2.0, %v2286
    %v2289 = vsub.f32 2.0, %v2287
    %v2290 = vmul.f32 %v2284, %v2288
    %v2291 = vmul.f32 %v2285, %v2289
    %2292 = vrot.lane.b32.xlu0 %v2104, 64
    %v2293 = vpop.permute.xlu0 %2292
    %v2296 = vsel %vm270, %v2275, 0
    %2298 = vmatprep.subr.mxu0 0.0
    %2299 = vmatpush1.msra.mxu0 %v2293
    %2300 = vmatprep.subr.mxu0 0.0
    %2301 = vmatpush1.msra.mxu0 0.0
    %2302 = vmatprep.subr.mxu0 0.0
    %2303 = vmatpush1.msra.mxu0 0.0
    %2304 = vmatprep.subr.mxu0 0.0
    %2305 = vmatpush1.msra.mxu0 0.0
    %2306 = vmatprep.subr.mxu0 0.0
    %2307 = vmatpush1.msra.mxu0 0.0
    %2308 = vmatprep.subr.mxu0 0.0
    %2309 = vmatpush1.msra.mxu0 0.0
    %2310 = vmatprep.subr.mxu0 0.0
    %2311 = vmatpush1.msra.mxu0 0.0
    %2312 = vmatprep.subr.mxu0 0.0
    %2313 = vmatpush1.msra.mxu0 0.0
    %2314 = vmatprep.subr.mxu0 0.0
    %2315 = vmatpush1.msra.mxu0 0.0
    %2316 = vmatprep.subr.mxu0 0.0
    %2317 = vmatpush1.msra.mxu0 0.0
    %2318 = vmatprep.subr.mxu0 0.0
    %2319 = vmatpush1.msra.mxu0 0.0
    %2320 = vmatprep.subr.mxu0 0.0
    %2321 = vmatpush1.msra.mxu0 0.0
    %2322 = vmatprep.subr.mxu0 0.0
    %2323 = vmatpush1.msra.mxu0 0.0
    %2324 = vmatprep.subr.mxu0 0.0
    %2325 = vmatpush1.msra.mxu0 0.0
    %2326 = vmatprep.subr.mxu0 0.0
    %2327 = vmatpush1.msra.mxu0 0.0
    %2328 = vmatprep.subr.mxu0 0.0
    %2329 = vmatpush1.msra.mxu0 0.0
    %2330 = vmatprep.subr.mxu0 0.0
    %2331 = vmatpush1.msra.mxu0 0.0
    %2332 = vmatprep.subr.mxu0 0.0
    %2333 = vmatpush1.msra.mxu0 0.0
    %2334 = vmatprep.subr.mxu0 0.0
    %2335 = vmatpush1.msra.mxu0 0.0
    %2336 = vmatprep.subr.mxu0 0.0
    %2337 = vmatpush1.msra.mxu0 0.0
    %2338 = vmatprep.subr.mxu0 0.0
    %2339 = vmatpush1.msra.mxu0 0.0
    %2340 = vmatprep.subr.mxu0 0.0
    %2341 = vmatpush1.msra.mxu0 0.0
    %2342 = vmatprep.subr.mxu0 0.0
    %2343 = vmatpush1.msra.mxu0 0.0
    %2344 = vmatprep.subr.mxu0 0.0
    %2345 = vmatpush1.msra.mxu0 0.0
    %2346 = vmatprep.subr.mxu0 0.0
    %2347 = vmatpush1.msra.mxu0 0.0
    %2348 = vmatprep.subr.mxu0 0.0
    %2349 = vmatpush1.msra.mxu0 0.0
    %2350 = vmatprep.subr.mxu0 0.0
    %2351 = vmatpush1.msra.mxu0 0.0
    %2352 = vmatprep.subr.mxu0 0.0
    %2353 = vmatpush1.msra.mxu0 0.0
    %2354 = vmatprep.subr.mxu0 0.0
    %2355 = vmatpush1.msra.mxu0 0.0
    %2356 = vmatprep.subr.mxu0 0.0
    %2357 = vmatpush1.msra.mxu0 0.0
    %2358 = vmatprep.subr.mxu0 0.0
    %2359 = vmatpush1.msra.mxu0 0.0
    %2360 = vmatprep.subr.mxu0 0.0
    %2361 = vmatpush1.msra.mxu0 0.0
    %2362 = vmatprep.mubr.f32.mxu0 0.0
    %2363 = vmatmul.mubr.f32.gmra.mrb[0].mxu0 %v2296
    %v2364 = vpop.f32.mrb[0].mxu0
    %v2365 = vadd.f32 0.0, %v2364
    %v2366 = vpop.f32.mrb[0].mxu0
    %2367 = vdwg.mxu0
    %2368 = vrot.lane.b32.xlu0 %v2109, 64
    %v2369 = vpop.permute.xlu0 %2368
    %v2372 = vsel %vm270, %v2277, 0
    %2374 = vmatprep.subr.mxu0 0.0
    %2375 = vmatpush1.msra.mxu0 %v2369
    %2376 = vmatprep.subr.mxu0 0.0
    %2377 = vmatpush1.msra.mxu0 0.0
    %2378 = vmatprep.subr.mxu0 0.0
    %2379 = vmatpush1.msra.mxu0 0.0
    %2380 = vmatprep.subr.mxu0 0.0
    %2381 = vmatpush1.msra.mxu0 0.0
    %2382 = vmatprep.subr.mxu0 0.0
    %2383 = vmatpush1.msra.mxu0 0.0
    %2384 = vmatprep.subr.mxu0 0.0
    %2385 = vmatpush1.msra.mxu0 0.0
    %2386 = vmatprep.subr.mxu0 0.0
    %2387 = vmatpush1.msra.mxu0 0.0
    %2388 = vmatprep.subr.mxu0 0.0
    %2389 = vmatpush1.msra.mxu0 0.0
    %2390 = vmatprep.subr.mxu0 0.0
    %2391 = vmatpush1.msra.mxu0 0.0
    %2392 = vmatprep.subr.mxu0 0.0
    %2393 = vmatpush1.msra.mxu0 0.0
    %2394 = vmatprep.subr.mxu0 0.0
    %2395 = vmatpush1.msra.mxu0 0.0
    %2396 = vmatprep.subr.mxu0 0.0
    %2397 = vmatpush1.msra.mxu0 0.0
    %2398 = vmatprep.subr.mxu0 0.0
    %2399 = vmatpush1.msra.mxu0 0.0
    %2400 = vmatprep.subr.mxu0 0.0
    %2401 = vmatpush1.msra.mxu0 0.0
    %2402 = vmatprep.subr.mxu0 0.0
    %2403 = vmatpush1.msra.mxu0 0.0
    %2404 = vmatprep.subr.mxu0 0.0
    %2405 = vmatpush1.msra.mxu0 0.0
    %2406 = vmatprep.subr.mxu0 0.0
    %2407 = vmatpush1.msra.mxu0 0.0
    %2408 = vmatprep.subr.mxu0 0.0
    %2409 = vmatpush1.msra.mxu0 0.0
    %2410 = vmatprep.subr.mxu0 0.0
    %2411 = vmatpush1.msra.mxu0 0.0
    %2412 = vmatprep.subr.mxu0 0.0
    %2413 = vmatpush1.msra.mxu0 0.0
    %2414 = vmatprep.subr.mxu0 0.0
    %2415 = vmatpush1.msra.mxu0 0.0
    %2416 = vmatprep.subr.mxu0 0.0
    %2417 = vmatpush1.msra.mxu0 0.0
    %2418 = vmatprep.subr.mxu0 0.0
    %2419 = vmatpush1.msra.mxu0 0.0
    %2420 = vmatprep.subr.mxu0 0.0
    %2421 = vmatpush1.msra.mxu0 0.0
    %2422 = vmatprep.subr.mxu0 0.0
    %2423 = vmatpush1.msra.mxu0 0.0
    %2424 = vmatprep.subr.mxu0 0.0
    %2425 = vmatpush1.msra.mxu0 0.0
    %2426 = vmatprep.subr.mxu0 0.0
    %2427 = vmatpush1.msra.mxu0 0.0
    %2428 = vmatprep.subr.mxu0 0.0
    %2429 = vmatpush1.msra.mxu0 0.0
    %2430 = vmatprep.subr.mxu0 0.0
    %2431 = vmatpush1.msra.mxu0 0.0
    %2432 = vmatprep.subr.mxu0 0.0
    %2433 = vmatpush1.msra.mxu0 0.0
    %2434 = vmatprep.subr.mxu0 0.0
    %2435 = vmatpush1.msra.mxu0 0.0
    %2436 = vmatprep.subr.mxu0 0.0
    %2437 = vmatpush1.msra.mxu0 0.0
    %2438 = vmatprep.mubr.f32.mxu0 0.0
    %2439 = vmatmul.mubr.f32.gmra.mrb[0].mxu0 %v2372
    %v2440 = vpop.f32.mrb[0].mxu0
    %v2441 = vadd.f32 0.0, %v2440
    %v2442 = vpop.f32.mrb[0].mxu0
    %2443 = vdwg.mxu0
    %v2444 = vmul.f32 %v2365, %v2290
    %v2445 = vmul.f32 %v2441, %v2291
    %2446 = vrot.lane.b32.xlu0 %v2104, 120
    %v2447 = vpop.permute.xlu0 %2446
    %2448 = vrot.lane.b32.xlu0 %v2104, 88
    %v2449 = vpop.permute.xlu0 %2448
    %v2450 = vsel %vm270, %v2447, 0
    %v2452 = vsel %vm270, %v2449, 0
    %2454 = vmatprep.subr.mxu0 0.0
    %2455 = vmatpush1.xpose.msra.mxu0 %v2452
    %2456 = vmatprep.subr.mxu0 0.0
    %2457 = vmatpush1.xpose.msra.mxu0 0.0
    %2458 = vmatprep.subr.mxu0 0.0
    %2459 = vmatpush1.xpose.msra.mxu0 0.0
    %2460 = vmatprep.subr.mxu0 0.0
    %2461 = vmatpush1.xpose.msra.mxu0 0.0
    %2462 = vmatprep.subr.mxu0 0.0
    %2463 = vmatpush1.xpose.msra.mxu0 0.0
    %2464 = vmatprep.subr.mxu0 0.0
    %2465 = vmatpush1.xpose.msra.mxu0 0.0
    %2466 = vmatprep.subr.mxu0 0.0
    %2467 = vmatpush1.xpose.msra.mxu0 0.0
    %2468 = vmatprep.subr.mxu0 0.0
    %2469 = vmatpush1.xpose.msra.mxu0 0.0
    %2470 = vmatprep.subr.mxu0 0.0
    %2471 = vmatpush1.xpose.msra.mxu0 0.0
    %2472 = vmatprep.subr.mxu0 0.0
    %2473 = vmatpush1.xpose.msra.mxu0 0.0
    %2474 = vmatprep.subr.mxu0 0.0
    %2475 = vmatpush1.xpose.msra.mxu0 0.0
    %2476 = vmatprep.subr.mxu0 0.0
    %2477 = vmatpush1.xpose.msra.mxu0 0.0
    %2478 = vmatprep.subr.mxu0 0.0
    %2479 = vmatpush1.xpose.msra.mxu0 0.0
    %2480 = vmatprep.subr.mxu0 0.0
    %2481 = vmatpush1.xpose.msra.mxu0 0.0
    %2482 = vmatprep.subr.mxu0 0.0
    %2483 = vmatpush1.xpose.msra.mxu0 0.0
    %2484 = vmatprep.subr.mxu0 0.0
    %2485 = vmatpush1.xpose.msra.mxu0 0.0
    %2486 = vmatprep.subr.mxu0 0.0
    %2487 = vmatpush1.xpose.msra.mxu0 0.0
    %2488 = vmatprep.subr.mxu0 0.0
    %2489 = vmatpush1.xpose.msra.mxu0 0.0
    %2490 = vmatprep.subr.mxu0 0.0
    %2491 = vmatpush1.xpose.msra.mxu0 0.0
    %2492 = vmatprep.subr.mxu0 0.0
    %2493 = vmatpush1.xpose.msra.mxu0 0.0
    %2494 = vmatprep.subr.mxu0 0.0
    %2495 = vmatpush1.xpose.msra.mxu0 0.0
    %2496 = vmatprep.subr.mxu0 0.0
    %2497 = vmatpush1.xpose.msra.mxu0 0.0
    %2498 = vmatprep.subr.mxu0 0.0
    %2499 = vmatpush1.xpose.msra.mxu0 0.0
    %2500 = vmatprep.subr.mxu0 0.0
    %2501 = vmatpush1.xpose.msra.mxu0 0.0
    %2502 = vmatprep.subr.mxu0 0.0
    %2503 = vmatpush1.xpose.msra.mxu0 0.0
    %2504 = vmatprep.subr.mxu0 0.0
    %2505 = vmatpush1.xpose.msra.mxu0 0.0
    %2506 = vmatprep.subr.mxu0 0.0
    %2507 = vmatpush1.xpose.msra.mxu0 0.0
    %2508 = vmatprep.subr.mxu0 0.0
    %2509 = vmatpush1.xpose.msra.mxu0 0.0
    %2510 = vmatprep.subr.mxu0 0.0
    %2511 = vmatpush1.xpose.msra.mxu0 0.0
    %2512 = vmatprep.subr.mxu0 0.0
    %2513 = vmatpush1.xpose.msra.mxu0 0.0
    %2514 = vmatprep.subr.mxu0 0.0
    %2515 = vmatpush1.xpose.msra.mxu0 0.0
    %2516 = vmatprep.subr.mxu0 0.0
    %2517 = vmatpush1.xpose.msra.mxu0 0.0
    %2518 = vmatprep.mubr.f32.mxu0 0.0
    %2519 = vmatmul.mubr.f32.gmra.mrb[0].mxu0 %v2450
    %v2520 = vpop.f32.mrb[0].mxu0
    %v2521 = vadd.f32 %v174, %v2520
    %v2522 = vpop.f32.mrb[0].mxu0
    %2523 = vdwg.mxu0
    %2524 = vrot.lane.b32.xlu0 %v2109, 120
    %v2525 = vpop.permute.xlu0 %2524
    %2526 = vrot.lane.b32.xlu0 %v2109, 88
    %v2527 = vpop.permute.xlu0 %2526
    %v2528 = vsel %vm270, %v2525, 0
    %v2530 = vsel %vm270, %v2527, 0
    %2532 = vmatprep.subr.mxu0 0.0
    %2533 = vmatpush1.xpose.msra.mxu0 %v2530
    %2534 = vmatprep.subr.mxu0 0.0
    %2535 = vmatpush1.xpose.msra.mxu0 0.0
    %2536 = vmatprep.subr.mxu0 0.0
    %2537 = vmatpush1.xpose.msra.mxu0 0.0
    %2538 = vmatprep.subr.mxu0 0.0
    %2539 = vmatpush1.xpose.msra.mxu0 0.0
    %2540 = vmatprep.subr.mxu0 0.0
    %2541 = vmatpush1.xpose.msra.mxu0 0.0
    %2542 = vmatprep.subr.mxu0 0.0
    %2543 = vmatpush1.xpose.msra.mxu0 0.0
    %2544 = vmatprep.subr.mxu0 0.0
    %2545 = vmatpush1.xpose.msra.mxu0 0.0
    %2546 = vmatprep.subr.mxu0 0.0
    %2547 = vmatpush1.xpose.msra.mxu0 0.0
    %2548 = vmatprep.subr.mxu0 0.0
    %2549 = vmatpush1.xpose.msra.mxu0 0.0
    %2550 = vmatprep.subr.mxu0 0.0
    %2551 = vmatpush1.xpose.msra.mxu0 0.0
    %2552 = vmatprep.subr.mxu0 0.0
    %2553 = vmatpush1.xpose.msra.mxu0 0.0
    %2554 = vmatprep.subr.mxu0 0.0
    %2555 = vmatpush1.xpose.msra.mxu0 0.0
    %2556 = vmatprep.subr.mxu0 0.0
    %2557 = vmatpush1.xpose.msra.mxu0 0.0
    %2558 = vmatprep.subr.mxu0 0.0
    %2559 = vmatpush1.xpose.msra.mxu0 0.0
    %2560 = vmatprep.subr.mxu0 0.0
    %2561 = vmatpush1.xpose.msra.mxu0 0.0
    %2562 = vmatprep.subr.mxu0 0.0
    %2563 = vmatpush1.xpose.msra.mxu0 0.0
    %2564 = vmatprep.subr.mxu0 0.0
    %2565 = vmatpush1.xpose.msra.mxu0 0.0
    %2566 = vmatprep.subr.mxu0 0.0
    %2567 = vmatpush1.xpose.msra.mxu0 0.0
    %2568 = vmatprep.subr.mxu0 0.0
    %2569 = vmatpush1.xpose.msra.mxu0 0.0
    %2570 = vmatprep.subr.mxu0 0.0
    %2571 = vmatpush1.xpose.msra.mxu0 0.0
    %2572 = vmatprep.subr.mxu0 0.0
    %2573 = vmatpush1.xpose.msra.mxu0 0.0
    %2574 = vmatprep.subr.mxu0 0.0
    %2575 = vmatpush1.xpose.msra.mxu0 0.0
    %2576 = vmatprep.subr.mxu0 0.0
    %2577 = vmatpush1.xpose.msra.mxu0 0.0
    %2578 = vmatprep.subr.mxu0 0.0
    %2579 = vmatpush1.xpose.msra.mxu0 0.0
    %2580 = vmatprep.subr.mxu0 0.0
    %2581 = vmatpush1.xpose.msra.mxu0 0.0
    %2582 = vmatprep.subr.mxu0 0.0
    %2583 = vmatpush1.xpose.msra.mxu0 0.0
    %2584 = vmatprep.subr.mxu0 0.0
    %2585 = vmatpush1.xpose.msra.mxu0 0.0
    %2586 = vmatprep.subr.mxu0 0.0
    %2587 = vmatpush1.xpose.msra.mxu0 0.0
    %2588 = vmatprep.subr.mxu0 0.0
    %2589 = vmatpush1.xpose.msra.mxu0 0.0
    %2590 = vmatprep.subr.mxu0 0.0
    %2591 = vmatpush1.xpose.msra.mxu0 0.0
    %2592 = vmatprep.subr.mxu0 0.0
    %2593 = vmatpush1.xpose.msra.mxu0 0.0
    %2594 = vmatprep.subr.mxu0 0.0
    %2595 = vmatpush1.xpose.msra.mxu0 0.0
    %2596 = vmatprep.mubr.f32.mxu0 0.0
    %2597 = vmatmul.mubr.f32.gmra.mrb[0].mxu0 %v2528
    %v2598 = vpop.f32.mrb[0].mxu0
    %v2599 = vadd.f32 %v178, %v2598
    %v2600 = vpop.f32.mrb[0].mxu0
    %2601 = vdwg.mxu0
    %v2602 = vsel %vm270, %v2521, -inf
    %2603 = vmax.xlane.f32.xlu0 %v2602
    %v2604 = vpop.xlane.xlu0 %2603
    %v2605 = vsel %vm270, %v2599, -inf
    %2606 = vmax.xlane.f32.xlu0 %v2605
    %v2607 = vpop.xlane.xlu0 %2606
    %v2608 = vsub.f32 %v2521, %v2604
    %v2609 = vsub.f32 %v2599, %v2607
    %v2610 = vmul.f32 %v2608, 1.442695
    %v2611 = vpow.pop %v2610
    %v2612 = vmul.f32 %v2609, 1.442695
    %v2613 = vpow.pop %v2612
    %v2614 = vsel %vm270, %v2611, 0.0
    %2615 = vadd.xlane.f32.xlu0 %v2614
    %v2616 = vpop.xlane.xlu0 %2615
    %v2617 = vsel %vm270, %v2613, 0.0
    %2618 = vadd.xlane.f32.xlu0 %v2617
    %v2619 = vpop.xlane.xlu0 %2618
    %v2620 = vrcp.pop %v2616
    %v2621 = vrcp.pop %v2619
    %v2622 = vmul.f32 %v2616, %v2620
    %v2623 = vmul.f32 %v2619, %v2621
    %v2624 = vsub.f32 2.0, %v2622
    %v2625 = vsub.f32 2.0, %v2623
    %v2626 = vmul.f32 %v2620, %v2624
    %v2627 = vmul.f32 %v2621, %v2625
    %2628 = vrot.lane.b32.xlu0 %v2104, 56
    %v2629 = vpop.permute.xlu0 %2628
    %v2632 = vsel %vm270, %v2611, 0
    %2634 = vmatprep.subr.mxu0 0.0
    %2635 = vmatpush1.msra.mxu0 %v2629
    %2636 = vmatprep.subr.mxu0 0.0
    %2637 = vmatpush1.msra.mxu0 0.0
    %2638 = vmatprep.subr.mxu0 0.0
    %2639 = vmatpush1.msra.mxu0 0.0
    %2640 = vmatprep.subr.mxu0 0.0
    %2641 = vmatpush1.msra.mxu0 0.0
    %2642 = vmatprep.subr.mxu0 0.0
    %2643 = vmatpush1.msra.mxu0 0.0
    %2644 = vmatprep.subr.mxu0 0.0
    %2645 = vmatpush1.msra.mxu0 0.0
    %2646 = vmatprep.subr.mxu0 0.0
    %2647 = vmatpush1.msra.mxu0 0.0
    %2648 = vmatprep.subr.mxu0 0.0
    %2649 = vmatpush1.msra.mxu0 0.0
    %2650 = vmatprep.subr.mxu0 0.0
    %2651 = vmatpush1.msra.mxu0 0.0
    %2652 = vmatprep.subr.mxu0 0.0
    %2653 = vmatpush1.msra.mxu0 0.0
    %2654 = vmatprep.subr.mxu0 0.0
    %2655 = vmatpush1.msra.mxu0 0.0
    %2656 = vmatprep.subr.mxu0 0.0
    %2657 = vmatpush1.msra.mxu0 0.0
    %2658 = vmatprep.subr.mxu0 0.0
    %2659 = vmatpush1.msra.mxu0 0.0
    %2660 = vmatprep.subr.mxu0 0.0
    %2661 = vmatpush1.msra.mxu0 0.0
    %2662 = vmatprep.subr.mxu0 0.0
    %2663 = vmatpush1.msra.mxu0 0.0
    %2664 = vmatprep.subr.mxu0 0.0
    %2665 = vmatpush1.msra.mxu0 0.0
    %2666 = vmatprep.subr.mxu0 0.0
    %2667 = vmatpush1.msra.mxu0 0.0
    %2668 = vmatprep.subr.mxu0 0.0
    %2669 = vmatpush1.msra.mxu0 0.0
    %2670 = vmatprep.subr.mxu0 0.0
    %2671 = vmatpush1.msra.mxu0 0.0
    %2672 = vmatprep.subr.mxu0 0.0
    %2673 = vmatpush1.msra.mxu0 0.0
    %2674 = vmatprep.subr.mxu0 0.0
    %2675 = vmatpush1.msra.mxu0 0.0
    %2676 = vmatprep.subr.mxu0 0.0
    %2677 = vmatpush1.msra.mxu0 0.0
    %2678 = vmatprep.subr.mxu0 0.0
    %2679 = vmatpush1.msra.mxu0 0.0
    %2680 = vmatprep.subr.mxu0 0.0
    %2681 = vmatpush1.msra.mxu0 0.0
    %2682 = vmatprep.subr.mxu0 0.0
    %2683 = vmatpush1.msra.mxu0 0.0
    %2684 = vmatprep.subr.mxu0 0.0
    %2685 = vmatpush1.msra.mxu0 0.0
    %2686 = vmatprep.subr.mxu0 0.0
    %2687 = vmatpush1.msra.mxu0 0.0
    %2688 = vmatprep.subr.mxu0 0.0
    %2689 = vmatpush1.msra.mxu0 0.0
    %2690 = vmatprep.subr.mxu0 0.0
    %2691 = vmatpush1.msra.mxu0 0.0
    %2692 = vmatprep.subr.mxu0 0.0
    %2693 = vmatpush1.msra.mxu0 0.0
    %2694 = vmatprep.subr.mxu0 0.0
    %2695 = vmatpush1.msra.mxu0 0.0
    %2696 = vmatprep.subr.mxu0 0.0
    %2697 = vmatpush1.msra.mxu0 0.0
    %2698 = vmatprep.mubr.f32.mxu0 0.0
    %2699 = vmatmul.mubr.f32.gmra.mrb[0].mxu0 %v2632
    %v2700 = vpop.f32.mrb[0].mxu0
    %v2701 = vadd.f32 0.0, %v2700
    %v2702 = vpop.f32.mrb[0].mxu0
    %2703 = vdwg.mxu0
    %2704 = vrot.lane.b32.xlu0 %v2109, 56
    %v2705 = vpop.permute.xlu0 %2704
    %v2708 = vsel %vm270, %v2613, 0
    %2710 = vmatprep.subr.mxu0 0.0
    %2711 = vmatpush1.msra.mxu0 %v2705
    %2712 = vmatprep.subr.mxu0 0.0
    %2713 = vmatpush1.msra.mxu0 0.0
    %2714 = vmatprep.subr.mxu0 0.0
    %2715 = vmatpush1.msra.mxu0 0.0
    %2716 = vmatprep.subr.mxu0 0.0
    %2717 = vmatpush1.msra.mxu0 0.0
    %2718 = vmatprep.subr.mxu0 0.0
    %2719 = vmatpush1.msra.mxu0 0.0
    %2720 = vmatprep.subr.mxu0 0.0
    %2721 = vmatpush1.msra.mxu0 0.0
    %2722 = vmatprep.subr.mxu0 0.0
    %2723 = vmatpush1.msra.mxu0 0.0
    %2724 = vmatprep.subr.mxu0 0.0
    %2725 = vmatpush1.msra.mxu0 0.0
    %2726 = vmatprep.subr.mxu0 0.0
    %2727 = vmatpush1.msra.mxu0 0.0
    %2728 = vmatprep.subr.mxu0 0.0
    %2729 = vmatpush1.msra.mxu0 0.0
    %2730 = vmatprep.subr.mxu0 0.0
    %2731 = vmatpush1.msra.mxu0 0.0
    %2732 = vmatprep.subr.mxu0 0.0
    %2733 = vmatpush1.msra.mxu0 0.0
    %2734 = vmatprep.subr.mxu0 0.0
    %2735 = vmatpush1.msra.mxu0 0.0
    %2736 = vmatprep.subr.mxu0 0.0
    %2737 = vmatpush1.msra.mxu0 0.0
    %2738 = vmatprep.subr.mxu0 0.0
    %2739 = vmatpush1.msra.mxu0 0.0
    %2740 = vmatprep.subr.mxu0 0.0
    %2741 = vmatpush1.msra.mxu0 0.0
    %2742 = vmatprep.subr.mxu0 0.0
    %2743 = vmatpush1.msra.mxu0 0.0
    %2744 = vmatprep.subr.mxu0 0.0
    %2745 = vmatpush1.msra.mxu0 0.0
    %2746 = vmatprep.subr.mxu0 0.0
    %2747 = vmatpush1.msra.mxu0 0.0
    %2748 = vmatprep.subr.mxu0 0.0
    %2749 = vmatpush1.msra.mxu0 0.0
    %2750 = vmatprep.subr.mxu0 0.0
    %2751 = vmatpush1.msra.mxu0 0.0
    %2752 = vmatprep.subr.mxu0 0.0
    %2753 = vmatpush1.msra.mxu0 0.0
    %2754 = vmatprep.subr.mxu0 0.0
    %2755 = vmatpush1.msra.mxu0 0.0
    %2756 = vmatprep.subr.mxu0 0.0
    %2757 = vmatpush1.msra.mxu0 0.0
    %2758 = vmatprep.subr.mxu0 0.0
    %2759 = vmatpush1.msra.mxu0 0.0
    %2760 = vmatprep.subr.mxu0 0.0
    %2761 = vmatpush1.msra.mxu0 0.0
    %2762 = vmatprep.subr.mxu0 0.0
    %2763 = vmatpush1.msra.mxu0 0.0
    %2764 = vmatprep.subr.mxu0 0.0
    %2765 = vmatpush1.msra.mxu0 0.0
    %2766 = vmatprep.subr.mxu0 0.0
    %2767 = vmatpush1.msra.mxu0 0.0
    %2768 = vmatprep.subr.mxu0 0.0
    %2769 = vmatpush1.msra.mxu0 0.0
    %2770 = vmatprep.subr.mxu0 0.0
    %2771 = vmatpush1.msra.mxu0 0.0
    %2772 = vmatprep.subr.mxu0 0.0
    %2773 = vmatpush1.msra.mxu0 0.0
    %2774 = vmatprep.mubr.f32.mxu0 0.0
    %2775 = vmatmul.mubr.f32.gmra.mrb[0].mxu0 %v2708
    %v2776 = vpop.f32.mrb[0].mxu0
    %v2777 = vadd.f32 0.0, %v2776
    %v2778 = vpop.f32.mrb[0].mxu0
    %2779 = vdwg.mxu0
    %v2780 = vmul.f32 %v2701, %v2626
    %v2781 = vmul.f32 %v2777, %v2627
    %2782 = vrot.lane.b32.xlu0 %v2104, 112
    %v2783 = vpop.permute.xlu0 %2782
    %2784 = vrot.lane.b32.xlu0 %v2104, 80
    %v2785 = vpop.permute.xlu0 %2784
    %v2786 = vsel %vm270, %v2783, 0
    %v2788 = vsel %vm270, %v2785, 0
    %2790 = vmatprep.subr.mxu0 0.0
    %2791 = vmatpush1.xpose.msra.mxu0 %v2788
    %2792 = vmatprep.subr.mxu0 0.0
    %2793 = vmatpush1.xpose.msra.mxu0 0.0
    %2794 = vmatprep.subr.mxu0 0.0
    %2795 = vmatpush1.xpose.msra.mxu0 0.0
    %2796 = vmatprep.subr.mxu0 0.0
    %2797 = vmatpush1.xpose.msra.mxu0 0.0
    %2798 = vmatprep.subr.mxu0 0.0
    %2799 = vmatpush1.xpose.msra.mxu0 0.0
    %2800 = vmatprep.subr.mxu0 0.0
    %2801 = vmatpush1.xpose.msra.mxu0 0.0
    %2802 = vmatprep.subr.mxu0 0.0
    %2803 = vmatpush1.xpose.msra.mxu0 0.0
    %2804 = vmatprep.subr.mxu0 0.0
    %2805 = vmatpush1.xpose.msra.mxu0 0.0
    %2806 = vmatprep.subr.mxu0 0.0
    %2807 = vmatpush1.xpose.msra.mxu0 0.0
    %2808 = vmatprep.subr.mxu0 0.0
    %2809 = vmatpush1.xpose.msra.mxu0 0.0
    %2810 = vmatprep.subr.mxu0 0.0
    %2811 = vmatpush1.xpose.msra.mxu0 0.0
    %2812 = vmatprep.subr.mxu0 0.0
    %2813 = vmatpush1.xpose.msra.mxu0 0.0
    %2814 = vmatprep.subr.mxu0 0.0
    %2815 = vmatpush1.xpose.msra.mxu0 0.0
    %2816 = vmatprep.subr.mxu0 0.0
    %2817 = vmatpush1.xpose.msra.mxu0 0.0
    %2818 = vmatprep.subr.mxu0 0.0
    %2819 = vmatpush1.xpose.msra.mxu0 0.0
    %2820 = vmatprep.subr.mxu0 0.0
    %2821 = vmatpush1.xpose.msra.mxu0 0.0
    %2822 = vmatprep.subr.mxu0 0.0
    %2823 = vmatpush1.xpose.msra.mxu0 0.0
    %2824 = vmatprep.subr.mxu0 0.0
    %2825 = vmatpush1.xpose.msra.mxu0 0.0
    %2826 = vmatprep.subr.mxu0 0.0
    %2827 = vmatpush1.xpose.msra.mxu0 0.0
    %2828 = vmatprep.subr.mxu0 0.0
    %2829 = vmatpush1.xpose.msra.mxu0 0.0
    %2830 = vmatprep.subr.mxu0 0.0
    %2831 = vmatpush1.xpose.msra.mxu0 0.0
    %2832 = vmatprep.subr.mxu0 0.0
    %2833 = vmatpush1.xpose.msra.mxu0 0.0
    %2834 = vmatprep.subr.mxu0 0.0
    %2835 = vmatpush1.xpose.msra.mxu0 0.0
    %2836 = vmatprep.subr.mxu0 0.0
    %2837 = vmatpush1.xpose.msra.mxu0 0.0
    %2838 = vmatprep.subr.mxu0 0.0
    %2839 = vmatpush1.xpose.msra.mxu0 0.0
    %2840 = vmatprep.subr.mxu0 0.0
    %2841 = vmatpush1.xpose.msra.mxu0 0.0
    %2842 = vmatprep.subr.mxu0 0.0
    %2843 = vmatpush1.xpose.msra.mxu0 0.0
    %2844 = vmatprep.subr.mxu0 0.0
    %2845 = vmatpush1.xpose.msra.mxu0 0.0
    %2846 = vmatprep.subr.mxu0 0.0
    %2847 = vmatpush1.xpose.msra.mxu0 0.0
    %2848 = vmatprep.subr.mxu0 0.0
    %2849 = vmatpush1.xpose.msra.mxu0 0.0
    %2850 = vmatprep.subr.mxu0 0.0
    %2851 = vmatpush1.xpose.msra.mxu0 0.0
    %2852 = vmatprep.subr.mxu0 0.0
    %2853 = vmatpush1.xpose.msra.mxu0 0.0
    %2854 = vmatprep.mubr.f32.mxu0 0.0
    %2855 = vmatmul.mubr.f32.gmra.mrb[0].mxu0 %v2786
    %v2856 = vpop.f32.mrb[0].mxu0
    %v2857 = vadd.f32 %v174, %v2856
    %v2858 = vpop.f32.mrb[0].mxu0
    %2859 = vdwg.mxu0
    %2860 = vrot.lane.b32.xlu0 %v2109, 112
    %v2861 = vpop.permute.xlu0 %2860
    %2862 = vrot.lane.b32.xlu0 %v2109, 80
    %v2863 = vpop.permute.xlu0 %2862
    %v2864 = vsel %vm270, %v2861, 0
    %v2866 = vsel %vm270, %v2863, 0
    %2868 = vmatprep.subr.mxu0 0.0
    %2869 = vmatpush1.xpose.msra.mxu0 %v2866
    %2870 = vmatprep.subr.mxu0 0.0
    %2871 = vmatpush1.xpose.msra.mxu0 0.0
    %2872 = vmatprep.subr.mxu0 0.0
    %2873 = vmatpush1.xpose.msra.mxu0 0.0
    %2874 = vmatprep.subr.mxu0 0.0
    %2875 = vmatpush1.xpose.msra.mxu0 0.0
    %2876 = vmatprep.subr.mxu0 0.0
    %2877 = vmatpush1.xpose.msra.mxu0 0.0
    %2878 = vmatprep.subr.mxu0 0.0
    %2879 = vmatpush1.xpose.msra.mxu0 0.0
    %2880 = vmatprep.subr.mxu0 0.0
    %2881 = vmatpush1.xpose.msra.mxu0 0.0
    %2882 = vmatprep.subr.mxu0 0.0
    %2883 = vmatpush1.xpose.msra.mxu0 0.0
    %2884 = vmatprep.subr.mxu0 0.0
    %2885 = vmatpush1.xpose.msra.mxu0 0.0
    %2886 = vmatprep.subr.mxu0 0.0
    %2887 = vmatpush1.xpose.msra.mxu0 0.0
    %2888 = vmatprep.subr.mxu0 0.0
    %2889 = vmatpush1.xpose.msra.mxu0 0.0
    %2890 = vmatprep.subr.mxu0 0.0
    %2891 = vmatpush1.xpose.msra.mxu0 0.0
    %2892 = vmatprep.subr.mxu0 0.0
    %2893 = vmatpush1.xpose.msra.mxu0 0.0
    %2894 = vmatprep.subr.mxu0 0.0
    %2895 = vmatpush1.xpose.msra.mxu0 0.0
    %2896 = vmatprep.subr.mxu0 0.0
    %2897 = vmatpush1.xpose.msra.mxu0 0.0
    %2898 = vmatprep.subr.mxu0 0.0
    %2899 = vmatpush1.xpose.msra.mxu0 0.0
    %2900 = vmatprep.subr.mxu0 0.0
    %2901 = vmatpush1.xpose.msra.mxu0 0.0
    %2902 = vmatprep.subr.mxu0 0.0
    %2903 = vmatpush1.xpose.msra.mxu0 0.0
    %2904 = vmatprep.subr.mxu0 0.0
    %2905 = vmatpush1.xpose.msra.mxu0 0.0
    %2906 = vmatprep.subr.mxu0 0.0
    %2907 = vmatpush1.xpose.msra.mxu0 0.0
    %2908 = vmatprep.subr.mxu0 0.0
    %2909 = vmatpush1.xpose.msra.mxu0 0.0
    %2910 = vmatprep.subr.mxu0 0.0
    %2911 = vmatpush1.xpose.msra.mxu0 0.0
    %2912 = vmatprep.subr.mxu0 0.0
    %2913 = vmatpush1.xpose.msra.mxu0 0.0
    %2914 = vmatprep.subr.mxu0 0.0
    %2915 = vmatpush1.xpose.msra.mxu0 0.0
    %2916 = vmatprep.subr.mxu0 0.0
    %2917 = vmatpush1.xpose.msra.mxu0 0.0
    %2918 = vmatprep.subr.mxu0 0.0
    %2919 = vmatpush1.xpose.msra.mxu0 0.0
    %2920 = vmatprep.subr.mxu0 0.0
    %2921 = vmatpush1.xpose.msra.mxu0 0.0
    %2922 = vmatprep.subr.mxu0 0.0
    %2923 = vmatpush1.xpose.msra.mxu0 0.0
    %2924 = vmatprep.subr.mxu0 0.0
    %2925 = vmatpush1.xpose.msra.mxu0 0.0
    %2926 = vmatprep.subr.mxu0 0.0
    %2927 = vmatpush1.xpose.msra.mxu0 0.0
    %2928 = vmatprep.subr.mxu0 0.0
    %2929 = vmatpush1.xpose.msra.mxu0 0.0
    %2930 = vmatprep.subr.mxu0 0.0
    %2931 = vmatpush1.xpose.msra.mxu0 0.0
    %2932 = vmatprep.mubr.f32.mxu0 0.0
    %2933 = vmatmul.mubr.f32.gmra.mrb[0].mxu0 %v2864
    %v2934 = vpop.f32.mrb[0].mxu0
    %v2935 = vadd.f32 %v178, %v2934
    %v2936 = vpop.f32.mrb[0].mxu0
    %2937 = vdwg.mxu0
    %v2938 = vsel %vm270, %v2857, -inf
    %2939 = vmax.xlane.f32.xlu0 %v2938
    %v2940 = vpop.xlane.xlu0 %2939
    %v2941 = vsel %vm270, %v2935, -inf
    %2942 = vmax.xlane.f32.xlu0 %v2941
    %v2943 = vpop.xlane.xlu0 %2942
    %v2944 = vsub.f32 %v2857, %v2940
    %v2945 = vsub.f32 %v2935, %v2943
    %v2946 = vmul.f32 %v2944, 1.442695
    %v2947 = vpow.pop %v2946
    %v2948 = vmul.f32 %v2945, 1.442695
    %v2949 = vpow.pop %v2948
    %v2950 = vsel %vm270, %v2947, 0.0
    %2951 = vadd.xlane.f32.xlu0 %v2950
    %v2952 = vpop.xlane.xlu0 %2951
    %v2953 = vsel %vm270, %v2949, 0.0
    %2954 = vadd.xlane.f32.xlu0 %v2953
    %v2955 = vpop.xlane.xlu0 %2954
    %v2956 = vrcp.pop %v2952
    %v2957 = vrcp.pop %v2955
    %v2958 = vmul.f32 %v2952, %v2956
    %v2959 = vmul.f32 %v2955, %v2957
    %v2960 = vsub.f32 2.0, %v2958
    %v2961 = vsub.f32 2.0, %v2959
    %v2962 = vmul.f32 %v2956, %v2960
    %v2963 = vmul.f32 %v2957, %v2961
    %2964 = vrot.lane.b32.xlu0 %v2104, 48
    %v2965 = vpop.permute.xlu0 %2964
    %v2968 = vsel %vm270, %v2947, 0
    %2970 = vmatprep.subr.mxu0 0.0
    %2971 = vmatpush1.msra.mxu0 %v2965
    %2972 = vmatprep.subr.mxu0 0.0
    %2973 = vmatpush1.msra.mxu0 0.0
    %2974 = vmatprep.subr.mxu0 0.0
    %2975 = vmatpush1.msra.mxu0 0.0
    %2976 = vmatprep.subr.mxu0 0.0
    %2977 = vmatpush1.msra.mxu0 0.0
    %2978 = vmatprep.subr.mxu0 0.0
    %2979 = vmatpush1.msra.mxu0 0.0
    %2980 = vmatprep.subr.mxu0 0.0
    %2981 = vmatpush1.msra.mxu0 0.0
    %2982 = vmatprep.subr.mxu0 0.0
    %2983 = vmatpush1.msra.mxu0 0.0
    %2984 = vmatprep.subr.mxu0 0.0
    %2985 = vmatpush1.msra.mxu0 0.0
    %2986 = vmatprep.subr.mxu0 0.0
    %2987 = vmatpush1.msra.mxu0 0.0
    %2988 = vmatprep.subr.mxu0 0.0
    %2989 = vmatpush1.msra.mxu0 0.0
    %2990 = vmatprep.subr.mxu0 0.0
    %2991 = vmatpush1.msra.mxu0 0.0
    %2992 = vmatprep.subr.mxu0 0.0
    %2993 = vmatpush1.msra.mxu0 0.0
    %2994 = vmatprep.subr.mxu0 0.0
    %2995 = vmatpush1.msra.mxu0 0.0
    %2996 = vmatprep.subr.mxu0 0.0
    %2997 = vmatpush1.msra.mxu0 0.0
    %2998 = vmatprep.subr.mxu0 0.0
    %2999 = vmatpush1.msra.mxu0 0.0
    %3000 = vmatprep.subr.mxu0 0.0
    %3001 = vmatpush1.msra.mxu0 0.0
    %3002 = vmatprep.subr.mxu0 0.0
    %3003 = vmatpush1.msra.mxu0 0.0
    %3004 = vmatprep.subr.mxu0 0.0
    %3005 = vmatpush1.msra.mxu0 0.0
    %3006 = vmatprep.subr.mxu0 0.0
    %3007 = vmatpush1.msra.mxu0 0.0
    %3008 = vmatprep.subr.mxu0 0.0
    %3009 = vmatpush1.msra.mxu0 0.0
    %3010 = vmatprep.subr.mxu0 0.0
    %3011 = vmatpush1.msra.mxu0 0.0
    %3012 = vmatprep.subr.mxu0 0.0
    %3013 = vmatpush1.msra.mxu0 0.0
    %3014 = vmatprep.subr.mxu0 0.0
    %3015 = vmatpush1.msra.mxu0 0.0
    %3016 = vmatprep.subr.mxu0 0.0
    %3017 = vmatpush1.msra.mxu0 0.0
    %3018 = vmatprep.subr.mxu0 0.0
    %3019 = vmatpush1.msra.mxu0 0.0
    %3020 = vmatprep.subr.mxu0 0.0
    %3021 = vmatpush1.msra.mxu0 0.0
    %3022 = vmatprep.subr.mxu0 0.0
    %3023 = vmatpush1.msra.mxu0 0.0
    %3024 = vmatprep.subr.mxu0 0.0
    %3025 = vmatpush1.msra.mxu0 0.0
    %3026 = vmatprep.subr.mxu0 0.0
    %3027 = vmatpush1.msra.mxu0 0.0
    %3028 = vmatprep.subr.mxu0 0.0
    %3029 = vmatpush1.msra.mxu0 0.0
    %3030 = vmatprep.subr.mxu0 0.0
    %3031 = vmatpush1.msra.mxu0 0.0
    %3032 = vmatprep.subr.mxu0 0.0
    %3033 = vmatpush1.msra.mxu0 0.0
    %3034 = vmatprep.mubr.f32.mxu0 0.0
    %3035 = vmatmul.mubr.f32.gmra.mrb[0].mxu0 %v2968
    %v3036 = vpop.f32.mrb[0].mxu0
    %v3037 = vadd.f32 0.0, %v3036
    %v3038 = vpop.f32.mrb[0].mxu0
    %3039 = vdwg.mxu0
    %3040 = vrot.lane.b32.xlu0 %v2109, 48
    %v3041 = vpop.permute.xlu0 %3040
    %v3044 = vsel %vm270, %v2949, 0
    %3046 = vmatprep.subr.mxu0 0.0
    %3047 = vmatpush1.msra.mxu0 %v3041
    %3048 = vmatprep.subr.mxu0 0.0
    %3049 = vmatpush1.msra.mxu0 0.0
    %3050 = vmatprep.subr.mxu0 0.0
    %3051 = vmatpush1.msra.mxu0 0.0
    %3052 = vmatprep.subr.mxu0 0.0
    %3053 = vmatpush1.msra.mxu0 0.0
    %3054 = vmatprep.subr.mxu0 0.0
    %3055 = vmatpush1.msra.mxu0 0.0
    %3056 = vmatprep.subr.mxu0 0.0
    %3057 = vmatpush1.msra.mxu0 0.0
    %3058 = vmatprep.subr.mxu0 0.0
    %3059 = vmatpush1.msra.mxu0 0.0
    %3060 = vmatprep.subr.mxu0 0.0
    %3061 = vmatpush1.msra.mxu0 0.0
    %3062 = vmatprep.subr.mxu0 0.0
    %3063 = vmatpush1.msra.mxu0 0.0
    %3064 = vmatprep.subr.mxu0 0.0
    %3065 = vmatpush1.msra.mxu0 0.0
    %3066 = vmatprep.subr.mxu0 0.0
    %3067 = vmatpush1.msra.mxu0 0.0
    %3068 = vmatprep.subr.mxu0 0.0
    %3069 = vmatpush1.msra.mxu0 0.0
    %3070 = vmatprep.subr.mxu0 0.0
    %3071 = vmatpush1.msra.mxu0 0.0
    %3072 = vmatprep.subr.mxu0 0.0
    %3073 = vmatpush1.msra.mxu0 0.0
    %3074 = vmatprep.subr.mxu0 0.0
    %3075 = vmatpush1.msra.mxu0 0.0
    %3076 = vmatprep.subr.mxu0 0.0
    %3077 = vmatpush1.msra.mxu0 0.0
    %3078 = vmatprep.subr.mxu0 0.0
    %3079 = vmatpush1.msra.mxu0 0.0
    %3080 = vmatprep.subr.mxu0 0.0
    %3081 = vmatpush1.msra.mxu0 0.0
    %3082 = vmatprep.subr.mxu0 0.0
    %3083 = vmatpush1.msra.mxu0 0.0
    %3084 = vmatprep.subr.mxu0 0.0
    %3085 = vmatpush1.msra.mxu0 0.0
    %3086 = vmatprep.subr.mxu0 0.0
    %3087 = vmatpush1.msra.mxu0 0.0
    %3088 = vmatprep.subr.mxu0 0.0
    %3089 = vmatpush1.msra.mxu0 0.0
    %3090 = vmatprep.subr.mxu0 0.0
    %3091 = vmatpush1.msra.mxu0 0.0
    %3092 = vmatprep.subr.mxu0 0.0
    %3093 = vmatpush1.msra.mxu0 0.0
    %3094 = vmatprep.subr.mxu0 0.0
    %3095 = vmatpush1.msra.mxu0 0.0
    %3096 = vmatprep.subr.mxu0 0.0
    %3097 = vmatpush1.msra.mxu0 0.0
    %3098 = vmatprep.subr.mxu0 0.0
    %3099 = vmatpush1.msra.mxu0 0.0
    %3100 = vmatprep.subr.mxu0 0.0
    %3101 = vmatpush1.msra.mxu0 0.0
    %3102 = vmatprep.subr.mxu0 0.0
    %3103 = vmatpush1.msra.mxu0 0.0
    %3104 = vmatprep.subr.mxu0 0.0
    %3105 = vmatpush1.msra.mxu0 0.0
    %3106 = vmatprep.subr.mxu0 0.0
    %3107 = vmatpush1.msra.mxu0 0.0
    %3108 = vmatprep.subr.mxu0 0.0
    %3109 = vmatpush1.msra.mxu0 0.0
    %3110 = vmatprep.mubr.f32.mxu0 0.0
    %3111 = vmatmul.mubr.f32.gmra.mrb[0].mxu0 %v3044
    %v3112 = vpop.f32.mrb[0].mxu0
    %v3113 = vadd.f32 0.0, %v3112
    %v3114 = vpop.f32.mrb[0].mxu0
    %3115 = vdwg.mxu0
    %v3116 = vmul.f32 %v3037, %v2962
    %v3117 = vmul.f32 %v3113, %v2963
    %3118 = vrot.lane.b32.xlu0 %v2104, 104
    %v3119 = vpop.permute.xlu0 %3118
    %3120 = vrot.lane.b32.xlu0 %v2104, 72
    %v3121 = vpop.permute.xlu0 %3120
    %v3122 = vsel %vm270, %v3119, 0
    %v3124 = vsel %vm270, %v3121, 0
    %3126 = vmatprep.subr.mxu0 0.0
    %3127 = vmatpush1.xpose.msra.mxu0 %v3124
    %3128 = vmatprep.subr.mxu0 0.0
    %3129 = vmatpush1.xpose.msra.mxu0 0.0
    %3130 = vmatprep.subr.mxu0 0.0
    %3131 = vmatpush1.xpose.msra.mxu0 0.0
    %3132 = vmatprep.subr.mxu0 0.0
    %3133 = vmatpush1.xpose.msra.mxu0 0.0
    %3134 = vmatprep.subr.mxu0 0.0
    %3135 = vmatpush1.xpose.msra.mxu0 0.0
    %3136 = vmatprep.subr.mxu0 0.0
    %3137 = vmatpush1.xpose.msra.mxu0 0.0
    %3138 = vmatprep.subr.mxu0 0.0
    %3139 = vmatpush1.xpose.msra.mxu0 0.0
    %3140 = vmatprep.subr.mxu0 0.0
    %3141 = vmatpush1.xpose.msra.mxu0 0.0
    %3142 = vmatprep.subr.mxu0 0.0
    %3143 = vmatpush1.xpose.msra.mxu0 0.0
    %3144 = vmatprep.subr.mxu0 0.0
    %3145 = vmatpush1.xpose.msra.mxu0 0.0
    %3146 = vmatprep.subr.mxu0 0.0
    %3147 = vmatpush1.xpose.msra.mxu0 0.0
    %3148 = vmatprep.subr.mxu0 0.0
    %3149 = vmatpush1.xpose.msra.mxu0 0.0
    %3150 = vmatprep.subr.mxu0 0.0
    %3151 = vmatpush1.xpose.msra.mxu0 0.0
    %3152 = vmatprep.subr.mxu0 0.0
    %3153 = vmatpush1.xpose.msra.mxu0 0.0
    %3154 = vmatprep.subr.mxu0 0.0
    %3155 = vmatpush1.xpose.msra.mxu0 0.0
    %3156 = vmatprep.subr.mxu0 0.0
    %3157 = vmatpush1.xpose.msra.mxu0 0.0
    %3158 = vmatprep.subr.mxu0 0.0
    %3159 = vmatpush1.xpose.msra.mxu0 0.0
    %3160 = vmatprep.subr.mxu0 0.0
    %3161 = vmatpush1.xpose.msra.mxu0 0.0
    %3162 = vmatprep.subr.mxu0 0.0
    %3163 = vmatpush1.xpose.msra.mxu0 0.0
    %3164 = vmatprep.subr.mxu0 0.0
    %3165 = vmatpush1.xpose.msra.mxu0 0.0
    %3166 = vmatprep.subr.mxu0 0.0
    %3167 = vmatpush1.xpose.msra.mxu0 0.0
    %3168 = vmatprep.subr.mxu0 0.0
    %3169 = vmatpush1.xpose.msra.mxu0 0.0
    %3170 = vmatprep.subr.mxu0 0.0
    %3171 = vmatpush1.xpose.msra.mxu0 0.0
    %3172 = vmatprep.subr.mxu0 0.0
    %3173 = vmatpush1.xpose.msra.mxu0 0.0
    %3174 = vmatprep.subr.mxu0 0.0
    %3175 = vmatpush1.xpose.msra.mxu0 0.0
    %3176 = vmatprep.subr.mxu0 0.0
    %3177 = vmatpush1.xpose.msra.mxu0 0.0
    %3178 = vmatprep.subr.mxu0 0.0
    %3179 = vmatpush1.xpose.msra.mxu0 0.0
    %3180 = vmatprep.subr.mxu0 0.0
    %3181 = vmatpush1.xpose.msra.mxu0 0.0
    %3182 = vmatprep.subr.mxu0 0.0
    %3183 = vmatpush1.xpose.msra.mxu0 0.0
    %3184 = vmatprep.subr.mxu0 0.0
    %3185 = vmatpush1.xpose.msra.mxu0 0.0
    %3186 = vmatprep.subr.mxu0 0.0
    %3187 = vmatpush1.xpose.msra.mxu0 0.0
    %3188 = vmatprep.subr.mxu0 0.0
    %3189 = vmatpush1.xpose.msra.mxu0 0.0
    %3190 = vmatprep.mubr.f32.mxu0 0.0
    %3191 = vmatmul.mubr.f32.gmra.mrb[0].mxu0 %v3122
    %v3192 = vpop.f32.mrb[0].mxu0
    %v3193 = vadd.f32 %v174, %v3192
    %v3194 = vpop.f32.mrb[0].mxu0
    %3195 = vdwg.mxu0
    %3196 = vrot.lane.b32.xlu0 %v2109, 104
    %v3197 = vpop.permute.xlu0 %3196
    %3198 = vrot.lane.b32.xlu0 %v2109, 72
    %v3199 = vpop.permute.xlu0 %3198
    %v3200 = vsel %vm270, %v3197, 0
    %v3202 = vsel %vm270, %v3199, 0
    %3204 = vmatprep.subr.mxu0 0.0
    %3205 = vmatpush1.xpose.msra.mxu0 %v3202
    %3206 = vmatprep.subr.mxu0 0.0
    %3207 = vmatpush1.xpose.msra.mxu0 0.0
    %3208 = vmatprep.subr.mxu0 0.0
    %3209 = vmatpush1.xpose.msra.mxu0 0.0
    %3210 = vmatprep.subr.mxu0 0.0
    %3211 = vmatpush1.xpose.msra.mxu0 0.0
    %3212 = vmatprep.subr.mxu0 0.0
    %3213 = vmatpush1.xpose.msra.mxu0 0.0
    %3214 = vmatprep.subr.mxu0 0.0
    %3215 = vmatpush1.xpose.msra.mxu0 0.0
    %3216 = vmatprep.subr.mxu0 0.0
    %3217 = vmatpush1.xpose.msra.mxu0 0.0
    %3218 = vmatprep.subr.mxu0 0.0
    %3219 = vmatpush1.xpose.msra.mxu0 0.0
    %3220 = vmatprep.subr.mxu0 0.0
    %3221 = vmatpush1.xpose.msra.mxu0 0.0
    %3222 = vmatprep.subr.mxu0 0.0
    %3223 = vmatpush1.xpose.msra.mxu0 0.0
    %3224 = vmatprep.subr.mxu0 0.0
    %3225 = vmatpush1.xpose.msra.mxu0 0.0
    %3226 = vmatprep.subr.mxu0 0.0
    %3227 = vmatpush1.xpose.msra.mxu0 0.0
    %3228 = vmatprep.subr.mxu0 0.0
    %3229 = vmatpush1.xpose.msra.mxu0 0.0
    %3230 = vmatprep.subr.mxu0 0.0
    %3231 = vmatpush1.xpose.msra.mxu0 0.0
    %3232 = vmatprep.subr.mxu0 0.0
    %3233 = vmatpush1.xpose.msra.mxu0 0.0
    %3234 = vmatprep.subr.mxu0 0.0
    %3235 = vmatpush1.xpose.msra.mxu0 0.0
    %3236 = vmatprep.subr.mxu0 0.0
    %3237 = vmatpush1.xpose.msra.mxu0 0.0
    %3238 = vmatprep.subr.mxu0 0.0
    %3239 = vmatpush1.xpose.msra.mxu0 0.0
    %3240 = vmatprep.subr.mxu0 0.0
    %3241 = vmatpush1.xpose.msra.mxu0 0.0
    %3242 = vmatprep.subr.mxu0 0.0
    %3243 = vmatpush1.xpose.msra.mxu0 0.0
    %3244 = vmatprep.subr.mxu0 0.0
    %3245 = vmatpush1.xpose.msra.mxu0 0.0
    %3246 = vmatprep.subr.mxu0 0.0
    %3247 = vmatpush1.xpose.msra.mxu0 0.0
    %3248 = vmatprep.subr.mxu0 0.0
    %3249 = vmatpush1.xpose.msra.mxu0 0.0
    %3250 = vmatprep.subr.mxu0 0.0
    %3251 = vmatpush1.xpose.msra.mxu0 0.0
    %3252 = vmatprep.subr.mxu0 0.0
    %3253 = vmatpush1.xpose.msra.mxu0 0.0
    %3254 = vmatprep.subr.mxu0 0.0
    %3255 = vmatpush1.xpose.msra.mxu0 0.0
    %3256 = vmatprep.subr.mxu0 0.0
    %3257 = vmatpush1.xpose.msra.mxu0 0.0
    %3258 = vmatprep.subr.mxu0 0.0
    %3259 = vmatpush1.xpose.msra.mxu0 0.0
    %3260 = vmatprep.subr.mxu0 0.0
    %3261 = vmatpush1.xpose.msra.mxu0 0.0
    %3262 = vmatprep.subr.mxu0 0.0
    %3263 = vmatpush1.xpose.msra.mxu0 0.0
    %3264 = vmatprep.subr.mxu0 0.0
    %3265 = vmatpush1.xpose.msra.mxu0 0.0
    %3266 = vmatprep.subr.mxu0 0.0
    %3267 = vmatpush1.xpose.msra.mxu0 0.0
    %3268 = vmatprep.mubr.f32.mxu0 0.0
    %3269 = vmatmul.mubr.f32.gmra.mrb[0].mxu0 %v3200
    %v3270 = vpop.f32.mrb[0].mxu0
    %v3271 = vadd.f32 %v178, %v3270
    %v3272 = vpop.f32.mrb[0].mxu0
    %3273 = vdwg.mxu0
    %v3274 = vsel %vm270, %v3193, -inf
    %3275 = vmax.xlane.f32.xlu0 %v3274
    %v3276 = vpop.xlane.xlu0 %3275
    %v3277 = vsel %vm270, %v3271, -inf
    %3278 = vmax.xlane.f32.xlu0 %v3277
    %v3279 = vpop.xlane.xlu0 %3278
    %v3280 = vsub.f32 %v3193, %v3276
    %v3281 = vsub.f32 %v3271, %v3279
    %v3282 = vmul.f32 %v3280, 1.442695
    %v3283 = vpow.pop %v3282
    %v3284 = vmul.f32 %v3281, 1.442695
    %v3285 = vpow.pop %v3284
    %v3286 = vsel %vm270, %v3283, 0.0
    %3287 = vadd.xlane.f32.xlu0 %v3286
    %v3288 = vpop.xlane.xlu0 %3287
    %v3289 = vsel %vm270, %v3285, 0.0
    %3290 = vadd.xlane.f32.xlu0 %v3289
    %v3291 = vpop.xlane.xlu0 %3290
    %v3292 = vrcp.pop %v3288
    %v3293 = vrcp.pop %v3291
    %v3294 = vmul.f32 %v3288, %v3292
    %v3295 = vmul.f32 %v3291, %v3293
    %v3296 = vsub.f32 2.0, %v3294
    %v3297 = vsub.f32 2.0, %v3295
    %v3298 = vmul.f32 %v3292, %v3296
    %v3299 = vmul.f32 %v3293, %v3297
    %3300 = vrot.lane.b32.xlu0 %v2104, 40
    %v3301 = vpop.permute.xlu0 %3300
    %v3304 = vsel %vm270, %v3283, 0
    %3306 = vmatprep.subr.mxu0 0.0
    %3307 = vmatpush1.msra.mxu0 %v3301
    %3308 = vmatprep.subr.mxu0 0.0
    %3309 = vmatpush1.msra.mxu0 0.0
    %3310 = vmatprep.subr.mxu0 0.0
    %3311 = vmatpush1.msra.mxu0 0.0
    %3312 = vmatprep.subr.mxu0 0.0
    %3313 = vmatpush1.msra.mxu0 0.0
    %3314 = vmatprep.subr.mxu0 0.0
    %3315 = vmatpush1.msra.mxu0 0.0
    %3316 = vmatprep.subr.mxu0 0.0
    %3317 = vmatpush1.msra.mxu0 0.0
    %3318 = vmatprep.subr.mxu0 0.0
    %3319 = vmatpush1.msra.mxu0 0.0
    %3320 = vmatprep.subr.mxu0 0.0
    %3321 = vmatpush1.msra.mxu0 0.0
    %3322 = vmatprep.subr.mxu0 0.0
    %3323 = vmatpush1.msra.mxu0 0.0
    %3324 = vmatprep.subr.mxu0 0.0
    %3325 = vmatpush1.msra.mxu0 0.0
    %3326 = vmatprep.subr.mxu0 0.0
    %3327 = vmatpush1.msra.mxu0 0.0
    %3328 = vmatprep.subr.mxu0 0.0
    %3329 = vmatpush1.msra.mxu0 0.0
    %3330 = vmatprep.subr.mxu0 0.0
    %3331 = vmatpush1.msra.mxu0 0.0
    %3332 = vmatprep.subr.mxu0 0.0
    %3333 = vmatpush1.msra.mxu0 0.0
    %3334 = vmatprep.subr.mxu0 0.0
    %3335 = vmatpush1.msra.mxu0 0.0
    %3336 = vmatprep.subr.mxu0 0.0
    %3337 = vmatpush1.msra.mxu0 0.0
    %3338 = vmatprep.subr.mxu0 0.0
    %3339 = vmatpush1.msra.mxu0 0.0
    %3340 = vmatprep.subr.mxu0 0.0
    %3341 = vmatpush1.msra.mxu0 0.0
    %3342 = vmatprep.subr.mxu0 0.0
    %3343 = vmatpush1.msra.mxu0 0.0
    %3344 = vmatprep.subr.mxu0 0.0
    %3345 = vmatpush1.msra.mxu0 0.0
    %3346 = vmatprep.subr.mxu0 0.0
    %3347 = vmatpush1.msra.mxu0 0.0
    %3348 = vmatprep.subr.mxu0 0.0
    %3349 = vmatpush1.msra.mxu0 0.0
    %3350 = vmatprep.subr.mxu0 0.0
    %3351 = vmatpush1.msra.mxu0 0.0
    %3352 = vmatprep.subr.mxu0 0.0
    %3353 = vmatpush1.msra.mxu0 0.0
    %3354 = vmatprep.subr.mxu0 0.0
    %3355 = vmatpush1.msra.mxu0 0.0
    %3356 = vmatprep.subr.mxu0 0.0
    %3357 = vmatpush1.msra.mxu0 0.0
    %3358 = vmatprep.subr.mxu0 0.0
    %3359 = vmatpush1.msra.mxu0 0.0
    %3360 = vmatprep.subr.mxu0 0.0
    %3361 = vmatpush1.msra.mxu0 0.0
    %3362 = vmatprep.subr.mxu0 0.0
    %3363 = vmatpush1.msra.mxu0 0.0
    %3364 = vmatprep.subr.mxu0 0.0
    %3365 = vmatpush1.msra.mxu0 0.0
    %3366 = vmatprep.subr.mxu0 0.0
    %3367 = vmatpush1.msra.mxu0 0.0
    %3368 = vmatprep.subr.mxu0 0.0
    %3369 = vmatpush1.msra.mxu0 0.0
    %3370 = vmatprep.mubr.f32.mxu0 0.0
    %3371 = vmatmul.mubr.f32.gmra.mrb[0].mxu0 %v3304
    %v3372 = vpop.f32.mrb[0].mxu0
    %v3373 = vadd.f32 0.0, %v3372
    %v3374 = vpop.f32.mrb[0].mxu0
    %3375 = vdwg.mxu0
    %3376 = vrot.lane.b32.xlu0 %v2109, 40
    %v3377 = vpop.permute.xlu0 %3376
    %v3380 = vsel %vm270, %v3285, 0
    %3382 = vmatprep.subr.mxu0 0.0
    %3383 = vmatpush1.msra.mxu0 %v3377
    %3384 = vmatprep.subr.mxu0 0.0
    %3385 = vmatpush1.msra.mxu0 0.0
    %3386 = vmatprep.subr.mxu0 0.0
    %3387 = vmatpush1.msra.mxu0 0.0
    %3388 = vmatprep.subr.mxu0 0.0
    %3389 = vmatpush1.msra.mxu0 0.0
    %3390 = vmatprep.subr.mxu0 0.0
    %3391 = vmatpush1.msra.mxu0 0.0
    %3392 = vmatprep.subr.mxu0 0.0
    %3393 = vmatpush1.msra.mxu0 0.0
    %3394 = vmatprep.subr.mxu0 0.0
    %3395 = vmatpush1.msra.mxu0 0.0
    %3396 = vmatprep.subr.mxu0 0.0
    %3397 = vmatpush1.msra.mxu0 0.0
    %3398 = vmatprep.subr.mxu0 0.0
    %3399 = vmatpush1.msra.mxu0 0.0
    %3400 = vmatprep.subr.mxu0 0.0
    %3401 = vmatpush1.msra.mxu0 0.0
    %3402 = vmatprep.subr.mxu0 0.0
    %3403 = vmatpush1.msra.mxu0 0.0
    %3404 = vmatprep.subr.mxu0 0.0
    %3405 = vmatpush1.msra.mxu0 0.0
    %3406 = vmatprep.subr.mxu0 0.0
    %3407 = vmatpush1.msra.mxu0 0.0
    %3408 = vmatprep.subr.mxu0 0.0
    %3409 = vmatpush1.msra.mxu0 0.0
    %3410 = vmatprep.subr.mxu0 0.0
    %3411 = vmatpush1.msra.mxu0 0.0
    %3412 = vmatprep.subr.mxu0 0.0
    %3413 = vmatpush1.msra.mxu0 0.0
    %3414 = vmatprep.subr.mxu0 0.0
    %3415 = vmatpush1.msra.mxu0 0.0
    %3416 = vmatprep.subr.mxu0 0.0
    %3417 = vmatpush1.msra.mxu0 0.0
    %3418 = vmatprep.subr.mxu0 0.0
    %3419 = vmatpush1.msra.mxu0 0.0
    %3420 = vmatprep.subr.mxu0 0.0
    %3421 = vmatpush1.msra.mxu0 0.0
    %3422 = vmatprep.subr.mxu0 0.0
    %3423 = vmatpush1.msra.mxu0 0.0
    %3424 = vmatprep.subr.mxu0 0.0
    %3425 = vmatpush1.msra.mxu0 0.0
    %3426 = vmatprep.subr.mxu0 0.0
    %3427 = vmatpush1.msra.mxu0 0.0
    %3428 = vmatprep.subr.mxu0 0.0
    %3429 = vmatpush1.msra.mxu0 0.0
    %3430 = vmatprep.subr.mxu0 0.0
    %3431 = vmatpush1.msra.mxu0 0.0
    %3432 = vmatprep.subr.mxu0 0.0
    %3433 = vmatpush1.msra.mxu0 0.0
    %3434 = vmatprep.subr.mxu0 0.0
    %3435 = vmatpush1.msra.mxu0 0.0
    %3436 = vmatprep.subr.mxu0 0.0
    %3437 = vmatpush1.msra.mxu0 0.0
    %3438 = vmatprep.subr.mxu0 0.0
    %3439 = vmatpush1.msra.mxu0 0.0
    %3440 = vmatprep.subr.mxu0 0.0
    %3441 = vmatpush1.msra.mxu0 0.0
    %3442 = vmatprep.subr.mxu0 0.0
    %3443 = vmatpush1.msra.mxu0 0.0
    %3444 = vmatprep.subr.mxu0 0.0
    %3445 = vmatpush1.msra.mxu0 0.0
    %3446 = vmatprep.mubr.f32.mxu0 0.0
    %3447 = vmatmul.mubr.f32.gmra.mrb[0].mxu0 %v3380
    %v3448 = vpop.f32.mrb[0].mxu0
    %v3449 = vadd.f32 0.0, %v3448
    %v3450 = vpop.f32.mrb[0].mxu0
    %3451 = vdwg.mxu0
    %v3452 = vmul.f32 %v3373, %v3298
    %v3453 = vmul.f32 %v3449, %v3299
    %3456 = vrot.lane.b32.xlu0 %v2780, 8
    %v3457 = vpop.permute.xlu0 %3456
    %3458 = vrot.lane.b32.xlu0 %v2781, 8
    %v3459 = vpop.permute.xlu0 %3458
    %3464 = vrot.lane.b32.xlu0 %v3116, 16
    %v3465 = vpop.permute.xlu0 %3464
    %3466 = vrot.lane.b32.xlu0 %v3117, 16
    %v3467 = vpop.permute.xlu0 %3466
    %3472 = vrot.lane.b32.xlu0 %v3452, 24
    %v3473 = vpop.permute.xlu0 %3472
    %3474 = vrot.lane.b32.xlu0 %v3453, 24
    %v3475 = vpop.permute.xlu0 %3474
    %v3478 = vsel %vm270, %v2444, %v3457
    %v3479 = vsel %vm270, %v2445, %v3459
    %v3480 = vsel %vm1636, %v3478, %v3465
    %v3481 = vsel %vm1636, %v3479, %v3467
    %v3482 = vsel %vm1639, %v3480, %v3473
    %v3483 = vsel %vm1639, %v3481, %v3475
    %s3484 = scalar_lea.vmem %s5, 32
    %v3485 = vld [vmem:[%s3484] sm:$0xff]
    %v3486 = vld [vmem:[%s3484 + $0x8] sm:$0xff]
    %v3487 = vld [vmem:[%s3484 + $0x10] sm:$0xff]
    %v3488 = vld [vmem:[%s3484 + $0x18] sm:$0xff]
    %s3489 = scalar_lea.vmem %s6, 1
    %v3490 = vld [vmem:[%s3489] sm:$0x1]
    %v3492 = vlaneseq
    %v3493 = vshrl.u32 %v3492, 7
    %v3494 = vsub.s32 0, %v3493
    %v3495 = vrot.slane %v3490, %v3494
    %v3498 = vsel %vm185, %v3482, 0
    %v3501 = vsel %vm185, %v3483, 0
    %3503 = vmatprep.subr.mxu0 0.0
    %3504 = vmatpush1.msra.mxu0 %v3485
    %3505 = vmatprep.subr.mxu0 0.0
    %3506 = vmatpush1.msra.mxu0 %v3486
    %3507 = vmatprep.subr.mxu0 0.0
    %3508 = vmatpush1.msra.mxu0 %v3487
    %3509 = vmatprep.subr.mxu0 0.0
    %3510 = vmatpush1.msra.mxu0 %v3488
    %3511 = vmatprep.subr.mxu0 0.0
    %3512 = vmatpush1.msra.mxu0 0.0
    %3513 = vmatprep.subr.mxu0 0.0
    %3514 = vmatpush1.msra.mxu0 0.0
    %3515 = vmatprep.subr.mxu0 0.0
    %3516 = vmatpush1.msra.mxu0 0.0
    %3517 = vmatprep.subr.mxu0 0.0
    %3518 = vmatpush1.msra.mxu0 0.0
    %3519 = vmatprep.subr.mxu0 0.0
    %3520 = vmatpush1.msra.mxu0 0.0
    %3521 = vmatprep.subr.mxu0 0.0
    %3522 = vmatpush1.msra.mxu0 0.0
    %3523 = vmatprep.subr.mxu0 0.0
    %3524 = vmatpush1.msra.mxu0 0.0
    %3525 = vmatprep.subr.mxu0 0.0
    %3526 = vmatpush1.msra.mxu0 0.0
    %3527 = vmatprep.subr.mxu0 0.0
    %3528 = vmatpush1.msra.mxu0 0.0
    %3529 = vmatprep.subr.mxu0 0.0
    %3530 = vmatpush1.msra.mxu0 0.0
    %3531 = vmatprep.subr.mxu0 0.0
    %3532 = vmatpush1.msra.mxu0 0.0
    %3533 = vmatprep.subr.mxu0 0.0
    %3534 = vmatpush1.msra.mxu0 0.0
    %3535 = vmatprep.subr.mxu0 0.0
    %3536 = vmatpush1.msra.mxu0 0.0
    %3537 = vmatprep.subr.mxu0 0.0
    %3538 = vmatpush1.msra.mxu0 0.0
    %3539 = vmatprep.subr.mxu0 0.0
    %3540 = vmatpush1.msra.mxu0 0.0
    %3541 = vmatprep.subr.mxu0 0.0
    %3542 = vmatpush1.msra.mxu0 0.0
    %3543 = vmatprep.subr.mxu0 0.0
    %3544 = vmatpush1.msra.mxu0 0.0
    %3545 = vmatprep.subr.mxu0 0.0
    %3546 = vmatpush1.msra.mxu0 0.0
    %3547 = vmatprep.subr.mxu0 0.0
    %3548 = vmatpush1.msra.mxu0 0.0
    %3549 = vmatprep.subr.mxu0 0.0
    %3550 = vmatpush1.msra.mxu0 0.0
    %3551 = vmatprep.subr.mxu0 0.0
    %3552 = vmatpush1.msra.mxu0 0.0
    %3553 = vmatprep.subr.mxu0 0.0
    %3554 = vmatpush1.msra.mxu0 0.0
    %3555 = vmatprep.subr.mxu0 0.0
    %3556 = vmatpush1.msra.mxu0 0.0
    %3557 = vmatprep.subr.mxu0 0.0
    %3558 = vmatpush1.msra.mxu0 0.0
    %3559 = vmatprep.subr.mxu0 0.0
    %3560 = vmatpush1.msra.mxu0 0.0
    %3561 = vmatprep.subr.mxu0 0.0
    %3562 = vmatpush1.msra.mxu0 0.0
    %3563 = vmatprep.subr.mxu0 0.0
    %3564 = vmatpush1.msra.mxu0 0.0
    %3565 = vmatprep.subr.mxu0 0.0
    %3566 = vmatpush1.msra.mxu0 0.0
    %3567 = vmatprep.mubr.f32.mxu0 0.0
    %3568 = vmatmul.mubr.f32.gmra.mrb[0].mxu0 %v3498
    %v3569 = vpop.f32.mrb[0].mxu0
    %v3570 = vadd.f32 %v3495, %v3569
    %v3571 = vpop.f32.mrb[0].mxu0
    %3572 = vmatprep.mubr.f32.mxu0 0.0
    %3573 = vmatmul.mubr.f32.gmra.mrb[0].mxu0 %v3501
    %v3574 = vpop.f32.mrb[0].mxu0
    %v3575 = vadd.f32 %v3495, %v3574
    %v3576 = vpop.f32.mrb[0].mxu0
    %3577 = vdwg.mxu0
    %v3578 = vadd.f32 %v3570, %v2024
    %v3579 = vadd.f32 %v3575, %v2025
    %v3580 = vsel %vm185, %v3578, 0.0
    %3581 = vadd.xlane.f32.xlu0 %v3580
    %v3582 = vpop.xlane.xlu0 %3581
    %v3583 = vsel %vm185, %v3579, 0.0
    %3584 = vadd.xlane.f32.xlu0 %v3583
    %v3585 = vpop.xlane.xlu0 %3584
    %v3586 = vmul.f32 %v3578, %v3578
    %v3587 = vmul.f32 %v3579, %v3579
    %v3588 = vsel %vm185, %v3586, 0.0
    %3589 = vadd.xlane.f32.xlu0 %v3588
    %v3590 = vpop.xlane.xlu0 %3589
    %v3591 = vsel %vm185, %v3587, 0.0
    %3592 = vadd.xlane.f32.xlu0 %v3591
    %v3593 = vpop.xlane.xlu0 %3592
    %v3594 = vmul.f32 %v3582, 0.03125
    %v3595 = vmul.f32 %v3585, 0.03125
    %v3596 = vmul.f32 %v3590, 0.03125
    %v3597 = vmul.f32 %v3593, 0.03125
    %v3598 = vmul.f32 %v3594, %v3594
    %v3599 = vmul.f32 %v3595, %v3595
    %v3600 = vsub.f32 %v3596, %v3598
    %v3601 = vsub.f32 %v3597, %v3599
    %v3602 = vsub.f32 %v3578, %v3594
    %v3603 = vsub.f32 %v3579, %v3595
    %v3604 = vadd.f32 %v3600, 1e-05
    %v3605 = vadd.f32 %v3601, 1e-05
    %v3606 = vrsqrt.pop %v3604
    %v3607 = vrsqrt.pop %v3605
    %v3608 = vmul.f32 %v3602, %v3606
    %v3609 = vmul.f32 %v3603, %v3607
    %s3610 = scalar_lea.vmem %s7, 1
    %v3611 = vld [vmem:[%s3610] sm:$0x1]
    %v3613 = vlaneseq
    %v3614 = vshrl.u32 %v3613, 7
    %v3615 = vsub.s32 0, %v3614
    %v3616 = vrot.slane %v3611, %v3615
    %v3618 = vmul.f32 %v3608, %v3616
    %v3619 = vmul.f32 %v3609, %v3616
    %s3620 = scalar_lea.vmem %s8, 1
    %v3621 = vld [vmem:[%s3620] sm:$0x1]
    %v3623 = vlaneseq
    %v3624 = vshrl.u32 %v3623, 7
    %v3625 = vsub.s32 0, %v3624
    %v3626 = vrot.slane %v3621, %v3625
    %v3628 = vadd.f32 %v3618, %v3626
    %v3629 = vadd.f32 %v3619, %v3626
    %s3630 = scalar_lea.vmem %s9, 32
    %v3631 = vld [vmem:[%s3630] sm:$0xff]
    %v3632 = vld [vmem:[%s3630 + $0x8] sm:$0xff]
    %v3633 = vld [vmem:[%s3630 + $0x10] sm:$0xff]
    %v3634 = vld [vmem:[%s3630 + $0x18] sm:$0xff]
    %s3635 = scalar_lea.vmem %s10, 1
    %v3636 = vld [vmem:[%s3635] sm:$0x1]
    %v3638 = vlaneseq
    %v3639 = vshrl.u32 %v3638, 7
    %v3640 = vsub.s32 0, %v3639
    %v3641 = vrot.slane %v3636, %v3640
    %v3644 = vsel %vm185, %v3628, 0
    %v3647 = vsel %vm185, %v3629, 0
    %3649 = vmatprep.subr.mxu0 0.0
    %3650 = vmatpush1.msra.mxu0 %v3631
    %3651 = vmatprep.subr.mxu0 0.0
    %3652 = vmatpush1.msra.mxu0 %v3632
    %3653 = vmatprep.subr.mxu0 0.0
    %3654 = vmatpush1.msra.mxu0 %v3633
    %3655 = vmatprep.subr.mxu0 0.0
    %3656 = vmatpush1.msra.mxu0 %v3634
    %3657 = vmatprep.subr.mxu0 0.0
    %3658 = vmatpush1.msra.mxu0 0.0
    %3659 = vmatprep.subr.mxu0 0.0
    %3660 = vmatpush1.msra.mxu0 0.0
    %3661 = vmatprep.subr.mxu0 0.0
    %3662 = vmatpush1.msra.mxu0 0.0
    %3663 = vmatprep.subr.mxu0 0.0
    %3664 = vmatpush1.msra.mxu0 0.0
    %3665 = vmatprep.subr.mxu0 0.0
    %3666 = vmatpush1.msra.mxu0 0.0
    %3667 = vmatprep.subr.mxu0 0.0
    %3668 = vmatpush1.msra.mxu0 0.0
    %3669 = vmatprep.subr.mxu0 0.0
    %3670 = vmatpush1.msra.mxu0 0.0
    %3671 = vmatprep.subr.mxu0 0.0
    %3672 = vmatpush1.msra.mxu0 0.0
    %3673 = vmatprep.subr.mxu0 0.0
    %3674 = vmatpush1.msra.mxu0 0.0
    %3675 = vmatprep.subr.mxu0 0.0
    %3676 = vmatpush1.msra.mxu0 0.0
    %3677 = vmatprep.subr.mxu0 0.0
    %3678 = vmatpush1.msra.mxu0 0.0
    %3679 = vmatprep.subr.mxu0 0.0
    %3680 = vmatpush1.msra.mxu0 0.0
    %3681 = vmatprep.subr.mxu0 0.0
    %3682 = vmatpush1.msra.mxu0 0.0
    %3683 = vmatprep.subr.mxu0 0.0
    %3684 = vmatpush1.msra.mxu0 0.0
    %3685 = vmatprep.subr.mxu0 0.0
    %3686 = vmatpush1.msra.mxu0 0.0
    %3687 = vmatprep.subr.mxu0 0.0
    %3688 = vmatpush1.msra.mxu0 0.0
    %3689 = vmatprep.subr.mxu0 0.0
    %3690 = vmatpush1.msra.mxu0 0.0
    %3691 = vmatprep.subr.mxu0 0.0
    %3692 = vmatpush1.msra.mxu0 0.0
    %3693 = vmatprep.subr.mxu0 0.0
    %3694 = vmatpush1.msra.mxu0 0.0
    %3695 = vmatprep.subr.mxu0 0.0
    %3696 = vmatpush1.msra.mxu0 0.0
    %3697 = vmatprep.subr.mxu0 0.0
    %3698 = vmatpush1.msra.mxu0 0.0
    %3699 = vmatprep.subr.mxu0 0.0
    %3700 = vmatpush1.msra.mxu0 0.0
    %3701 = vmatprep.subr.mxu0 0.0
    %3702 = vmatpush1.msra.mxu0 0.0
    %3703 = vmatprep.subr.mxu0 0.0
    %3704 = vmatpush1.msra.mxu0 0.0
    %3705 = vmatprep.subr.mxu0 0.0
    %3706 = vmatpush1.msra.mxu0 0.0
    %3707 = vmatprep.subr.mxu0 0.0
    %3708 = vmatpush1.msra.mxu0 0.0
    %3709 = vmatprep.subr.mxu0 0.0
    %3710 = vmatpush1.msra.mxu0 0.0
    %3711 = vmatprep.subr.mxu0 0.0
    %3712 = vmatpush1.msra.mxu0 0.0
    %3713 = vmatprep.mubr.f32.mxu0 0.0
    %3714 = vmatmul.mubr.f32.gmra.mrb[0].mxu0 %v3644
    %v3715 = vpop.f32.mrb[0].mxu0
    %v3716 = vadd.f32 %v3641, %v3715
    %v3717 = vpop.f32.mrb[0].mxu0
    %3718 = vmatprep.mubr.f32.mxu0 0.0
    %3719 = vmatmul.mubr.f32.gmra.mrb[0].mxu0 %v3647
    %v3720 = vpop.f32.mrb[0].mxu0
    %v3721 = vadd.f32 %v3641, %v3720
    %v3722 = vpop.f32.mrb[0].mxu0
    %3723 = vdwg.mxu0
    %v3724 = vmax.f32 %v3716, 0.0
    %v3725 = vmax.f32 %v3721, 0.0
    %s3726 = scalar_lea.vmem %s11, 128
    %v3727 = vld [vmem:[%s3726] sm:$0xff]
    %v3728 = vld [vmem:[%s3726 + $0x8] sm:$0xff]
    %v3729 = vld [vmem:[%s3726 + $0x10] sm:$0xff]
    %v3730 = vld [vmem:[%s3726 + $0x18] sm:$0xff]
    %v3731 = vld [vmem:[%s3726 + $0x20] sm:$0xff]
    %v3732 = vld [vmem:[%s3726 + $0x28] sm:$0xff]
    %v3733 = vld [vmem:[%s3726 + $0x30] sm:$0xff]
    %v3734 = vld [vmem:[%s3726 + $0x38] sm:$0xff]
    %v3735 = vld [vmem:[%s3726 + $0x40] sm:$0xff]
    %v3736 = vld [vmem:[%s3726 + $0x48] sm:$0xff]
    %v3737 = vld [vmem:[%s3726 + $0x50] sm:$0xff]
    %v3738 = vld [vmem:[%s3726 + $0x58] sm:$0xff]
    %v3739 = vld [vmem:[%s3726 + $0x60] sm:$0xff]
    %v3740 = vld [vmem:[%s3726 + $0x68] sm:$0xff]
    %v3741 = vld [vmem:[%s3726 + $0x70] sm:$0xff]
    %v3742 = vld [vmem:[%s3726 + $0x78] sm:$0xff]
    %s3743 = scalar_lea.vmem %s12, 1
    %v3744 = vld [vmem:[%s3743] sm:$0x1]
    %v3746 = vlaneseq
    %v3747 = vshrl.u32 %v3746, 7
    %v3748 = vsub.s32 0, %v3747
    %v3749 = vrot.slane %v3744, %v3748
    %3751 = vmatprep.subr.mxu0 0.0
    %3752 = vmatpush1.msra.mxu0 %v3727
    %3753 = vmatprep.subr.mxu0 0.0
    %3754 = vmatpush1.msra.mxu0 %v3728
    %3755 = vmatprep.subr.mxu0 0.0
    %3756 = vmatpush1.msra.mxu0 %v3729
    %3757 = vmatprep.subr.mxu0 0.0
    %3758 = vmatpush1.msra.mxu0 %v3730
    %3759 = vmatprep.subr.mxu0 0.0
    %3760 = vmatpush1.msra.mxu0 %v3731
    %3761 = vmatprep.subr.mxu0 0.0
    %3762 = vmatpush1.msra.mxu0 %v3732
    %3763 = vmatprep.subr.mxu0 0.0
    %3764 = vmatpush1.msra.mxu0 %v3733
    %3765 = vmatprep.subr.mxu0 0.0
    %3766 = vmatpush1.msra.mxu0 %v3734
    %3767 = vmatprep.subr.mxu0 0.0
    %3768 = vmatpush1.msra.mxu0 %v3735
    %3769 = vmatprep.subr.mxu0 0.0
    %3770 = vmatpush1.msra.mxu0 %v3736
    %3771 = vmatprep.subr.mxu0 0.0
    %3772 = vmatpush1.msra.mxu0 %v3737
    %3773 = vmatprep.subr.mxu0 0.0
    %3774 = vmatpush1.msra.mxu0 %v3738
    %3775 = vmatprep.subr.mxu0 0.0
    %3776 = vmatpush1.msra.mxu0 %v3739
    %3777 = vmatprep.subr.mxu0 0.0
    %3778 = vmatpush1.msra.mxu0 %v3740
    %3779 = vmatprep.subr.mxu0 0.0
    %3780 = vmatpush1.msra.mxu0 %v3741
    %3781 = vmatprep.subr.mxu0 0.0
    %3782 = vmatpush1.msra.mxu0 %v3742
    %3783 = vmatprep.subr.mxu0 0.0
    %3784 = vmatpush1.msra.mxu0 0.0
    %3785 = vmatprep.subr.mxu0 0.0
    %3786 = vmatpush1.msra.mxu0 0.0
    %3787 = vmatprep.subr.mxu0 0.0
    %3788 = vmatpush1.msra.mxu0 0.0
    %3789 = vmatprep.subr.mxu0 0.0
    %3790 = vmatpush1.msra.mxu0 0.0
    %3791 = vmatprep.subr.mxu0 0.0
    %3792 = vmatpush1.msra.mxu0 0.0
    %3793 = vmatprep.subr.mxu0 0.0
    %3794 = vmatpush1.msra.mxu0 0.0
    %3795 = vmatprep.subr.mxu0 0.0
    %3796 = vmatpush1.msra.mxu0 0.0
    %3797 = vmatprep.subr.mxu0 0.0
    %3798 = vmatpush1.msra.mxu0 0.0
    %3799 = vmatprep.subr.mxu0 0.0
    %3800 = vmatpush1.msra.mxu0 0.0
    %3801 = vmatprep.subr.mxu0 0.0
    %3802 = vmatpush1.msra.mxu0 0.0
    %3803 = vmatprep.subr.mxu0 0.0
    %3804 = vmatpush1.msra.mxu0 0.0
    %3805 = vmatprep.subr.mxu0 0.0
    %3806 = vmatpush1.msra.mxu0 0.0
    %3807 = vmatprep.subr.mxu0 0.0
    %3808 = vmatpush1.msra.mxu0 0.0
    %3809 = vmatprep.subr.mxu0 0.0
    %3810 = vmatpush1.msra.mxu0 0.0
    %3811 = vmatprep.subr.mxu0 0.0
    %3812 = vmatpush1.msra.mxu0 0.0
    %3813 = vmatprep.subr.mxu0 0.0
    %3814 = vmatpush1.msra.mxu0 0.0
    %3815 = vmatprep.mubr.f32.mxu0 0.0
    %3816 = vmatmul.mubr.f32.gmra.mrb[0].mxu0 %v3724
    %v3817 = vpop.f32.mrb[0].mxu0
    %v3818 = vadd.f32 %v3749, %v3817
    %v3819 = vpop.f32.mrb[0].mxu0
    %3820 = vmatprep.mubr.f32.mxu0 0.0
    %3821 = vmatmul.mubr.f32.gmra.mrb[0].mxu0 %v3725
    %v3822 = vpop.f32.mrb[0].mxu0
    %v3823 = vadd.f32 %v3749, %v3822
    %v3824 = vpop.f32.mrb[0].mxu0
    %3825 = vdwg.mxu0
    %v3826 = vadd.f32 %v3818, %v3628
    %v3827 = vadd.f32 %v3823, %v3629
    %v3828 = vsel %vm185, %v3826, 0.0
    %3829 = vadd.xlane.f32.xlu0 %v3828
    %v3830 = vpop.xlane.xlu0 %3829
    %v3831 = vsel %vm185, %v3827, 0.0
    %3832 = vadd.xlane.f32.xlu0 %v3831
    %v3833 = vpop.xlane.xlu0 %3832
    %v3834 = vmul.f32 %v3826, %v3826
    %v3835 = vmul.f32 %v3827, %v3827
    %v3836 = vsel %vm185, %v3834, 0.0
    %3837 = vadd.xlane.f32.xlu0 %v3836
    %v3838 = vpop.xlane.xlu0 %3837
    %v3839 = vsel %vm185, %v3835, 0.0
    %3840 = vadd.xlane.f32.xlu0 %v3839
    %v3841 = vpop.xlane.xlu0 %3840
    %v3842 = vmul.f32 %v3830, 0.03125
    %v3843 = vmul.f32 %v3833, 0.03125
    %v3844 = vmul.f32 %v3838, 0.03125
    %v3845 = vmul.f32 %v3841, 0.03125
    %v3846 = vmul.f32 %v3842, %v3842
    %v3847 = vmul.f32 %v3843, %v3843
    %v3848 = vsub.f32 %v3844, %v3846
    %v3849 = vsub.f32 %v3845, %v3847
    %v3850 = vsub.f32 %v3826, %v3842
    %v3851 = vsub.f32 %v3827, %v3843
    %v3852 = vadd.f32 %v3848, 1e-05
    %v3853 = vadd.f32 %v3849, 1e-05
    %v3854 = vrsqrt.pop %v3852
    %v3855 = vrsqrt.pop %v3853
    %v3856 = vmul.f32 %v3850, %v3854
    %v3857 = vmul.f32 %v3851, %v3855
    %s3858 = scalar_lea.vmem %s13, 1
    %v3859 = vld [vmem:[%s3858] sm:$0x1]
    %v3861 = vlaneseq
    %v3862 = vshrl.u32 %v3861, 7
    %v3863 = vsub.s32 0, %v3862
    %v3864 = vrot.slane %v3859, %v3863
    %v3866 = vmul.f32 %v3856, %v3864
    %v3867 = vmul.f32 %v3857, %v3864
    %s3868 = scalar_lea.vmem %s14, 1
    %v3869 = vld [vmem:[%s3868] sm:$0x1]
    %v3871 = vlaneseq
    %v3872 = vshrl.u32 %v3871, 7
    %v3873 = vsub.s32 0, %v3872
    %v3874 = vrot.slane %v3869, %v3873
    %v3876 = vadd.f32 %v3866, %v3874
    %v3877 = vadd.f32 %v3867, %v3874
    %3878 = vst.msk [vmem:[#allocation2] sm:$0xff] %vm185, %v3876
    %3879 = vst.msk [vmem:[#allocation2 + $0x8] sm:$0xff] %vm185, %v3877
    // Predicated region
    $region62: #{encoder_forward.1} parent=1 // pred_check
      _
    $region63: #{encoder_forward.1} parent=1 // pred_check_branch
      %3881 = sbr.rel (0) target = $region65
    $region64: #{encoder_forward.1} parent=1 // pred_region
      %s3883 = ssub.s32 256, 256
      %3884 = vsyncadd [#allocation3], %s3883
      %s3885 = sshll.u32 [#allocation2], 4
      %s3886 = int_to_ptr.vmem [resolvable:$true] %s3885
      %3891 = dma.vmem_to_hbm [thread:$0]  %s3886, 256, %s15, [#allocation3], 128, 128, 8
    $region65: #{encoder_forward.1} parent=1 // pred_fallthru
      _
    // Predicated region
    $region66: #{encoder_forward.1} parent=1 // pred_check
      _
    $region67: #{encoder_forward.1} parent=1 // pred_check_branch
      %3893 = sbr.rel (0) target = $region69
    $region68: #{encoder_forward.1} parent=1 // pred_region
      %3894 = dma.done [#allocation3], 256
    $region69: #{encoder_forward.1} parent=1 // pred_fallthru
      _
    %3895 = vsyncpa [#allocation3], 1

</llo_original>
